<compile_context>
chip_gen: v7x
topology: tpu7x:2x2x1
jax: 0.10.0
libtpu: 0.0.40
codegen_flags: <defaults>
</compile_context>

<pallas_src>
import functools

import numpy as np

import jax
import jax.numpy as jnp
from jax.experimental import pallas as pl
from jax.experimental.pallas import tpu as pltpu


# ------------------------------ fused kernel -------------------------------

def _fused_cnn_kernel(x_ref, w1_ref, b1_ref, sel1_ref, w2_ref, b2_ref, sel2_ref,
                      fc1w_ref, fc1b_ref, fc2w_ref, fc2b_ref, out_ref,
                      b1s, p1s, b2s, p2s, flats, *, cfg):
    Cin, H, W, K, C1, C2 = cfg
    Ho1, Wo1 = H - K + 1, W - K + 1          # conv1 output spatial
    L1 = (Ho1 - 1) * W + Wo1                 # "wide" conv1 spatial extent
    Hp1, Wp1 = Ho1 // 2, Wo1 // 2            # after 2x2 max-pool
    H2, W2 = Hp1, Wp1                        # conv2 input spatial
    Ho2, Wo2 = H2 - K + 1, W2 - K + 1
    L2 = (Ho2 - 1) * W2 + Wo2
    Hp2, Wp2 = Ho2 // 2, Wo2 // 2
    hw2 = Hp2 * Wp2
    f32 = jnp.float32

    # ---- conv1: in-kernel "wide" im2col (patch rows ordered (kh, kw, c)) ----
    for kh in range(K):
        for kw in range(K):
            kidx = kh * K + kw
            off = kh * W + kw
            b1s[kidx * Cin:(kidx + 1) * Cin, :] = x_ref[0, :, off:off + L1]
    v1 = jnp.dot(w1_ref[...], b1s[...], preferred_element_type=f32)    # (C1, L1)

    # ---- fused 2x2 max-pool (4 selection matmuls) + bias + ReLU -------------
    q = jnp.dot(v1, sel1_ref[0], preferred_element_type=f32)
    for t in range(1, 4):
        q = jnp.maximum(q, jnp.dot(v1, sel1_ref[t], preferred_element_type=f32))
    p1s[...] = jnp.maximum(q + b1_ref[...], 0.0)                       # (C1, Hp1*Wp1)

    # ---- conv2 (Dropout2d identity in eval mode) -----------------------------
    for kh in range(K):
        for kw in range(K):
            kidx = kh * K + kw
            off = kh * W2 + kw
            b2s[kidx * C1:(kidx + 1) * C1, :] = p1s[:, off:off + L2]
    v2 = jnp.dot(w2_ref[...], b2s[...], preferred_element_type=f32)    # (C2, L2)

    q2 = jnp.dot(v2, sel2_ref[0], preferred_element_type=f32)
    for t in range(1, 4):
        q2 = jnp.maximum(q2, jnp.dot(v2, sel2_ref[t], preferred_element_type=f32))
    p2s[...] = jnp.maximum(q2 + b2_ref[...], 0.0)                      # (C2, Hp2*Wp2)

    # ---- flatten (c, h, w) -> (1, C2*Hp2*Wp2), matching torch .view ----------
    for c in range(C2):
        flats[:, c * hw2:(c + 1) * hw2] = p2s[c:c + 1, :]

    # ---- fc1 + ReLU -----------------------------------------------------------
    h = jnp.dot(flats[...], fc1w_ref[...], preferred_element_type=f32) + fc1b_ref[...]
    h = jnp.maximum(h, 0.0)
    # TODO(synk): training-mode F.dropout / Dropout2d (random masking) not implemented.

    # ---- fc2 + log_softmax ----------------------------------------------------
    z = jnp.dot(h, fc2w_ref[...], preferred_element_type=f32) + fc2b_ref[...]
    m = jnp.max(z, axis=-1, keepdims=True)
    lse = jnp.log(jnp.sum(jnp.exp(z - m), axis=-1, keepdims=True)) + m
    out_ref[0] = (z - lse).astype(out_ref.dtype)


# ------------------------------ one-time prep -------------------------------

def _pool_selects(Ho, Wo, W):
    """0/1 selection matrices (4, L, Hp*Wp) for 2x2 max-pool quadrants on the
    'wide' conv layout (row stride W, extent L = (Ho-1)*W + Wo)."""
    Hp, Wp = Ho // 2, Wo // 2
    L = (Ho - 1) * W + Wo
    sel = np.zeros((4, L, Hp * Wp), np.float32)
    for di in range(2):
        for dj in range(2):
            t = di * 2 + dj
            for p in range(Hp):
                for q in range(Wp):
                    sel[t, (2 * p + di) * W + (2 * q + dj), p * Wp + q] = 1.0
    return jnp.asarray(sel)


def prepare_params(params, image_hw=(28, 28)):
    """One-time parameter prep (weight permutes/transposes + pool selection
    matrices) so the per-forward path contains no layout ops."""
    H, W = image_hw
    c1w, c2w = jnp.asarray(params["conv1_w"]), jnp.asarray(params["conv2_w"])
    C1, Cin, K, _ = c1w.shape
    C2 = c2w.shape[0]
    Ho1, Wo1 = H - K + 1, W - K + 1
    Hp1, Wp1 = Ho1 // 2, Wo1 // 2
    Ho2, Wo2 = Hp1 - K + 1, Wp1 - K + 1
    prep = {
        # conv weights flattened with inner order (kh, kw, c) to match the
        # in-kernel patch-row ordering.
        "w1": c1w.transpose(0, 2, 3, 1).reshape(C1, K * K * Cin),
        "b1": jnp.asarray(params["conv1_b"]).reshape(C1, 1),
        "sel1": _pool_selects(Ho1, Wo1, W),
        "w2": c2w.transpose(0, 2, 3, 1).reshape(C2, K * K * C1),
        "b2": jnp.asarray(params["conv2_b"]).reshape(C2, 1),
        "sel2": _pool_selects(Ho2, Wo2, Wp1),
        "fc1_w": jnp.asarray(params["fc1_w"]).T,            # (320, 50)
        "fc1_b": jnp.asarray(params["fc1_b"]).reshape(1, -1),
        "fc2_w": jnp.asarray(params["fc2_w"]).T,            # (50, classes)
        "fc2_b": jnp.asarray(params["fc2_b"]).reshape(1, -1),
    }
    cfg = (int(Cin), int(H), int(W), int(K), int(C1), int(C2))
    return prep, cfg


# ------------------------------- forward -----------------------------------

def _forward_impl(prep, cfg, x):
    Cin, H, W, K, C1, C2 = cfg
    N = x.shape[0]
    Ho1, Wo1 = H - K + 1, W - K + 1
    L1 = (Ho1 - 1) * W + Wo1
    Hp1, Wp1 = Ho1 // 2, Wo1 // 2
    Ho2, Wo2 = Hp1 - K + 1, Wp1 - K + 1
    L2 = (Ho2 - 1) * Wp1 + Wo2
    Hp2, Wp2 = Ho2 // 2, Wo2 // 2
    n_cls = prep["fc2_w"].shape[1]

    xf = x.reshape(N, Cin, H * W).astype(jnp.float32)

    def full(a):  # resident whole-array block (same block every grid step)
        zeros = (0,) * a.ndim
        return pl.BlockSpec(a.shape, lambda n: zeros)

    kern = functools.partial(_fused_cnn_kernel, cfg=cfg)
    out = pl.pallas_call(
        kern,
        out_shape=jax.ShapeDtypeStruct((N, 1, n_cls), jnp.float32),
        grid=(N,),
        in_specs=[
            pl.BlockSpec((1, Cin, H * W), lambda n: (n, 0, 0)),
            full(prep["w1"]), full(prep["b1"]), full(prep["sel1"]),
            full(prep["w2"]), full(prep["b2"]), full(prep["sel2"]),
            full(prep["fc1_w"]), full(prep["fc1_b"]),
            full(prep["fc2_w"]), full(prep["fc2_b"]),
        ],
        out_specs=pl.BlockSpec((1, 1, n_cls), lambda n: (n, 0, 0)),
        scratch_shapes=[
            pltpu.VMEM((K * K * Cin, L1), jnp.float32),     # conv1 patches
            pltpu.VMEM((C1, Hp1 * Wp1), jnp.float32),       # pooled act 1
            pltpu.VMEM((K * K * C1, L2), jnp.float32),      # conv2 patches
            pltpu.VMEM((C2, Hp2 * Wp2), jnp.float32),       # pooled act 2
            pltpu.VMEM((1, C2 * Hp2 * Wp2), jnp.float32),   # flattened act
        ],
        compiler_params=pltpu.CompilerParams(
            dimension_semantics=("parallel",)),
    )(xf, prep["w1"], prep["b1"], prep["sel1"], prep["w2"], prep["b2"],
      prep["sel2"], prep["fc1_w"], prep["fc1_b"], prep["fc2_w"], prep["fc2_b"])
    return out.reshape(N, n_cls)


def make_forward(params, image_hw=(28, 28)):
    prep, cfg = prepare_params(params, image_hw)
    return jax.jit(functools.partial(_forward_impl, prep, cfg))


# ----------------------- deterministic parameter init ----------------------

def init_params(key, num_channels=1, num_classes=10):
    ks = jax.random.split(key, 8)

    def u(k, shape, fan_in):
        bound = 1.0 / float(fan_in) ** 0.5
        return jax.random.uniform(k, shape, jnp.float32, -bound, bound)

    return {
        "conv1_w": u(ks[0], (10, num_channels, 5, 5), num_channels * 25),
        "conv1_b": u(ks[1], (10,), num_channels * 25),
        "conv2_w": u(ks[2], (20, 10, 5, 5), 10 * 25),
        "conv2_b": u(ks[3], (20,), 10 * 25),
        "fc1_w": u(ks[4], (50, 320), 320),
        "fc1_b": u(ks[5], (50,), 320),
        "fc2_w": u(ks[6], (num_classes, 50), 50),
        "fc2_b": u(ks[7], (num_classes,), 50),
    }


# ------------------------------ pure-JAX ref --------------------------------

def reference_forward(params, x):
    def conv(x, w, b):
        y = jax.lax.conv_general_dilated(
            x, w, (1, 1), "VALID",
            dimension_numbers=("NCHW", "OIHW", "NCHW"))
        return y + b.reshape(1, -1, 1, 1)

    def pool_relu(x):
        N, C, H, W = x.shape
        x = x.reshape(N, C, H // 2, 2, W // 2, 2).max(axis=(3, 5))
        return jnp.maximum(x, 0.0)

    x = pool_relu(conv(x, params["conv1_w"], params["conv1_b"]))
    x = pool_relu(conv(x, params["conv2_w"], params["conv2_b"]))
    x = x.reshape(x.shape[0], -1)
    x = jnp.maximum(x @ params["fc1_w"].T + params["fc1_b"], 0.0)
    z = x @ params["fc2_w"].T + params["fc2_b"]
    return jax.nn.log_softmax(z, axis=1)


if __name__ == "__main__":
    key = jax.random.PRNGKey(0)
    k_x, k_p = jax.random.split(key)

    # MNIST-style input: batch=2, 1 channel, 28x28 (required so fc1 sees 320).
    x = jax.random.normal(k_x, (2, 1, 28, 28), dtype=jnp.float32)
    params = init_params(k_p, num_channels=1, num_classes=10)

    fwd = make_forward(params, image_hw=(28, 28))
    out = fwd(x)
    out = jax.block_until_ready(out)

    assert out.shape == (2, 10), out.shape
    ref = reference_forward(params, x)
    assert jnp.allclose(out, ref, atol=2e-4, rtol=2e-4), (
        float(jnp.max(jnp.abs(out - ref))))

    print("KERNEL_OK")
</pallas_src>

<mosaic_0001>
module attributes {stable_mosaic.version = 11 : i64} {
  func.func @_fused_cnn_kernel(%arg0: i32, %arg1: memref<1x1x784xf32, #tpu.memory_space<vmem>>, %arg2: memref<10x25xf32, #tpu.memory_space<vmem>>, %arg3: memref<10x1xf32, #tpu.memory_space<vmem>>, %arg4: memref<4x668x144xf32, #tpu.memory_space<vmem>>, %arg5: memref<20x250xf32, #tpu.memory_space<vmem>>, %arg6: memref<20x1xf32, #tpu.memory_space<vmem>>, %arg7: memref<4x92x16xf32, #tpu.memory_space<vmem>>, %arg8: memref<320x50xf32, #tpu.memory_space<vmem>>, %arg9: memref<1x50xf32, #tpu.memory_space<vmem>>, %arg10: memref<50x10xf32, #tpu.memory_space<vmem>>, %arg11: memref<1x10xf32, #tpu.memory_space<vmem>>, %arg12: memref<1x1x10xf32, #tpu.memory_space<vmem>>, %arg13: memref<25x668xf32, #tpu.memory_space<vmem>>, %arg14: memref<10x144xf32, #tpu.memory_space<vmem>>, %arg15: memref<250x92xf32, #tpu.memory_space<vmem>>, %arg16: memref<20x16xf32, #tpu.memory_space<vmem>>, %arg17: memref<1x320xf32, #tpu.memory_space<vmem>>) attributes {dimension_semantics = [#tpu.dimension_semantics<parallel>], iteration_bounds = array<i64: 2>, scalar_prefetch = 0 : i64, scratch_operands = 5 : i64, tpu.core_type = #tpu.core_type<tc>, window_params = [{transform_indices = @transform_0, window_bounds = array<i64: 1, 1, 784>}, {pipeline_mode = #tpu.pipeline_mode<synchronous>, transform_indices = @transform_1, window_bounds = array<i64: 10, 25>}, {pipeline_mode = #tpu.pipeline_mode<synchronous>, transform_indices = @transform_2, window_bounds = array<i64: 10, 1>}, {pipeline_mode = #tpu.pipeline_mode<synchronous>, transform_indices = @transform_3, window_bounds = array<i64: 4, 668, 144>}, {pipeline_mode = #tpu.pipeline_mode<synchronous>, transform_indices = @transform_4, window_bounds = array<i64: 20, 250>}, {pipeline_mode = #tpu.pipeline_mode<synchronous>, transform_indices = @transform_5, window_bounds = array<i64: 20, 1>}, {pipeline_mode = #tpu.pipeline_mode<synchronous>, transform_indices = @transform_6, window_bounds = array<i64: 4, 92, 16>}, {pipeline_mode = #tpu.pipeline_mode<synchronous>, transform_indices = @transform_7, window_bounds = array<i64: 320, 50>}, {pipeline_mode = #tpu.pipeline_mode<synchronous>, transform_indices = @transform_8, window_bounds = array<i64: 1, 50>}, {pipeline_mode = #tpu.pipeline_mode<synchronous>, transform_indices = @transform_9, window_bounds = array<i64: 50, 10>}, {pipeline_mode = #tpu.pipeline_mode<synchronous>, transform_indices = @transform_10, window_bounds = array<i64: 1, 10>}, {transform_indices = @transform_11, window_bounds = array<i64: 1, 1, 10>}]} {
    %c0 = arith.constant 0 : index
    %c0_0 = arith.constant 0 : index
    %c0_1 = arith.constant 0 : index
    %0 = vector.load %arg1[%c0, %c0_0, %c0_1] : memref<1x1x784xf32, #tpu.memory_space<vmem>>, vector<1x1x668xf32>
    %1 = vector.shape_cast %0 : vector<1x1x668xf32> to vector<1x668xf32>
    %c0_2 = arith.constant 0 : index
    %c0_3 = arith.constant 0 : index
    %2 = vector.load %arg13[%c0_2, %c0_3] : memref<25x668xf32, #tpu.memory_space<vmem>>, vector<1x668xf32>
    tpu.vector_store %arg13[%c0_2, %c0_3], %1 {strides = array<i32>} : memref<25x668xf32, #tpu.memory_space<vmem>>, vector<1x668xf32>,
    %c0_4 = arith.constant 0 : index
    %c0_5 = arith.constant 0 : index
    %c1 = arith.constant 1 : index
    %3 = vector.load %arg1[%c0_4, %c0_5, %c1] : memref<1x1x784xf32, #tpu.memory_space<vmem>>, vector<1x1x668xf32>
    %4 = vector.shape_cast %3 : vector<1x1x668xf32> to vector<1x668xf32>
    %c1_6 = arith.constant 1 : index
    %c0_7 = arith.constant 0 : index
    %5 = vector.load %arg13[%c1_6, %c0_7] : memref<25x668xf32, #tpu.memory_space<vmem>>, vector<1x668xf32>
    tpu.vector_store %arg13[%c1_6, %c0_7], %4 {strides = array<i32>} : memref<25x668xf32, #tpu.memory_space<vmem>>, vector<1x668xf32>,
    %c0_8 = arith.constant 0 : index
    %c0_9 = arith.constant 0 : index
    %c2 = arith.constant 2 : index
    %6 = vector.load %arg1[%c0_8, %c0_9, %c2] : memref<1x1x784xf32, #tpu.memory_space<vmem>>, vector<1x1x668xf32>
    %7 = vector.shape_cast %6 : vector<1x1x668xf32> to vector<1x668xf32>
    %c2_10 = arith.constant 2 : index
    %c0_11 = arith.constant 0 : index
    %8 = vector.load %arg13[%c2_10, %c0_11] : memref<25x668xf32, #tpu.memory_space<vmem>>, vector<1x668xf32>
    tpu.vector_store %arg13[%c2_10, %c0_11], %7 {strides = array<i32>} : memref<25x668xf32, #tpu.memory_space<vmem>>, vector<1x668xf32>,
    %c0_12 = arith.constant 0 : index
    %c0_13 = arith.constant 0 : index
    %c3 = arith.constant 3 : index
    %9 = vector.load %arg1[%c0_12, %c0_13, %c3] : memref<1x1x784xf32, #tpu.memory_space<vmem>>, vector<1x1x668xf32>
    %10 = vector.shape_cast %9 : vector<1x1x668xf32> to vector<1x668xf32>
    %c3_14 = arith.constant 3 : index
    %c0_15 = arith.constant 0 : index
    %11 = vector.load %arg13[%c3_14, %c0_15] : memref<25x668xf32, #tpu.memory_space<vmem>>, vector<1x668xf32>
    tpu.vector_store %arg13[%c3_14, %c0_15], %10 {strides = array<i32>} : memref<25x668xf32, #tpu.memory_space<vmem>>, vector<1x668xf32>,
    %c0_16 = arith.constant 0 : index
    %c0_17 = arith.constant 0 : index
    %c4 = arith.constant 4 : index
    %12 = vector.load %arg1[%c0_16, %c0_17, %c4] : memref<1x1x784xf32, #tpu.memory_space<vmem>>, vector<1x1x668xf32>
    %13 = vector.shape_cast %12 : vector<1x1x668xf32> to vector<1x668xf32>
    %c4_18 = arith.constant 4 : index
    %c0_19 = arith.constant 0 : index
    %14 = vector.load %arg13[%c4_18, %c0_19] : memref<25x668xf32, #tpu.memory_space<vmem>>, vector<1x668xf32>
    tpu.vector_store %arg13[%c4_18, %c0_19], %13 {strides = array<i32>} : memref<25x668xf32, #tpu.memory_space<vmem>>, vector<1x668xf32>,
    %c0_20 = arith.constant 0 : index
    %c0_21 = arith.constant 0 : index
    %c28 = arith.constant 28 : index
    %15 = vector.load %arg1[%c0_20, %c0_21, %c28] : memref<1x1x784xf32, #tpu.memory_space<vmem>>, vector<1x1x668xf32>
    %16 = vector.shape_cast %15 : vector<1x1x668xf32> to vector<1x668xf32>
    %c5 = arith.constant 5 : index
    %c0_22 = arith.constant 0 : index
    %17 = vector.load %arg13[%c5, %c0_22] : memref<25x668xf32, #tpu.memory_space<vmem>>, vector<1x668xf32>
    tpu.vector_store %arg13[%c5, %c0_22], %16 {strides = array<i32>} : memref<25x668xf32, #tpu.memory_space<vmem>>, vector<1x668xf32>,
    %c0_23 = arith.constant 0 : index
    %c0_24 = arith.constant 0 : index
    %c29 = arith.constant 29 : index
    %18 = vector.load %arg1[%c0_23, %c0_24, %c29] : memref<1x1x784xf32, #tpu.memory_space<vmem>>, vector<1x1x668xf32>
    %19 = vector.shape_cast %18 : vector<1x1x668xf32> to vector<1x668xf32>
    %c6 = arith.constant 6 : index
    %c0_25 = arith.constant 0 : index
    %20 = vector.load %arg13[%c6, %c0_25] : memref<25x668xf32, #tpu.memory_space<vmem>>, vector<1x668xf32>
    tpu.vector_store %arg13[%c6, %c0_25], %19 {strides = array<i32>} : memref<25x668xf32, #tpu.memory_space<vmem>>, vector<1x668xf32>,
    %c0_26 = arith.constant 0 : index
    %c0_27 = arith.constant 0 : index
    %c30 = arith.constant 30 : index
    %21 = vector.load %arg1[%c0_26, %c0_27, %c30] : memref<1x1x784xf32, #tpu.memory_space<vmem>>, vector<1x1x668xf32>
    %22 = vector.shape_cast %21 : vector<1x1x668xf32> to vector<1x668xf32>
    %c7 = arith.constant 7 : index
    %c0_28 = arith.constant 0 : index
    %23 = vector.load %arg13[%c7, %c0_28] : memref<25x668xf32, #tpu.memory_space<vmem>>, vector<1x668xf32>
    tpu.vector_store %arg13[%c7, %c0_28], %22 {strides = array<i32>} : memref<25x668xf32, #tpu.memory_space<vmem>>, vector<1x668xf32>,
    %c0_29 = arith.constant 0 : index
    %c0_30 = arith.constant 0 : index
    %c31 = arith.constant 31 : index
    %24 = vector.load %arg1[%c0_29, %c0_30, %c31] : memref<1x1x784xf32, #tpu.memory_space<vmem>>, vector<1x1x668xf32>
    %25 = vector.shape_cast %24 : vector<1x1x668xf32> to vector<1x668xf32>
    %c8 = arith.constant 8 : index
    %c0_31 = arith.constant 0 : index
    %26 = vector.load %arg13[%c8, %c0_31] : memref<25x668xf32, #tpu.memory_space<vmem>>, vector<1x668xf32>
    tpu.vector_store %arg13[%c8, %c0_31], %25 {strides = array<i32>} : memref<25x668xf32, #tpu.memory_space<vmem>>, vector<1x668xf32>,
    %c0_32 = arith.constant 0 : index
    %c0_33 = arith.constant 0 : index
    %c32 = arith.constant 32 : index
    %27 = vector.load %arg1[%c0_32, %c0_33, %c32] : memref<1x1x784xf32, #tpu.memory_space<vmem>>, vector<1x1x668xf32>
    %28 = vector.shape_cast %27 : vector<1x1x668xf32> to vector<1x668xf32>
    %c9 = arith.constant 9 : index
    %c0_34 = arith.constant 0 : index
    %29 = vector.load %arg13[%c9, %c0_34] : memref<25x668xf32, #tpu.memory_space<vmem>>, vector<1x668xf32>
    tpu.vector_store %arg13[%c9, %c0_34], %28 {strides = array<i32>} : memref<25x668xf32, #tpu.memory_space<vmem>>, vector<1x668xf32>,
    %c0_35 = arith.constant 0 : index
    %c0_36 = arith.constant 0 : index
    %c56 = arith.constant 56 : index
    %30 = vector.load %arg1[%c0_35, %c0_36, %c56] : memref<1x1x784xf32, #tpu.memory_space<vmem>>, vector<1x1x668xf32>
    %31 = vector.shape_cast %30 : vector<1x1x668xf32> to vector<1x668xf32>
    %c10 = arith.constant 10 : index
    %c0_37 = arith.constant 0 : index
    %32 = vector.load %arg13[%c10, %c0_37] : memref<25x668xf32, #tpu.memory_space<vmem>>, vector<1x668xf32>
    tpu.vector_store %arg13[%c10, %c0_37], %31 {strides = array<i32>} : memref<25x668xf32, #tpu.memory_space<vmem>>, vector<1x668xf32>,
    %c0_38 = arith.constant 0 : index
    %c0_39 = arith.constant 0 : index
    %c57 = arith.constant 57 : index
    %33 = vector.load %arg1[%c0_38, %c0_39, %c57] : memref<1x1x784xf32, #tpu.memory_space<vmem>>, vector<1x1x668xf32>
    %34 = vector.shape_cast %33 : vector<1x1x668xf32> to vector<1x668xf32>
    %c11 = arith.constant 11 : index
    %c0_40 = arith.constant 0 : index
    %35 = vector.load %arg13[%c11, %c0_40] : memref<25x668xf32, #tpu.memory_space<vmem>>, vector<1x668xf32>
    tpu.vector_store %arg13[%c11, %c0_40], %34 {strides = array<i32>} : memref<25x668xf32, #tpu.memory_space<vmem>>, vector<1x668xf32>,
    %c0_41 = arith.constant 0 : index
    %c0_42 = arith.constant 0 : index
    %c58 = arith.constant 58 : index
    %36 = vector.load %arg1[%c0_41, %c0_42, %c58] : memref<1x1x784xf32, #tpu.memory_space<vmem>>, vector<1x1x668xf32>
    %37 = vector.shape_cast %36 : vector<1x1x668xf32> to vector<1x668xf32>
    %c12 = arith.constant 12 : index
    %c0_43 = arith.constant 0 : index
    %38 = vector.load %arg13[%c12, %c0_43] : memref<25x668xf32, #tpu.memory_space<vmem>>, vector<1x668xf32>
    tpu.vector_store %arg13[%c12, %c0_43], %37 {strides = array<i32>} : memref<25x668xf32, #tpu.memory_space<vmem>>, vector<1x668xf32>,
    %c0_44 = arith.constant 0 : index
    %c0_45 = arith.constant 0 : index
    %c59 = arith.constant 59 : index
    %39 = vector.load %arg1[%c0_44, %c0_45, %c59] : memref<1x1x784xf32, #tpu.memory_space<vmem>>, vector<1x1x668xf32>
    %40 = vector.shape_cast %39 : vector<1x1x668xf32> to vector<1x668xf32>
    %c13 = arith.constant 13 : index
    %c0_46 = arith.constant 0 : index
    %41 = vector.load %arg13[%c13, %c0_46] : memref<25x668xf32, #tpu.memory_space<vmem>>, vector<1x668xf32>
    tpu.vector_store %arg13[%c13, %c0_46], %40 {strides = array<i32>} : memref<25x668xf32, #tpu.memory_space<vmem>>, vector<1x668xf32>,
    %c0_47 = arith.constant 0 : index
    %c0_48 = arith.constant 0 : index
    %c60 = arith.constant 60 : index
    %42 = vector.load %arg1[%c0_47, %c0_48, %c60] : memref<1x1x784xf32, #tpu.memory_space<vmem>>, vector<1x1x668xf32>
    %43 = vector.shape_cast %42 : vector<1x1x668xf32> to vector<1x668xf32>
    %c14 = arith.constant 14 : index
    %c0_49 = arith.constant 0 : index
    %44 = vector.load %arg13[%c14, %c0_49] : memref<25x668xf32, #tpu.memory_space<vmem>>, vector<1x668xf32>
    tpu.vector_store %arg13[%c14, %c0_49], %43 {strides = array<i32>} : memref<25x668xf32, #tpu.memory_space<vmem>>, vector<1x668xf32>,
    %c0_50 = arith.constant 0 : index
    %c0_51 = arith.constant 0 : index
    %c84 = arith.constant 84 : index
    %45 = vector.load %arg1[%c0_50, %c0_51, %c84] : memref<1x1x784xf32, #tpu.memory_space<vmem>>, vector<1x1x668xf32>
    %46 = vector.shape_cast %45 : vector<1x1x668xf32> to vector<1x668xf32>
    %c15 = arith.constant 15 : index
    %c0_52 = arith.constant 0 : index
    %47 = vector.load %arg13[%c15, %c0_52] : memref<25x668xf32, #tpu.memory_space<vmem>>, vector<1x668xf32>
    tpu.vector_store %arg13[%c15, %c0_52], %46 {strides = array<i32>} : memref<25x668xf32, #tpu.memory_space<vmem>>, vector<1x668xf32>,
    %c0_53 = arith.constant 0 : index
    %c0_54 = arith.constant 0 : index
    %c85 = arith.constant 85 : index
    %48 = vector.load %arg1[%c0_53, %c0_54, %c85] : memref<1x1x784xf32, #tpu.memory_space<vmem>>, vector<1x1x668xf32>
    %49 = vector.shape_cast %48 : vector<1x1x668xf32> to vector<1x668xf32>
    %c16 = arith.constant 16 : index
    %c0_55 = arith.constant 0 : index
    %50 = vector.load %arg13[%c16, %c0_55] : memref<25x668xf32, #tpu.memory_space<vmem>>, vector<1x668xf32>
    tpu.vector_store %arg13[%c16, %c0_55], %49 {strides = array<i32>} : memref<25x668xf32, #tpu.memory_space<vmem>>, vector<1x668xf32>,
    %c0_56 = arith.constant 0 : index
    %c0_57 = arith.constant 0 : index
    %c86 = arith.constant 86 : index
    %51 = vector.load %arg1[%c0_56, %c0_57, %c86] : memref<1x1x784xf32, #tpu.memory_space<vmem>>, vector<1x1x668xf32>
    %52 = vector.shape_cast %51 : vector<1x1x668xf32> to vector<1x668xf32>
    %c17 = arith.constant 17 : index
    %c0_58 = arith.constant 0 : index
    %53 = vector.load %arg13[%c17, %c0_58] : memref<25x668xf32, #tpu.memory_space<vmem>>, vector<1x668xf32>
    tpu.vector_store %arg13[%c17, %c0_58], %52 {strides = array<i32>} : memref<25x668xf32, #tpu.memory_space<vmem>>, vector<1x668xf32>,
    %c0_59 = arith.constant 0 : index
    %c0_60 = arith.constant 0 : index
    %c87 = arith.constant 87 : index
    %54 = vector.load %arg1[%c0_59, %c0_60, %c87] : memref<1x1x784xf32, #tpu.memory_space<vmem>>, vector<1x1x668xf32>
    %55 = vector.shape_cast %54 : vector<1x1x668xf32> to vector<1x668xf32>
    %c18 = arith.constant 18 : index
    %c0_61 = arith.constant 0 : index
    %56 = vector.load %arg13[%c18, %c0_61] : memref<25x668xf32, #tpu.memory_space<vmem>>, vector<1x668xf32>
    tpu.vector_store %arg13[%c18, %c0_61], %55 {strides = array<i32>} : memref<25x668xf32, #tpu.memory_space<vmem>>, vector<1x668xf32>,
    %c0_62 = arith.constant 0 : index
    %c0_63 = arith.constant 0 : index
    %c88 = arith.constant 88 : index
    %57 = vector.load %arg1[%c0_62, %c0_63, %c88] : memref<1x1x784xf32, #tpu.memory_space<vmem>>, vector<1x1x668xf32>
    %58 = vector.shape_cast %57 : vector<1x1x668xf32> to vector<1x668xf32>
    %c19 = arith.constant 19 : index
    %c0_64 = arith.constant 0 : index
    %59 = vector.load %arg13[%c19, %c0_64] : memref<25x668xf32, #tpu.memory_space<vmem>>, vector<1x668xf32>
    tpu.vector_store %arg13[%c19, %c0_64], %58 {strides = array<i32>} : memref<25x668xf32, #tpu.memory_space<vmem>>, vector<1x668xf32>,
    %c0_65 = arith.constant 0 : index
    %c0_66 = arith.constant 0 : index
    %c112 = arith.constant 112 : index
    %60 = vector.load %arg1[%c0_65, %c0_66, %c112] : memref<1x1x784xf32, #tpu.memory_space<vmem>>, vector<1x1x668xf32>
    %61 = vector.shape_cast %60 : vector<1x1x668xf32> to vector<1x668xf32>
    %c20 = arith.constant 20 : index
    %c0_67 = arith.constant 0 : index
    %62 = vector.load %arg13[%c20, %c0_67] : memref<25x668xf32, #tpu.memory_space<vmem>>, vector<1x668xf32>
    tpu.vector_store %arg13[%c20, %c0_67], %61 {strides = array<i32>} : memref<25x668xf32, #tpu.memory_space<vmem>>, vector<1x668xf32>,
    %c0_68 = arith.constant 0 : index
    %c0_69 = arith.constant 0 : index
    %c113 = arith.constant 113 : index
    %63 = vector.load %arg1[%c0_68, %c0_69, %c113] : memref<1x1x784xf32, #tpu.memory_space<vmem>>, vector<1x1x668xf32>
    %64 = vector.shape_cast %63 : vector<1x1x668xf32> to vector<1x668xf32>
    %c21 = arith.constant 21 : index
    %c0_70 = arith.constant 0 : index
    %65 = vector.load %arg13[%c21, %c0_70] : memref<25x668xf32, #tpu.memory_space<vmem>>, vector<1x668xf32>
    tpu.vector_store %arg13[%c21, %c0_70], %64 {strides = array<i32>} : memref<25x668xf32, #tpu.memory_space<vmem>>, vector<1x668xf32>,
    %c0_71 = arith.constant 0 : index
    %c0_72 = arith.constant 0 : index
    %c114 = arith.constant 114 : index
    %66 = vector.load %arg1[%c0_71, %c0_72, %c114] : memref<1x1x784xf32, #tpu.memory_space<vmem>>, vector<1x1x668xf32>
    %67 = vector.shape_cast %66 : vector<1x1x668xf32> to vector<1x668xf32>
    %c22 = arith.constant 22 : index
    %c0_73 = arith.constant 0 : index
    %68 = vector.load %arg13[%c22, %c0_73] : memref<25x668xf32, #tpu.memory_space<vmem>>, vector<1x668xf32>
    tpu.vector_store %arg13[%c22, %c0_73], %67 {strides = array<i32>} : memref<25x668xf32, #tpu.memory_space<vmem>>, vector<1x668xf32>,
    %c0_74 = arith.constant 0 : index
    %c0_75 = arith.constant 0 : index
    %c115 = arith.constant 115 : index
    %69 = vector.load %arg1[%c0_74, %c0_75, %c115] : memref<1x1x784xf32, #tpu.memory_space<vmem>>, vector<1x1x668xf32>
    %70 = vector.shape_cast %69 : vector<1x1x668xf32> to vector<1x668xf32>
    %c23 = arith.constant 23 : index
    %c0_76 = arith.constant 0 : index
    %71 = vector.load %arg13[%c23, %c0_76] : memref<25x668xf32, #tpu.memory_space<vmem>>, vector<1x668xf32>
    tpu.vector_store %arg13[%c23, %c0_76], %70 {strides = array<i32>} : memref<25x668xf32, #tpu.memory_space<vmem>>, vector<1x668xf32>,
    %c0_77 = arith.constant 0 : index
    %c0_78 = arith.constant 0 : index
    %c116 = arith.constant 116 : index
    %72 = vector.load %arg1[%c0_77, %c0_78, %c116] : memref<1x1x784xf32, #tpu.memory_space<vmem>>, vector<1x1x668xf32>
    %73 = vector.shape_cast %72 : vector<1x1x668xf32> to vector<1x668xf32>
    %c24 = arith.constant 24 : index
    %c0_79 = arith.constant 0 : index
    %74 = vector.load %arg13[%c24, %c0_79] : memref<25x668xf32, #tpu.memory_space<vmem>>, vector<1x668xf32>
    tpu.vector_store %arg13[%c24, %c0_79], %73 {strides = array<i32>} : memref<25x668xf32, #tpu.memory_space<vmem>>, vector<1x668xf32>,
    %c0_80 = arith.constant 0 : index
    %c0_81 = arith.constant 0 : index
    %75 = vector.load %arg2[%c0_80, %c0_81] : memref<10x25xf32, #tpu.memory_space<vmem>>, vector<10x25xf32>
    %c0_82 = arith.constant 0 : index
    %c0_83 = arith.constant 0 : index
    %76 = vector.load %arg13[%c0_82, %c0_83] : memref<25x668xf32, #tpu.memory_space<vmem>>, vector<25x668xf32>
    %cst = arith.constant dense<0.000000e+00> : vector<10x668xf32>
    %77 = tpu.matmul %75, %76, %cst {dimension_numbers = #tpu.dot_dimension_numbers<[1], [0], [0], [1], [0, 0, 1, 1], [], []>} : vector<10x25xf32>, vector<25x668xf32>, vector<10x668xf32> -> vector<10x668xf32>
    %c0_84 = arith.constant 0 : index
    %c0_85 = arith.constant 0 : index
    %c0_86 = arith.constant 0 : index
    %78 = vector.load %arg4[%c0_84, %c0_85, %c0_86] : memref<4x668x144xf32, #tpu.memory_space<vmem>>, vector<1x668x144xf32>
    %79 = vector.shape_cast %78 : vector<1x668x144xf32> to vector<668x144xf32>
    %cst_87 = arith.constant dense<0.000000e+00> : vector<10x144xf32>
    %80 = tpu.matmul %77, %79, %cst_87 {dimension_numbers = #tpu.dot_dimension_numbers<[1], [0], [0], [1], [0, 0, 1, 1], [], []>} : vector<10x668xf32>, vector<668x144xf32>, vector<10x144xf32> -> vector<10x144xf32>
    %c1_88 = arith.constant 1 : index
    %c0_89 = arith.constant 0 : index
    %c0_90 = arith.constant 0 : index
    %81 = vector.load %arg4[%c1_88, %c0_89, %c0_90] : memref<4x668x144xf32, #tpu.memory_space<vmem>>, vector<1x668x144xf32>
    %82 = vector.shape_cast %81 : vector<1x668x144xf32> to vector<668x144xf32>
    %cst_91 = arith.constant dense<0.000000e+00> : vector<10x144xf32>
    %83 = tpu.matmul %77, %82, %cst_91 {dimension_numbers = #tpu.dot_dimension_numbers<[1], [0], [0], [1], [0, 0, 1, 1], [], []>} : vector<10x668xf32>, vector<668x144xf32>, vector<10x144xf32> -> vector<10x144xf32>
    %84 = arith.maximumf %80, %83 : vector<10x144xf32>
    %c2_92 = arith.constant 2 : index
    %c0_93 = arith.constant 0 : index
    %c0_94 = arith.constant 0 : index
    %85 = vector.load %arg4[%c2_92, %c0_93, %c0_94] : memref<4x668x144xf32, #tpu.memory_space<vmem>>, vector<1x668x144xf32>
    %86 = vector.shape_cast %85 : vector<1x668x144xf32> to vector<668x144xf32>
    %cst_95 = arith.constant dense<0.000000e+00> : vector<10x144xf32>
    %87 = tpu.matmul %77, %86, %cst_95 {dimension_numbers = #tpu.dot_dimension_numbers<[1], [0], [0], [1], [0, 0, 1, 1], [], []>} : vector<10x668xf32>, vector<668x144xf32>, vector<10x144xf32> -> vector<10x144xf32>
    %88 = arith.maximumf %84, %87 : vector<10x144xf32>
    %c3_96 = arith.constant 3 : index
    %c0_97 = arith.constant 0 : index
    %c0_98 = arith.constant 0 : index
    %89 = vector.load %arg4[%c3_96, %c0_97, %c0_98] : memref<4x668x144xf32, #tpu.memory_space<vmem>>, vector<1x668x144xf32>
    %90 = vector.shape_cast %89 : vector<1x668x144xf32> to vector<668x144xf32>
    %cst_99 = arith.constant dense<0.000000e+00> : vector<10x144xf32>
    %91 = tpu.matmul %77, %90, %cst_99 {dimension_numbers = #tpu.dot_dimension_numbers<[1], [0], [0], [1], [0, 0, 1, 1], [], []>} : vector<10x668xf32>, vector<668x144xf32>, vector<10x144xf32> -> vector<10x144xf32>
    %92 = arith.maximumf %88, %91 : vector<10x144xf32>
    %c0_100 = arith.constant 0 : index
    %c0_101 = arith.constant 0 : index
    %93 = vector.load %arg3[%c0_100, %c0_101] : memref<10x1xf32, #tpu.memory_space<vmem>>, vector<10x1xf32>
    %94 = vector.broadcast %93 : vector<10x1xf32> to vector<10x144xf32>
    %95 = arith.addf %92, %94 : vector<10x144xf32>
    %cst_102 = arith.constant 0.000000e+00 : f32
    %96 = vector.broadcast %cst_102 : f32 to vector<10x144xf32>
    %97 = arith.maximumf %95, %96 : vector<10x144xf32>
    %c0_103 = arith.constant 0 : index
    %c0_104 = arith.constant 0 : index
    %98 = vector.load %arg14[%c0_103, %c0_104] : memref<10x144xf32, #tpu.memory_space<vmem>>, vector<10x144xf32>
    tpu.vector_store %arg14[%c0_103, %c0_104], %97 {strides = array<i32>} : memref<10x144xf32, #tpu.memory_space<vmem>>, vector<10x144xf32>,
    %c0_105 = arith.constant 0 : index
    %c0_106 = arith.constant 0 : index
    %99 = vector.load %arg14[%c0_105, %c0_106] : memref<10x144xf32, #tpu.memory_space<vmem>>, vector<10x92xf32>
    %c0_107 = arith.constant 0 : index
    %c0_108 = arith.constant 0 : index
    %100 = vector.load %arg15[%c0_107, %c0_108] : memref<250x92xf32, #tpu.memory_space<vmem>>, vector<10x92xf32>
    tpu.vector_store %arg15[%c0_107, %c0_108], %99 {strides = array<i32>} : memref<250x92xf32, #tpu.memory_space<vmem>>, vector<10x92xf32>,
    %c0_109 = arith.constant 0 : index
    %c1_110 = arith.constant 1 : index
    %101 = vector.load %arg14[%c0_109, %c1_110] : memref<10x144xf32, #tpu.memory_space<vmem>>, vector<10x92xf32>
    %c10_111 = arith.constant 10 : index
    %c0_112 = arith.constant 0 : index
    %102 = vector.load %arg15[%c10_111, %c0_112] : memref<250x92xf32, #tpu.memory_space<vmem>>, vector<10x92xf32>
    tpu.vector_store %arg15[%c10_111, %c0_112], %101 {strides = array<i32>} : memref<250x92xf32, #tpu.memory_space<vmem>>, vector<10x92xf32>,
    %c0_113 = arith.constant 0 : index
    %c2_114 = arith.constant 2 : index
    %103 = vector.load %arg14[%c0_113, %c2_114] : memref<10x144xf32, #tpu.memory_space<vmem>>, vector<10x92xf32>
    %c20_115 = arith.constant 20 : index
    %c0_116 = arith.constant 0 : index
    %104 = vector.load %arg15[%c20_115, %c0_116] : memref<250x92xf32, #tpu.memory_space<vmem>>, vector<10x92xf32>
    tpu.vector_store %arg15[%c20_115, %c0_116], %103 {strides = array<i32>} : memref<250x92xf32, #tpu.memory_space<vmem>>, vector<10x92xf32>,
    %c0_117 = arith.constant 0 : index
    %c3_118 = arith.constant 3 : index
    %105 = vector.load %arg14[%c0_117, %c3_118] : memref<10x144xf32, #tpu.memory_space<vmem>>, vector<10x92xf32>
    %c30_119 = arith.constant 30 : index
    %c0_120 = arith.constant 0 : index
    %106 = vector.load %arg15[%c30_119, %c0_120] : memref<250x92xf32, #tpu.memory_space<vmem>>, vector<10x92xf32>
    tpu.vector_store %arg15[%c30_119, %c0_120], %105 {strides = array<i32>} : memref<250x92xf32, #tpu.memory_space<vmem>>, vector<10x92xf32>,
    %c0_121 = arith.constant 0 : index
    %c4_122 = arith.constant 4 : index
    %107 = vector.load %arg14[%c0_121, %c4_122] : memref<10x144xf32, #tpu.memory_space<vmem>>, vector<10x92xf32>
    %c40 = arith.constant 40 : index
    %c0_123 = arith.constant 0 : index
    %108 = vector.load %arg15[%c40, %c0_123] : memref<250x92xf32, #tpu.memory_space<vmem>>, vector<10x92xf32>
    tpu.vector_store %arg15[%c40, %c0_123], %107 {strides = array<i32>} : memref<250x92xf32, #tpu.memory_space<vmem>>, vector<10x92xf32>,
    %c0_124 = arith.constant 0 : index
    %c12_125 = arith.constant 12 : index
    %109 = vector.load %arg14[%c0_124, %c12_125] : memref<10x144xf32, #tpu.memory_space<vmem>>, vector<10x92xf32>
    %c50 = arith.constant 50 : index
    %c0_126 = arith.constant 0 : index
    %110 = vector.load %arg15[%c50, %c0_126] : memref<250x92xf32, #tpu.memory_space<vmem>>, vector<10x92xf32>
    tpu.vector_store %arg15[%c50, %c0_126], %109 {strides = array<i32>} : memref<250x92xf32, #tpu.memory_space<vmem>>, vector<10x92xf32>,
    %c0_127 = arith.constant 0 : index
    %c13_128 = arith.constant 13 : index
    %111 = vector.load %arg14[%c0_127, %c13_128] : memref<10x144xf32, #tpu.memory_space<vmem>>, vector<10x92xf32>
    %c60_129 = arith.constant 60 : index
    %c0_130 = arith.constant 0 : index
    %112 = vector.load %arg15[%c60_129, %c0_130] : memref<250x92xf32, #tpu.memory_space<vmem>>, vector<10x92xf32>
    tpu.vector_store %arg15[%c60_129, %c0_130], %111 {strides = array<i32>} : memref<250x92xf32, #tpu.memory_space<vmem>>, vector<10x92xf32>,
    %c0_131 = arith.constant 0 : index
    %c14_132 = arith.constant 14 : index
    %113 = vector.load %arg14[%c0_131, %c14_132] : memref<10x144xf32, #tpu.memory_space<vmem>>, vector<10x92xf32>
    %c70 = arith.constant 70 : index
    %c0_133 = arith.constant 0 : index
    %114 = vector.load %arg15[%c70, %c0_133] : memref<250x92xf32, #tpu.memory_space<vmem>>, vector<10x92xf32>
    tpu.vector_store %arg15[%c70, %c0_133], %113 {strides = array<i32>} : memref<250x92xf32, #tpu.memory_space<vmem>>, vector<10x92xf32>,
    %c0_134 = arith.constant 0 : index
    %c15_135 = arith.constant 15 : index
    %115 = vector.load %arg14[%c0_134, %c15_135] : memref<10x144xf32, #tpu.memory_space<vmem>>, vector<10x92xf32>
    %c80 = arith.constant 80 : index
    %c0_136 = arith.constant 0 : index
    %116 = vector.load %arg15[%c80, %c0_136] : memref<250x92xf32, #tpu.memory_space<vmem>>, vector<10x92xf32>
    tpu.vector_store %arg15[%c80, %c0_136], %115 {strides = array<i32>} : memref<250x92xf32, #tpu.memory_space<vmem>>, vector<10x92xf32>,
    %c0_137 = arith.constant 0 : index
    %c16_138 = arith.constant 16 : index
    %117 = vector.load %arg14[%c0_137, %c16_138] : memref<10x144xf32, #tpu.memory_space<vmem>>, vector<10x92xf32>
    %c90 = arith.constant 90 : index
    %c0_139 = arith.constant 0 : index
    %118 = vector.load %arg15[%c90, %c0_139] : memref<250x92xf32, #tpu.memory_space<vmem>>, vector<10x92xf32>
    tpu.vector_store %arg15[%c90, %c0_139], %117 {strides = array<i32>} : memref<250x92xf32, #tpu.memory_space<vmem>>, vector<10x92xf32>,
    %c0_140 = arith.constant 0 : index
    %c24_141 = arith.constant 24 : index
    %119 = vector.load %arg14[%c0_140, %c24_141] : memref<10x144xf32, #tpu.memory_space<vmem>>, vector<10x92xf32>
    %c100 = arith.constant 100 : index
    %c0_142 = arith.constant 0 : index
    %120 = vector.load %arg15[%c100, %c0_142] : memref<250x92xf32, #tpu.memory_space<vmem>>, vector<10x92xf32>
    tpu.vector_store %arg15[%c100, %c0_142], %119 {strides = array<i32>} : memref<250x92xf32, #tpu.memory_space<vmem>>, vector<10x92xf32>,
    %c0_143 = arith.constant 0 : index
    %c25 = arith.constant 25 : index
    %121 = vector.load %arg14[%c0_143, %c25] : memref<10x144xf32, #tpu.memory_space<vmem>>, vector<10x92xf32>
    %c110 = arith.constant 110 : index
    %c0_144 = arith.constant 0 : index
    %122 = vector.load %arg15[%c110, %c0_144] : memref<250x92xf32, #tpu.memory_space<vmem>>, vector<10x92xf32>
    tpu.vector_store %arg15[%c110, %c0_144], %121 {strides = array<i32>} : memref<250x92xf32, #tpu.memory_space<vmem>>, vector<10x92xf32>,
    %c0_145 = arith.constant 0 : index
    %c26 = arith.constant 26 : index
    %123 = vector.load %arg14[%c0_145, %c26] : memref<10x144xf32, #tpu.memory_space<vmem>>, vector<10x92xf32>
    %c120 = arith.constant 120 : index
    %c0_146 = arith.constant 0 : index
    %124 = vector.load %arg15[%c120, %c0_146] : memref<250x92xf32, #tpu.memory_space<vmem>>, vector<10x92xf32>
    tpu.vector_store %arg15[%c120, %c0_146], %123 {strides = array<i32>} : memref<250x92xf32, #tpu.memory_space<vmem>>, vector<10x92xf32>,
    %c0_147 = arith.constant 0 : index
    %c27 = arith.constant 27 : index
    %125 = vector.load %arg14[%c0_147, %c27] : memref<10x144xf32, #tpu.memory_space<vmem>>, vector<10x92xf32>
    %c130 = arith.constant 130 : index
    %c0_148 = arith.constant 0 : index
    %126 = vector.load %arg15[%c130, %c0_148] : memref<250x92xf32, #tpu.memory_space<vmem>>, vector<10x92xf32>
    tpu.vector_store %arg15[%c130, %c0_148], %125 {strides = array<i32>} : memref<250x92xf32, #tpu.memory_space<vmem>>, vector<10x92xf32>,
    %c0_149 = arith.constant 0 : index
    %c28_150 = arith.constant 28 : index
    %127 = vector.load %arg14[%c0_149, %c28_150] : memref<10x144xf32, #tpu.memory_space<vmem>>, vector<10x92xf32>
    %c140 = arith.constant 140 : index
    %c0_151 = arith.constant 0 : index
    %128 = vector.load %arg15[%c140, %c0_151] : memref<250x92xf32, #tpu.memory_space<vmem>>, vector<10x92xf32>
    tpu.vector_store %arg15[%c140, %c0_151], %127 {strides = array<i32>} : memref<250x92xf32, #tpu.memory_space<vmem>>, vector<10x92xf32>,
    %c0_152 = arith.constant 0 : index
    %c36 = arith.constant 36 : index
    %129 = vector.load %arg14[%c0_152, %c36] : memref<10x144xf32, #tpu.memory_space<vmem>>, vector<10x92xf32>
    %c150 = arith.constant 150 : index
    %c0_153 = arith.constant 0 : index
    %130 = vector.load %arg15[%c150, %c0_153] : memref<250x92xf32, #tpu.memory_space<vmem>>, vector<10x92xf32>
    tpu.vector_store %arg15[%c150, %c0_153], %129 {strides = array<i32>} : memref<250x92xf32, #tpu.memory_space<vmem>>, vector<10x92xf32>,
    %c0_154 = arith.constant 0 : index
    %c37 = arith.constant 37 : index
    %131 = vector.load %arg14[%c0_154, %c37] : memref<10x144xf32, #tpu.memory_space<vmem>>, vector<10x92xf32>
    %c160 = arith.constant 160 : index
    %c0_155 = arith.constant 0 : index
    %132 = vector.load %arg15[%c160, %c0_155] : memref<250x92xf32, #tpu.memory_space<vmem>>, vector<10x92xf32>
    tpu.vector_store %arg15[%c160, %c0_155], %131 {strides = array<i32>} : memref<250x92xf32, #tpu.memory_space<vmem>>, vector<10x92xf32>,
    %c0_156 = arith.constant 0 : index
    %c38 = arith.constant 38 : index
    %133 = vector.load %arg14[%c0_156, %c38] : memref<10x144xf32, #tpu.memory_space<vmem>>, vector<10x92xf32>
    %c170 = arith.constant 170 : index
    %c0_157 = arith.constant 0 : index
    %134 = vector.load %arg15[%c170, %c0_157] : memref<250x92xf32, #tpu.memory_space<vmem>>, vector<10x92xf32>
    tpu.vector_store %arg15[%c170, %c0_157], %133 {strides = array<i32>} : memref<250x92xf32, #tpu.memory_space<vmem>>, vector<10x92xf32>,
    %c0_158 = arith.constant 0 : index
    %c39 = arith.constant 39 : index
    %135 = vector.load %arg14[%c0_158, %c39] : memref<10x144xf32, #tpu.memory_space<vmem>>, vector<10x92xf32>
    %c180 = arith.constant 180 : index
    %c0_159 = arith.constant 0 : index
    %136 = vector.load %arg15[%c180, %c0_159] : memref<250x92xf32, #tpu.memory_space<vmem>>, vector<10x92xf32>
    tpu.vector_store %arg15[%c180, %c0_159], %135 {strides = array<i32>} : memref<250x92xf32, #tpu.memory_space<vmem>>, vector<10x92xf32>,
    %c0_160 = arith.constant 0 : index
    %c40_161 = arith.constant 40 : index
    %137 = vector.load %arg14[%c0_160, %c40_161] : memref<10x144xf32, #tpu.memory_space<vmem>>, vector<10x92xf32>
    %c190 = arith.constant 190 : index
    %c0_162 = arith.constant 0 : index
    %138 = vector.load %arg15[%c190, %c0_162] : memref<250x92xf32, #tpu.memory_space<vmem>>, vector<10x92xf32>
    tpu.vector_store %arg15[%c190, %c0_162], %137 {strides = array<i32>} : memref<250x92xf32, #tpu.memory_space<vmem>>, vector<10x92xf32>,
    %c0_163 = arith.constant 0 : index
    %c48 = arith.constant 48 : index
    %139 = vector.load %arg14[%c0_163, %c48] : memref<10x144xf32, #tpu.memory_space<vmem>>, vector<10x92xf32>
    %c200 = arith.constant 200 : index
    %c0_164 = arith.constant 0 : index
    %140 = vector.load %arg15[%c200, %c0_164] : memref<250x92xf32, #tpu.memory_space<vmem>>, vector<10x92xf32>
    tpu.vector_store %arg15[%c200, %c0_164], %139 {strides = array<i32>} : memref<250x92xf32, #tpu.memory_space<vmem>>, vector<10x92xf32>,
    %c0_165 = arith.constant 0 : index
    %c49 = arith.constant 49 : index
    %141 = vector.load %arg14[%c0_165, %c49] : memref<10x144xf32, #tpu.memory_space<vmem>>, vector<10x92xf32>
    %c210 = arith.constant 210 : index
    %c0_166 = arith.constant 0 : index
    %142 = vector.load %arg15[%c210, %c0_166] : memref<250x92xf32, #tpu.memory_space<vmem>>, vector<10x92xf32>
    tpu.vector_store %arg15[%c210, %c0_166], %141 {strides = array<i32>} : memref<250x92xf32, #tpu.memory_space<vmem>>, vector<10x92xf32>,
    %c0_167 = arith.constant 0 : index
    %c50_168 = arith.constant 50 : index
    %143 = vector.load %arg14[%c0_167, %c50_168] : memref<10x144xf32, #tpu.memory_space<vmem>>, vector<10x92xf32>
    %c220 = arith.constant 220 : index
    %c0_169 = arith.constant 0 : index
    %144 = vector.load %arg15[%c220, %c0_169] : memref<250x92xf32, #tpu.memory_space<vmem>>, vector<10x92xf32>
    tpu.vector_store %arg15[%c220, %c0_169], %143 {strides = array<i32>} : memref<250x92xf32, #tpu.memory_space<vmem>>, vector<10x92xf32>,
    %c0_170 = arith.constant 0 : index
    %c51 = arith.constant 51 : index
    %145 = vector.load %arg14[%c0_170, %c51] : memref<10x144xf32, #tpu.memory_space<vmem>>, vector<10x92xf32>
    %c230 = arith.constant 230 : index
    %c0_171 = arith.constant 0 : index
    %146 = vector.load %arg15[%c230, %c0_171] : memref<250x92xf32, #tpu.memory_space<vmem>>, vector<10x92xf32>
    tpu.vector_store %arg15[%c230, %c0_171], %145 {strides = array<i32>} : memref<250x92xf32, #tpu.memory_space<vmem>>, vector<10x92xf32>,
    %c0_172 = arith.constant 0 : index
    %c52 = arith.constant 52 : index
    %147 = vector.load %arg14[%c0_172, %c52] : memref<10x144xf32, #tpu.memory_space<vmem>>, vector<10x92xf32>
    %c240 = arith.constant 240 : index
    %c0_173 = arith.constant 0 : index
    %148 = vector.load %arg15[%c240, %c0_173] : memref<250x92xf32, #tpu.memory_space<vmem>>, vector<10x92xf32>
    tpu.vector_store %arg15[%c240, %c0_173], %147 {strides = array<i32>} : memref<250x92xf32, #tpu.memory_space<vmem>>, vector<10x92xf32>,
    %c0_174 = arith.constant 0 : index
    %c0_175 = arith.constant 0 : index
    %149 = vector.load %arg5[%c0_174, %c0_175] : memref<20x250xf32, #tpu.memory_space<vmem>>, vector<20x250xf32>
    %c0_176 = arith.constant 0 : index
    %c0_177 = arith.constant 0 : index
    %150 = vector.load %arg15[%c0_176, %c0_177] : memref<250x92xf32, #tpu.memory_space<vmem>>, vector<250x92xf32>
    %cst_178 = arith.constant dense<0.000000e+00> : vector<20x92xf32>
    %151 = tpu.matmul %149, %150, %cst_178 {dimension_numbers = #tpu.dot_dimension_numbers<[1], [0], [0], [1], [0, 0, 1, 1], [], []>} : vector<20x250xf32>, vector<250x92xf32>, vector<20x92xf32> -> vector<20x92xf32>
    %c0_179 = arith.constant 0 : index
    %c0_180 = arith.constant 0 : index
    %c0_181 = arith.constant 0 : index
    %152 = vector.load %arg7[%c0_179, %c0_180, %c0_181] : memref<4x92x16xf32, #tpu.memory_space<vmem>>, vector<1x92x16xf32>
    %153 = vector.shape_cast %152 : vector<1x92x16xf32> to vector<92x16xf32>
    %cst_182 = arith.constant dense<0.000000e+00> : vector<20x16xf32>
    %154 = tpu.matmul %151, %153, %cst_182 {dimension_numbers = #tpu.dot_dimension_numbers<[1], [0], [0], [1], [0, 0, 1, 1], [], []>} : vector<20x92xf32>, vector<92x16xf32>, vector<20x16xf32> -> vector<20x16xf32>
    %c1_183 = arith.constant 1 : index
    %c0_184 = arith.constant 0 : index
    %c0_185 = arith.constant 0 : index
    %155 = vector.load %arg7[%c1_183, %c0_184, %c0_185] : memref<4x92x16xf32, #tpu.memory_space<vmem>>, vector<1x92x16xf32>
    %156 = vector.shape_cast %155 : vector<1x92x16xf32> to vector<92x16xf32>
    %cst_186 = arith.constant dense<0.000000e+00> : vector<20x16xf32>
    %157 = tpu.matmul %151, %156, %cst_186 {dimension_numbers = #tpu.dot_dimension_numbers<[1], [0], [0], [1], [0, 0, 1, 1], [], []>} : vector<20x92xf32>, vector<92x16xf32>, vector<20x16xf32> -> vector<20x16xf32>
    %158 = arith.maximumf %154, %157 : vector<20x16xf32>
    %c2_187 = arith.constant 2 : index
    %c0_188 = arith.constant 0 : index
    %c0_189 = arith.constant 0 : index
    %159 = vector.load %arg7[%c2_187, %c0_188, %c0_189] : memref<4x92x16xf32, #tpu.memory_space<vmem>>, vector<1x92x16xf32>
    %160 = vector.shape_cast %159 : vector<1x92x16xf32> to vector<92x16xf32>
    %cst_190 = arith.constant dense<0.000000e+00> : vector<20x16xf32>
    %161 = tpu.matmul %151, %160, %cst_190 {dimension_numbers = #tpu.dot_dimension_numbers<[1], [0], [0], [1], [0, 0, 1, 1], [], []>} : vector<20x92xf32>, vector<92x16xf32>, vector<20x16xf32> -> vector<20x16xf32>
    %162 = arith.maximumf %158, %161 : vector<20x16xf32>
    %c3_191 = arith.constant 3 : index
    %c0_192 = arith.constant 0 : index
    %c0_193 = arith.constant 0 : index
    %163 = vector.load %arg7[%c3_191, %c0_192, %c0_193] : memref<4x92x16xf32, #tpu.memory_space<vmem>>, vector<1x92x16xf32>
    %164 = vector.shape_cast %163 : vector<1x92x16xf32> to vector<92x16xf32>
    %cst_194 = arith.constant dense<0.000000e+00> : vector<20x16xf32>
    %165 = tpu.matmul %151, %164, %cst_194 {dimension_numbers = #tpu.dot_dimension_numbers<[1], [0], [0], [1], [0, 0, 1, 1], [], []>} : vector<20x92xf32>, vector<92x16xf32>, vector<20x16xf32> -> vector<20x16xf32>
    %166 = arith.maximumf %162, %165 : vector<20x16xf32>
    %c0_195 = arith.constant 0 : index
    %c0_196 = arith.constant 0 : index
    %167 = vector.load %arg6[%c0_195, %c0_196] : memref<20x1xf32, #tpu.memory_space<vmem>>, vector<20x1xf32>
    %168 = vector.broadcast %167 : vector<20x1xf32> to vector<20x16xf32>
    %169 = arith.addf %166, %168 : vector<20x16xf32>
    %cst_197 = arith.constant 0.000000e+00 : f32
    %170 = vector.broadcast %cst_197 : f32 to vector<20x16xf32>
    %171 = arith.maximumf %169, %170 : vector<20x16xf32>
    %c0_198 = arith.constant 0 : index
    %c0_199 = arith.constant 0 : index
    %172 = vector.load %arg16[%c0_198, %c0_199] : memref<20x16xf32, #tpu.memory_space<vmem>>, vector<20x16xf32>
    tpu.vector_store %arg16[%c0_198, %c0_199], %171 {strides = array<i32>} : memref<20x16xf32, #tpu.memory_space<vmem>>, vector<20x16xf32>,
    %c0_200 = arith.constant 0 : index
    %c0_201 = arith.constant 0 : index
    %173 = vector.load %arg16[%c0_200, %c0_201] : memref<20x16xf32, #tpu.memory_space<vmem>>, vector<1x16xf32>
    %c0_202 = arith.constant 0 : index
    %c0_203 = arith.constant 0 : index
    %174 = vector.load %arg17[%c0_202, %c0_203] : memref<1x320xf32, #tpu.memory_space<vmem>>, vector<1x16xf32>
    tpu.vector_store %arg17[%c0_202, %c0_203], %173 {strides = array<i32>} : memref<1x320xf32, #tpu.memory_space<vmem>>, vector<1x16xf32>,
    %c1_204 = arith.constant 1 : index
    %c0_205 = arith.constant 0 : index
    %175 = vector.load %arg16[%c1_204, %c0_205] : memref<20x16xf32, #tpu.memory_space<vmem>>, vector<1x16xf32>
    %c0_206 = arith.constant 0 : index
    %c16_207 = arith.constant 16 : index
    %176 = vector.load %arg17[%c0_206, %c16_207] : memref<1x320xf32, #tpu.memory_space<vmem>>, vector<1x16xf32>
    tpu.vector_store %arg17[%c0_206, %c16_207], %175 {strides = array<i32>} : memref<1x320xf32, #tpu.memory_space<vmem>>, vector<1x16xf32>,
    %c2_208 = arith.constant 2 : index
    %c0_209 = arith.constant 0 : index
    %177 = vector.load %arg16[%c2_208, %c0_209] : memref<20x16xf32, #tpu.memory_space<vmem>>, vector<1x16xf32>
    %c0_210 = arith.constant 0 : index
    %c32_211 = arith.constant 32 : index
    %178 = vector.load %arg17[%c0_210, %c32_211] : memref<1x320xf32, #tpu.memory_space<vmem>>, vector<1x16xf32>
    tpu.vector_store %arg17[%c0_210, %c32_211], %177 {strides = array<i32>} : memref<1x320xf32, #tpu.memory_space<vmem>>, vector<1x16xf32>,
    %c3_212 = arith.constant 3 : index
    %c0_213 = arith.constant 0 : index
    %179 = vector.load %arg16[%c3_212, %c0_213] : memref<20x16xf32, #tpu.memory_space<vmem>>, vector<1x16xf32>
    %c0_214 = arith.constant 0 : index
    %c48_215 = arith.constant 48 : index
    %180 = vector.load %arg17[%c0_214, %c48_215] : memref<1x320xf32, #tpu.memory_space<vmem>>, vector<1x16xf32>
    tpu.vector_store %arg17[%c0_214, %c48_215], %179 {strides = array<i32>} : memref<1x320xf32, #tpu.memory_space<vmem>>, vector<1x16xf32>,
    %c4_216 = arith.constant 4 : index
    %c0_217 = arith.constant 0 : index
    %181 = vector.load %arg16[%c4_216, %c0_217] : memref<20x16xf32, #tpu.memory_space<vmem>>, vector<1x16xf32>
    %c0_218 = arith.constant 0 : index
    %c64 = arith.constant 64 : index
    %182 = vector.load %arg17[%c0_218, %c64] : memref<1x320xf32, #tpu.memory_space<vmem>>, vector<1x16xf32>
    tpu.vector_store %arg17[%c0_218, %c64], %181 {strides = array<i32>} : memref<1x320xf32, #tpu.memory_space<vmem>>, vector<1x16xf32>,
    %c5_219 = arith.constant 5 : index
    %c0_220 = arith.constant 0 : index
    %183 = vector.load %arg16[%c5_219, %c0_220] : memref<20x16xf32, #tpu.memory_space<vmem>>, vector<1x16xf32>
    %c0_221 = arith.constant 0 : index
    %c80_222 = arith.constant 80 : index
    %184 = vector.load %arg17[%c0_221, %c80_222] : memref<1x320xf32, #tpu.memory_space<vmem>>, vector<1x16xf32>
    tpu.vector_store %arg17[%c0_221, %c80_222], %183 {strides = array<i32>} : memref<1x320xf32, #tpu.memory_space<vmem>>, vector<1x16xf32>,
    %c6_223 = arith.constant 6 : index
    %c0_224 = arith.constant 0 : index
    %185 = vector.load %arg16[%c6_223, %c0_224] : memref<20x16xf32, #tpu.memory_space<vmem>>, vector<1x16xf32>
    %c0_225 = arith.constant 0 : index
    %c96 = arith.constant 96 : index
    %186 = vector.load %arg17[%c0_225, %c96] : memref<1x320xf32, #tpu.memory_space<vmem>>, vector<1x16xf32>
    tpu.vector_store %arg17[%c0_225, %c96], %185 {strides = array<i32>} : memref<1x320xf32, #tpu.memory_space<vmem>>, vector<1x16xf32>,
    %c7_226 = arith.constant 7 : index
    %c0_227 = arith.constant 0 : index
    %187 = vector.load %arg16[%c7_226, %c0_227] : memref<20x16xf32, #tpu.memory_space<vmem>>, vector<1x16xf32>
    %c0_228 = arith.constant 0 : index
    %c112_229 = arith.constant 112 : index
    %188 = vector.load %arg17[%c0_228, %c112_229] : memref<1x320xf32, #tpu.memory_space<vmem>>, vector<1x16xf32>
    tpu.vector_store %arg17[%c0_228, %c112_229], %187 {strides = array<i32>} : memref<1x320xf32, #tpu.memory_space<vmem>>, vector<1x16xf32>,
    %c8_230 = arith.constant 8 : index
    %c0_231 = arith.constant 0 : index
    %189 = vector.load %arg16[%c8_230, %c0_231] : memref<20x16xf32, #tpu.memory_space<vmem>>, vector<1x16xf32>
    %c0_232 = arith.constant 0 : index
    %c128 = arith.constant 128 : index
    %190 = vector.load %arg17[%c0_232, %c128] : memref<1x320xf32, #tpu.memory_space<vmem>>, vector<1x16xf32>
    tpu.vector_store %arg17[%c0_232, %c128], %189 {strides = array<i32>} : memref<1x320xf32, #tpu.memory_space<vmem>>, vector<1x16xf32>,
    %c9_233 = arith.constant 9 : index
    %c0_234 = arith.constant 0 : index
    %191 = vector.load %arg16[%c9_233, %c0_234] : memref<20x16xf32, #tpu.memory_space<vmem>>, vector<1x16xf32>
    %c0_235 = arith.constant 0 : index
    %c144 = arith.constant 144 : index
    %192 = vector.load %arg17[%c0_235, %c144] : memref<1x320xf32, #tpu.memory_space<vmem>>, vector<1x16xf32>
    tpu.vector_store %arg17[%c0_235, %c144], %191 {strides = array<i32>} : memref<1x320xf32, #tpu.memory_space<vmem>>, vector<1x16xf32>,
    %c10_236 = arith.constant 10 : index
    %c0_237 = arith.constant 0 : index
    %193 = vector.load %arg16[%c10_236, %c0_237] : memref<20x16xf32, #tpu.memory_space<vmem>>, vector<1x16xf32>
    %c0_238 = arith.constant 0 : index
    %c160_239 = arith.constant 160 : index
    %194 = vector.load %arg17[%c0_238, %c160_239] : memref<1x320xf32, #tpu.memory_space<vmem>>, vector<1x16xf32>
    tpu.vector_store %arg17[%c0_238, %c160_239], %193 {strides = array<i32>} : memref<1x320xf32, #tpu.memory_space<vmem>>, vector<1x16xf32>,
    %c11_240 = arith.constant 11 : index
    %c0_241 = arith.constant 0 : index
    %195 = vector.load %arg16[%c11_240, %c0_241] : memref<20x16xf32, #tpu.memory_space<vmem>>, vector<1x16xf32>
    %c0_242 = arith.constant 0 : index
    %c176 = arith.constant 176 : index
    %196 = vector.load %arg17[%c0_242, %c176] : memref<1x320xf32, #tpu.memory_space<vmem>>, vector<1x16xf32>
    tpu.vector_store %arg17[%c0_242, %c176], %195 {strides = array<i32>} : memref<1x320xf32, #tpu.memory_space<vmem>>, vector<1x16xf32>,
    %c12_243 = arith.constant 12 : index
    %c0_244 = arith.constant 0 : index
    %197 = vector.load %arg16[%c12_243, %c0_244] : memref<20x16xf32, #tpu.memory_space<vmem>>, vector<1x16xf32>
    %c0_245 = arith.constant 0 : index
    %c192 = arith.constant 192 : index
    %198 = vector.load %arg17[%c0_245, %c192] : memref<1x320xf32, #tpu.memory_space<vmem>>, vector<1x16xf32>
    tpu.vector_store %arg17[%c0_245, %c192], %197 {strides = array<i32>} : memref<1x320xf32, #tpu.memory_space<vmem>>, vector<1x16xf32>,
    %c13_246 = arith.constant 13 : index
    %c0_247 = arith.constant 0 : index
    %199 = vector.load %arg16[%c13_246, %c0_247] : memref<20x16xf32, #tpu.memory_space<vmem>>, vector<1x16xf32>
    %c0_248 = arith.constant 0 : index
    %c208 = arith.constant 208 : index
    %200 = vector.load %arg17[%c0_248, %c208] : memref<1x320xf32, #tpu.memory_space<vmem>>, vector<1x16xf32>
    tpu.vector_store %arg17[%c0_248, %c208], %199 {strides = array<i32>} : memref<1x320xf32, #tpu.memory_space<vmem>>, vector<1x16xf32>,
    %c14_249 = arith.constant 14 : index
    %c0_250 = arith.constant 0 : index
    %201 = vector.load %arg16[%c14_249, %c0_250] : memref<20x16xf32, #tpu.memory_space<vmem>>, vector<1x16xf32>
    %c0_251 = arith.constant 0 : index
    %c224 = arith.constant 224 : index
    %202 = vector.load %arg17[%c0_251, %c224] : memref<1x320xf32, #tpu.memory_space<vmem>>, vector<1x16xf32>
    tpu.vector_store %arg17[%c0_251, %c224], %201 {strides = array<i32>} : memref<1x320xf32, #tpu.memory_space<vmem>>, vector<1x16xf32>,
    %c15_252 = arith.constant 15 : index
    %c0_253 = arith.constant 0 : index
    %203 = vector.load %arg16[%c15_252, %c0_253] : memref<20x16xf32, #tpu.memory_space<vmem>>, vector<1x16xf32>
    %c0_254 = arith.constant 0 : index
    %c240_255 = arith.constant 240 : index
    %204 = vector.load %arg17[%c0_254, %c240_255] : memref<1x320xf32, #tpu.memory_space<vmem>>, vector<1x16xf32>
    tpu.vector_store %arg17[%c0_254, %c240_255], %203 {strides = array<i32>} : memref<1x320xf32, #tpu.memory_space<vmem>>, vector<1x16xf32>,
    %c16_256 = arith.constant 16 : index
    %c0_257 = arith.constant 0 : index
    %205 = vector.load %arg16[%c16_256, %c0_257] : memref<20x16xf32, #tpu.memory_space<vmem>>, vector<1x16xf32>
    %c0_258 = arith.constant 0 : index
    %c256 = arith.constant 256 : index
    %206 = vector.load %arg17[%c0_258, %c256] : memref<1x320xf32, #tpu.memory_space<vmem>>, vector<1x16xf32>
    tpu.vector_store %arg17[%c0_258, %c256], %205 {strides = array<i32>} : memref<1x320xf32, #tpu.memory_space<vmem>>, vector<1x16xf32>,
    %c17_259 = arith.constant 17 : index
    %c0_260 = arith.constant 0 : index
    %207 = vector.load %arg16[%c17_259, %c0_260] : memref<20x16xf32, #tpu.memory_space<vmem>>, vector<1x16xf32>
    %c0_261 = arith.constant 0 : index
    %c272 = arith.constant 272 : index
    %208 = vector.load %arg17[%c0_261, %c272] : memref<1x320xf32, #tpu.memory_space<vmem>>, vector<1x16xf32>
    tpu.vector_store %arg17[%c0_261, %c272], %207 {strides = array<i32>} : memref<1x320xf32, #tpu.memory_space<vmem>>, vector<1x16xf32>,
    %c18_262 = arith.constant 18 : index
    %c0_263 = arith.constant 0 : index
    %209 = vector.load %arg16[%c18_262, %c0_263] : memref<20x16xf32, #tpu.memory_space<vmem>>, vector<1x16xf32>
    %c0_264 = arith.constant 0 : index
    %c288 = arith.constant 288 : index
    %210 = vector.load %arg17[%c0_264, %c288] : memref<1x320xf32, #tpu.memory_space<vmem>>, vector<1x16xf32>
    tpu.vector_store %arg17[%c0_264, %c288], %209 {strides = array<i32>} : memref<1x320xf32, #tpu.memory_space<vmem>>, vector<1x16xf32>,
    %c19_265 = arith.constant 19 : index
    %c0_266 = arith.constant 0 : index
    %211 = vector.load %arg16[%c19_265, %c0_266] : memref<20x16xf32, #tpu.memory_space<vmem>>, vector<1x16xf32>
    %c0_267 = arith.constant 0 : index
    %c304 = arith.constant 304 : index
    %212 = vector.load %arg17[%c0_267, %c304] : memref<1x320xf32, #tpu.memory_space<vmem>>, vector<1x16xf32>
    tpu.vector_store %arg17[%c0_267, %c304], %211 {strides = array<i32>} : memref<1x320xf32, #tpu.memory_space<vmem>>, vector<1x16xf32>,
    %c0_268 = arith.constant 0 : index
    %c0_269 = arith.constant 0 : index
    %213 = vector.load %arg17[%c0_268, %c0_269] : memref<1x320xf32, #tpu.memory_space<vmem>>, vector<1x320xf32>
    %c0_270 = arith.constant 0 : index
    %c0_271 = arith.constant 0 : index
    %214 = vector.load %arg8[%c0_270, %c0_271] : memref<320x50xf32, #tpu.memory_space<vmem>>, vector<320x50xf32>
    %cst_272 = arith.constant dense<0.000000e+00> : vector<1x50xf32>
    %215 = tpu.matmul %213, %214, %cst_272 {dimension_numbers = #tpu.dot_dimension_numbers<[1], [0], [0], [1], [0, 0, 1, 1], [], []>} : vector<1x320xf32>, vector<320x50xf32>, vector<1x50xf32> -> vector<1x50xf32>
    %c0_273 = arith.constant 0 : index
    %c0_274 = arith.constant 0 : index
    %216 = vector.load %arg9[%c0_273, %c0_274] : memref<1x50xf32, #tpu.memory_space<vmem>>, vector<1x50xf32>
    %217 = arith.addf %215, %216 : vector<1x50xf32>
    %cst_275 = arith.constant 0.000000e+00 : f32
    %218 = vector.broadcast %cst_275 : f32 to vector<1x50xf32>
    %219 = arith.maximumf %217, %218 : vector<1x50xf32>
    %c0_276 = arith.constant 0 : index
    %c0_277 = arith.constant 0 : index
    %220 = vector.load %arg10[%c0_276, %c0_277] : memref<50x10xf32, #tpu.memory_space<vmem>>, vector<50x10xf32>
    %cst_278 = arith.constant dense<0.000000e+00> : vector<1x10xf32>
    %221 = tpu.matmul %219, %220, %cst_278 {dimension_numbers = #tpu.dot_dimension_numbers<[1], [0], [0], [1], [0, 0, 1, 1], [], []>} : vector<1x50xf32>, vector<50x10xf32>, vector<1x10xf32> -> vector<1x10xf32>
    %c0_279 = arith.constant 0 : index
    %c0_280 = arith.constant 0 : index
    %222 = vector.load %arg11[%c0_279, %c0_280] : memref<1x10xf32, #tpu.memory_space<vmem>>, vector<1x10xf32>
    %223 = arith.addf %221, %222 : vector<1x10xf32>
    %cst_281 = arith.constant dense<0xFF800000> : vector<1xf32>
    %224 = vector.multi_reduction <maximumf>, %223, %cst_281 [1] : vector<1x10xf32> to vector<1xf32>
    %225 = vector.shape_cast %224 : vector<1xf32> to vector<1x1xf32>
    %226 = vector.broadcast %225 : vector<1x1xf32> to vector<1x10xf32>
    %227 = arith.subf %223, %226 : vector<1x10xf32>
    %228 = math.exp %227 : vector<1x10xf32>
    %cst_282 = arith.constant dense<0.000000e+00> : vector<1xf32>
    %229 = vector.multi_reduction <add>, %228, %cst_282 [1] : vector<1x10xf32> to vector<1xf32>
    %230 = vector.shape_cast %229 : vector<1xf32> to vector<1x1xf32>
    %231 = math.log %230 : vector<1x1xf32>
    %232 = arith.addf %231, %225 : vector<1x1xf32>
    %233 = vector.broadcast %232 : vector<1x1xf32> to vector<1x10xf32>
    %234 = arith.subf %223, %233 : vector<1x10xf32>
    %c0_283 = arith.constant 0 : index
    %c0_284 = arith.constant 0 : index
    %c0_285 = arith.constant 0 : index
    %235 = vector.load %arg12[%c0_283, %c0_284, %c0_285] : memref<1x1x10xf32, #tpu.memory_space<vmem>>, vector<1x1x10xf32>
    %236 = vector.shape_cast %235 : vector<1x1x10xf32> to vector<1x10xf32>
    %237 = vector.shape_cast %234 : vector<1x10xf32> to vector<1x1x10xf32>
    tpu.vector_store %arg12[%c0_283, %c0_284, %c0_285], %237 {strides = array<i32>} : memref<1x1x10xf32, #tpu.memory_space<vmem>>, vector<1x1x10xf32>,
    return
  }
  func.func @transform_0(%arg0: i32) -> (i32, i32, i32) {
    %c0_i32 = arith.constant 0 : i32
    %c0_i32_0 = arith.constant 0 : i32
    %c0_i32_1 = arith.constant 0 : i32
    return %arg0, %c0_i32, %c0_i32_0 : i32, i32, i32
  }
  func.func @transform_1(%arg0: i32) -> (i32, i32) {
    %c0_i32 = arith.constant 0 : i32
    %c0_i32_0 = arith.constant 0 : i32
    %c0_i32_1 = arith.constant 0 : i32
    return %c0_i32, %c0_i32_0 : i32, i32
  }
  func.func @transform_2(%arg0: i32) -> (i32, i32) {
    %c0_i32 = arith.constant 0 : i32
    %c0_i32_0 = arith.constant 0 : i32
    %c0_i32_1 = arith.constant 0 : i32
    return %c0_i32, %c0_i32_0 : i32, i32
  }
  func.func @transform_3(%arg0: i32) -> (i32, i32, i32) {
    %c0_i32 = arith.constant 0 : i32
    %c0_i32_0 = arith.constant 0 : i32
    %c0_i32_1 = arith.constant 0 : i32
    %c0_i32_2 = arith.constant 0 : i32
    return %c0_i32, %c0_i32_0, %c0_i32_1 : i32, i32, i32
  }
  func.func @transform_4(%arg0: i32) -> (i32, i32) {
    %c0_i32 = arith.constant 0 : i32
    %c0_i32_0 = arith.constant 0 : i32
    %c0_i32_1 = arith.constant 0 : i32
    return %c0_i32, %c0_i32_0 : i32, i32
  }
  func.func @transform_5(%arg0: i32) -> (i32, i32) {
    %c0_i32 = arith.constant 0 : i32
    %c0_i32_0 = arith.constant 0 : i32
    %c0_i32_1 = arith.constant 0 : i32
    return %c0_i32, %c0_i32_0 : i32, i32
  }
  func.func @transform_6(%arg0: i32) -> (i32, i32, i32) {
    %c0_i32 = arith.constant 0 : i32
    %c0_i32_0 = arith.constant 0 : i32
    %c0_i32_1 = arith.constant 0 : i32
    %c0_i32_2 = arith.constant 0 : i32
    return %c0_i32, %c0_i32_0, %c0_i32_1 : i32, i32, i32
  }
  func.func @transform_7(%arg0: i32) -> (i32, i32) {
    %c0_i32 = arith.constant 0 : i32
    %c0_i32_0 = arith.constant 0 : i32
    %c0_i32_1 = arith.constant 0 : i32
    return %c0_i32, %c0_i32_0 : i32, i32
  }
  func.func @transform_8(%arg0: i32) -> (i32, i32) {
    %c0_i32 = arith.constant 0 : i32
    %c0_i32_0 = arith.constant 0 : i32
    %c0_i32_1 = arith.constant 0 : i32
    return %c0_i32, %c0_i32_0 : i32, i32
  }
  func.func @transform_9(%arg0: i32) -> (i32, i32) {
    %c0_i32 = arith.constant 0 : i32
    %c0_i32_0 = arith.constant 0 : i32
    %c0_i32_1 = arith.constant 0 : i32
    return %c0_i32, %c0_i32_0 : i32, i32
  }
  func.func @transform_10(%arg0: i32) -> (i32, i32) {
    %c0_i32 = arith.constant 0 : i32
    %c0_i32_0 = arith.constant 0 : i32
    %c0_i32_1 = arith.constant 0 : i32
    return %c0_i32, %c0_i32_0 : i32, i32
  }
  func.func @transform_11(%arg0: i32) -> (i32, i32, i32) {
    %c0_i32 = arith.constant 0 : i32
    %c0_i32_0 = arith.constant 0 : i32
    %c0_i32_1 = arith.constant 0 : i32
    return %arg0, %c0_i32, %c0_i32_0 : i32, i32, i32
  }
}

</mosaic_0001>

<llo_original>
// kernel: _forward_impl.1
$region0: #{_forward_impl.1}
  #allocation0 [shape = 'u32[]', space=smem, size = 0x4, offset = 0x4, fixed_abs, tag = 'smem constant byte address 0x4 - core index']
  #allocation1 [shape = 'u32[144,128]{1,0:T(1,128)}', space=vmem, size = 0x12000, scoped, tag = 'internal scratch']
  #allocation2 [shape = 'f32[25,668]{1,0:T(8,128)}', space=vmem, size = 0x18000, scoped, tag = 'scratch operand']
  #allocation3 [shape = 'f32[10,144]{1,0:T(8,128)}', space=vmem, size = 0x4000, scoped, tag = 'scratch operand']
  #allocation4 [shape = 'f32[250,92]{1,0:T(8,128)}', space=vmem, size = 0x20000, scoped, tag = 'scratch operand']
  #allocation5 [shape = 'f32[20,16]{1,0:T(8,128)}', space=vmem, size = 0x3000, scoped, tag = 'scratch operand']
  #allocation6 [shape = 'f32[1,320]{1,0:T(1,128)}', space=vmem, size = 0x600, scoped, tag = 'scratch operand']
  %s0 = inlined_call_operand.vmem [shape: f32[2,1,784], index: 0, kind: input, shape index: {}]
  %s1 = inlined_call_operand.hbm [shape: f32[10,25], index: 1, kind: input, shape index: {}]
  %s2 = inlined_call_operand.hbm [shape: f32[10,1], index: 2, kind: input, shape index: {}]
  %s3 = inlined_call_operand.hbm [shape: f32[4,668,144], index: 3, kind: input, shape index: {}]
  %s4 = inlined_call_operand.hbm [shape: f32[20,250], index: 4, kind: input, shape index: {}]
  %s5 = inlined_call_operand.hbm [shape: f32[20,1], index: 5, kind: input, shape index: {}]
  %s6 = inlined_call_operand.hbm [shape: f32[4,92,16], index: 6, kind: input, shape index: {}]
  %s7 = inlined_call_operand.hbm [shape: f32[320,50], index: 7, kind: input, shape index: {}]
  %s8 = inlined_call_operand.hbm [shape: f32[1,50], index: 8, kind: input, shape index: {}]
  %s9 = inlined_call_operand.hbm [shape: f32[50,10], index: 9, kind: input, shape index: {}]
  %s10 = inlined_call_operand.hbm [shape: f32[1,10], index: 10, kind: input, shape index: {}]
  %s11 = inlined_call_operand.hbm [shape: f32[2,1,10], index: 11, kind: output, shape index: {}]
  %s12 = sld [smem:[#allocation0]]
  $region117: #{_forward_impl.1} parent=0
    _
  %s14 = ssub.s32 1, %s12
  %s15 = scalar_select 0, %s14, %s12
  $region1: #{_forward_impl.1} parent=0
    #allocation7 [shape = 'u8[8192]{0}', space=vmem, size = 0x2000, scoped, tag = 'input window, operand 1, single buffered']
    #allocation8 [shape = 's32[2]{0}', space=sflag, size = 0x8, scoped, tag = 'scoped memory for _forward_impl.1']
    #allocation9 [shape = 's32[2]{0}', space=sflag, size = 0x8, scoped, tag = 'scoped memory for _forward_impl.1']
    #allocation10 [shape = 'u8[8192]{0}', space=vmem, size = 0x2000, scoped, tag = 'input window, operand 2, single buffered']
    #allocation11 [shape = 's32[1]{0}', space=sflag, size = 0x4, scoped, tag = 'scoped memory for _forward_impl.1']
    #allocation12 [shape = 'u8[2752512]{0}', space=vmem, size = 0x2a0000, scoped, tag = 'input window, operand 3, single buffered']
    #allocation13 [shape = 'u8[24576]{0}', space=vmem, size = 0x6000, scoped, tag = 'input window, operand 4, single buffered']
    #allocation14 [shape = 's32[1]{0}', space=sflag, size = 0x4, scoped, tag = 'scoped memory for _forward_impl.1']
    #allocation15 [shape = 'u8[12288]{0}', space=vmem, size = 0x3000, scoped, tag = 'input window, operand 5, single buffered']
    #allocation16 [shape = 'u8[196608]{0}', space=vmem, size = 0x30000, scoped, tag = 'input window, operand 6, single buffered']
    #allocation17 [shape = 's32[1]{0}', space=sflag, size = 0x4, scoped, tag = 'scoped memory for _forward_impl.1']
    #allocation18 [shape = 'u8[163840]{0}', space=vmem, size = 0x28000, scoped, tag = 'input window, operand 7, single buffered']
    #allocation19 [shape = 'u8[512]{0}', space=vmem, size = 0x400, scoped, tag = 'input window, operand 8, single buffered']
    #allocation20 [shape = 's32[1]{0}', space=sflag, size = 0x4, scoped, tag = 'scoped memory for _forward_impl.1']
    #allocation21 [shape = 'u8[28672]{0}', space=vmem, size = 0x7000, scoped, tag = 'input window, operand 9, single buffered']
    #allocation22 [shape = 'u8[512]{0}', space=vmem, size = 0x400, scoped, tag = 'input window, operand 10, single buffered']
    #allocation23 [shape = 's32[1]{0}', space=sflag, size = 0x4, scoped, tag = 'scoped memory for _forward_impl.1']
    #allocation24 [shape = 'u8[1024]{0}', space=vmem, size = 0x400, scoped, tag = 'output window, operand 0']
    %16 = vsyncpa [#allocation8], 0
    %17 = vsyncpa [#allocation11], 0
    %18 = vsyncpa [#allocation14], 0
    %19 = vsyncpa [#allocation17], 0
    %20 = vsyncpa [#allocation20], 0
    %21 = vsyncpa [#allocation23], 0
    %22 = vsyncpa [#allocation9], 0
    %s23 = scalar_lea.sflag [#allocation9], 1
    %24 = vsyncpa %s23, 0
    loop: start=0, step=1, limit=4
    $region2: #{_forward_impl.1} parent=1 // loop_pre_header
      _
    $region3: #{_forward_impl.1} parent=1 // loop_header
      %s26 = sphi 0, %s30
      %p27 = scmp.ge.s32.totalorder %s26, 4
      %s36 = sphi 0, %s38
      %s39 = sphi 0, %s36
      %s40 = sphi 0, %s39
      %s56 = sphi 0, %s40
      %s60 = sphi 0, %s60
      %s62 = sphi 0, %s60
      %s63 = sphi 0, %s62
      %s77 = sphi 0, %s63
      %s81 = sphi 0, %s81
      %s83 = sphi 0, %s81
      %s84 = sphi 0, %s83
      %s98 = sphi 0, %s84
      %s102 = sphi 0, %s102
      %s104 = sphi 0, %s102
      %s105 = sphi 0, %s104
      %s119 = sphi 0, %s105
      %s123 = sphi 0, %s123
      %s125 = sphi 0, %s123
      %s126 = sphi 0, %s125
      %s140 = sphi 0, %s126
      %s144 = sphi 0, %s144
      %s146 = sphi 0, %s144
      %s147 = sphi 0, %s146
      %s161 = sphi 0, %s147
      %s165 = sphi 0, %s165
      %s167 = sphi 0, %s165
      %s168 = sphi 0, %s167
      %s182 = sphi 0, %s168
      %s186 = sphi 0, %s186
      %s188 = sphi 0, %s186
      %s189 = sphi 0, %s188
      %s203 = sphi 0, %s189
      %s207 = sphi 0, %s207
      %s209 = sphi 0, %s207
      %s210 = sphi 0, %s209
      %s224 = sphi 0, %s210
      %s228 = sphi 0, %s228
      %s230 = sphi 0, %s228
      %s231 = sphi 0, %s230
      %s245 = sphi 0, %s231
      %s249 = sphi 0, %s249
      %s251 = sphi 0, %s249
      %s252 = sphi 0, %s251
      %s266 = sphi 0, %s252
      %s272 = sphi 0, %s274
      %s275 = sphi 0, %s272
      %s276 = sphi 0, %s275
      %s292 = sphi 0, %s276
    $region4: #{_forward_impl.1} parent=1 // loop_header_branch
      %29 = sbr.rel (%p27) target = $region8
    $region5: #{_forward_impl.1} parent=1 // loop_body
      %s31 = ssub.s32 %s26, 1
      %s32 = ssub.s32 %s26, 2
      %s33 = sadd.s32 %s26, 1
      %s34 = ssub.s32 %s26, %s33
      %p35 = scmp.eq.s32.totalorder %s34, 0
      %s37 = sadd.s32 %s36, 1
      %s38 = scalar_select %p35, %s36, %s37
      %p41 = pneg %p35
      %p42 = scmp.eq.s32.totalorder %s26, 1
      %p43 = por %p41, %p42
      %p44 = scmp.ne.s32.totalorder %s36, %s39
      %p45 = scmp.eq.s32.totalorder %s26, 0
      %p46 = por %p44, %p45
      %p47 = scmp.ne.s32.totalorder %s36, %s39
      %p48 = scmp.eq.s32.totalorder %s31, 1
      %p49 = por %p47, %p48
      %p50 = scmp.ne.s32.totalorder %s39, %s40
      %p51 = scmp.eq.s32.totalorder %s31, 0
      %p52 = por %p50, %p51
      %p53 = scmp.ne.s32.totalorder %s39, %s40
      %p54 = scmp.eq.s32.totalorder %s32, 1
      %p55 = por %p53, %p54
      %p57 = scmp.ne.s32.totalorder %s40, %s56
      %p58 = scmp.eq.s32.totalorder %s32, 0
      %p59 = por %p57, %p58
      %s61 = sadd.s32 %s60, 1
      %p64 = scmp.eq.s32.totalorder %s26, 1
      %p65 = scmp.ne.s32.totalorder %s60, %s62
      %p66 = scmp.eq.s32.totalorder %s26, 0
      %p67 = por %p65, %p66
      %p68 = scmp.ne.s32.totalorder %s60, %s62
      %p69 = scmp.eq.s32.totalorder %s31, 1
      %p70 = por %p68, %p69
      %p71 = scmp.ne.s32.totalorder %s62, %s63
      %p72 = scmp.eq.s32.totalorder %s31, 0
      %p73 = por %p71, %p72
      %p74 = scmp.ne.s32.totalorder %s62, %s63
      %p75 = scmp.eq.s32.totalorder %s32, 1
      %p76 = por %p74, %p75
      %p78 = scmp.ne.s32.totalorder %s63, %s77
      %p79 = scmp.eq.s32.totalorder %s32, 0
      %p80 = por %p78, %p79
      %s82 = sadd.s32 %s81, 1
      %p85 = scmp.eq.s32.totalorder %s26, 1
      %p86 = scmp.ne.s32.totalorder %s81, %s83
      %p87 = scmp.eq.s32.totalorder %s26, 0
      %p88 = por %p86, %p87
      %p89 = scmp.ne.s32.totalorder %s81, %s83
      %p90 = scmp.eq.s32.totalorder %s31, 1
      %p91 = por %p89, %p90
      %p92 = scmp.ne.s32.totalorder %s83, %s84
      %p93 = scmp.eq.s32.totalorder %s31, 0
      %p94 = por %p92, %p93
      %p95 = scmp.ne.s32.totalorder %s83, %s84
      %p96 = scmp.eq.s32.totalorder %s32, 1
      %p97 = por %p95, %p96
      %p99 = scmp.ne.s32.totalorder %s84, %s98
      %p100 = scmp.eq.s32.totalorder %s32, 0
      %p101 = por %p99, %p100
      %s103 = sadd.s32 %s102, 1
      %p106 = scmp.eq.s32.totalorder %s26, 1
      %p107 = scmp.ne.s32.totalorder %s102, %s104
      %p108 = scmp.eq.s32.totalorder %s26, 0
      %p109 = por %p107, %p108
      %p110 = scmp.ne.s32.totalorder %s102, %s104
      %p111 = scmp.eq.s32.totalorder %s31, 1
      %p112 = por %p110, %p111
      %p113 = scmp.ne.s32.totalorder %s104, %s105
      %p114 = scmp.eq.s32.totalorder %s31, 0
      %p115 = por %p113, %p114
      %p116 = scmp.ne.s32.totalorder %s104, %s105
      %p117 = scmp.eq.s32.totalorder %s32, 1
      %p118 = por %p116, %p117
      %p120 = scmp.ne.s32.totalorder %s105, %s119
      %p121 = scmp.eq.s32.totalorder %s32, 0
      %p122 = por %p120, %p121
      %s124 = sadd.s32 %s123, 1
      %p127 = scmp.eq.s32.totalorder %s26, 1
      %p128 = scmp.ne.s32.totalorder %s123, %s125
      %p129 = scmp.eq.s32.totalorder %s26, 0
      %p130 = por %p128, %p129
      %p131 = scmp.ne.s32.totalorder %s123, %s125
      %p132 = scmp.eq.s32.totalorder %s31, 1
      %p133 = por %p131, %p132
      %p134 = scmp.ne.s32.totalorder %s125, %s126
      %p135 = scmp.eq.s32.totalorder %s31, 0
      %p136 = por %p134, %p135
      %p137 = scmp.ne.s32.totalorder %s125, %s126
      %p138 = scmp.eq.s32.totalorder %s32, 1
      %p139 = por %p137, %p138
      %p141 = scmp.ne.s32.totalorder %s126, %s140
      %p142 = scmp.eq.s32.totalorder %s32, 0
      %p143 = por %p141, %p142
      %s145 = sadd.s32 %s144, 1
      %p148 = scmp.eq.s32.totalorder %s26, 1
      %p149 = scmp.ne.s32.totalorder %s144, %s146
      %p150 = scmp.eq.s32.totalorder %s26, 0
      %p151 = por %p149, %p150
      %p152 = scmp.ne.s32.totalorder %s144, %s146
      %p153 = scmp.eq.s32.totalorder %s31, 1
      %p154 = por %p152, %p153
      %p155 = scmp.ne.s32.totalorder %s146, %s147
      %p156 = scmp.eq.s32.totalorder %s31, 0
      %p157 = por %p155, %p156
      %p158 = scmp.ne.s32.totalorder %s146, %s147
      %p159 = scmp.eq.s32.totalorder %s32, 1
      %p160 = por %p158, %p159
      %p162 = scmp.ne.s32.totalorder %s147, %s161
      %p163 = scmp.eq.s32.totalorder %s32, 0
      %p164 = por %p162, %p163
      %s166 = sadd.s32 %s165, 1
      %p169 = scmp.eq.s32.totalorder %s26, 1
      %p170 = scmp.ne.s32.totalorder %s165, %s167
      %p171 = scmp.eq.s32.totalorder %s26, 0
      %p172 = por %p170, %p171
      %p173 = scmp.ne.s32.totalorder %s165, %s167
      %p174 = scmp.eq.s32.totalorder %s31, 1
      %p175 = por %p173, %p174
      %p176 = scmp.ne.s32.totalorder %s167, %s168
      %p177 = scmp.eq.s32.totalorder %s31, 0
      %p178 = por %p176, %p177
      %p179 = scmp.ne.s32.totalorder %s167, %s168
      %p180 = scmp.eq.s32.totalorder %s32, 1
      %p181 = por %p179, %p180
      %p183 = scmp.ne.s32.totalorder %s168, %s182
      %p184 = scmp.eq.s32.totalorder %s32, 0
      %p185 = por %p183, %p184
      %s187 = sadd.s32 %s186, 1
      %p190 = scmp.eq.s32.totalorder %s26, 1
      %p191 = scmp.ne.s32.totalorder %s186, %s188
      %p192 = scmp.eq.s32.totalorder %s26, 0
      %p193 = por %p191, %p192
      %p194 = scmp.ne.s32.totalorder %s186, %s188
      %p195 = scmp.eq.s32.totalorder %s31, 1
      %p196 = por %p194, %p195
      %p197 = scmp.ne.s32.totalorder %s188, %s189
      %p198 = scmp.eq.s32.totalorder %s31, 0
      %p199 = por %p197, %p198
      %p200 = scmp.ne.s32.totalorder %s188, %s189
      %p201 = scmp.eq.s32.totalorder %s32, 1
      %p202 = por %p200, %p201
      %p204 = scmp.ne.s32.totalorder %s189, %s203
      %p205 = scmp.eq.s32.totalorder %s32, 0
      %p206 = por %p204, %p205
      %s208 = sadd.s32 %s207, 1
      %p211 = scmp.eq.s32.totalorder %s26, 1
      %p212 = scmp.ne.s32.totalorder %s207, %s209
      %p213 = scmp.eq.s32.totalorder %s26, 0
      %p214 = por %p212, %p213
      %p215 = scmp.ne.s32.totalorder %s207, %s209
      %p216 = scmp.eq.s32.totalorder %s31, 1
      %p217 = por %p215, %p216
      %p218 = scmp.ne.s32.totalorder %s209, %s210
      %p219 = scmp.eq.s32.totalorder %s31, 0
      %p220 = por %p218, %p219
      %p221 = scmp.ne.s32.totalorder %s209, %s210
      %p222 = scmp.eq.s32.totalorder %s32, 1
      %p223 = por %p221, %p222
      %p225 = scmp.ne.s32.totalorder %s210, %s224
      %p226 = scmp.eq.s32.totalorder %s32, 0
      %p227 = por %p225, %p226
      %s229 = sadd.s32 %s228, 1
      %p232 = scmp.eq.s32.totalorder %s26, 1
      %p233 = scmp.ne.s32.totalorder %s228, %s230
      %p234 = scmp.eq.s32.totalorder %s26, 0
      %p235 = por %p233, %p234
      %p236 = scmp.ne.s32.totalorder %s228, %s230
      %p237 = scmp.eq.s32.totalorder %s31, 1
      %p238 = por %p236, %p237
      %p239 = scmp.ne.s32.totalorder %s230, %s231
      %p240 = scmp.eq.s32.totalorder %s31, 0
      %p241 = por %p239, %p240
      %p242 = scmp.ne.s32.totalorder %s230, %s231
      %p243 = scmp.eq.s32.totalorder %s32, 1
      %p244 = por %p242, %p243
      %p246 = scmp.ne.s32.totalorder %s231, %s245
      %p247 = scmp.eq.s32.totalorder %s32, 0
      %p248 = por %p246, %p247
      %s250 = sadd.s32 %s249, 1
      %p253 = scmp.eq.s32.totalorder %s26, 1
      %p254 = scmp.ne.s32.totalorder %s249, %s251
      %p255 = scmp.eq.s32.totalorder %s26, 0
      %p256 = por %p254, %p255
      %p257 = scmp.ne.s32.totalorder %s249, %s251
      %p258 = scmp.eq.s32.totalorder %s31, 1
      %p259 = por %p257, %p258
      %p260 = scmp.ne.s32.totalorder %s251, %s252
      %p261 = scmp.eq.s32.totalorder %s31, 0
      %p262 = por %p260, %p261
      %p263 = scmp.ne.s32.totalorder %s251, %s252
      %p264 = scmp.eq.s32.totalorder %s32, 1
      %p265 = por %p263, %p264
      %p267 = scmp.ne.s32.totalorder %s252, %s266
      %p268 = scmp.eq.s32.totalorder %s32, 0
      %p269 = por %p267, %p268
      %s270 = ssub.s32 %s26, %s33
      %p271 = scmp.eq.s32.totalorder %s270, 0
      %s273 = sadd.s32 %s272, 1
      %s274 = scalar_select %p271, %s272, %s273
      %p277 = pneg %p271
      %p278 = scmp.eq.s32.totalorder %s26, 1
      %p279 = por %p277, %p278
      %p280 = scmp.ne.s32.totalorder %s272, %s275
      %p281 = scmp.eq.s32.totalorder %s26, 0
      %p282 = por %p280, %p281
      %p283 = scmp.ne.s32.totalorder %s272, %s275
      %p284 = scmp.eq.s32.totalorder %s31, 1
      %p285 = por %p283, %p284
      %p286 = scmp.ne.s32.totalorder %s275, %s276
      %p287 = scmp.eq.s32.totalorder %s31, 0
      %p288 = por %p286, %p287
      %p289 = scmp.ne.s32.totalorder %s275, %s276
      %p290 = scmp.eq.s32.totalorder %s32, 1
      %p291 = por %p289, %p290
      %p293 = scmp.ne.s32.totalorder %s276, %s292
      %p294 = scmp.eq.s32.totalorder %s32, 0
      %p295 = por %p293, %p294
      %p296 = scmp.le.s32.totalorder 1, %s26
      %p297 = scmp.lt.s32.totalorder %s26, 3
      %p298 = pnand %p296, %p297
      %p299 = pneg %p298
      // Predicated region
      $region9: #{_forward_impl.1} parent=5 // pred_check
        _
      $region10: #{_forward_impl.1} parent=5 // pred_check_branch
        %301 = sbr.rel (%p298) target = $region12
      $region11: #{_forward_impl.1} parent=5 // pred_region
        %s302 = ssub.s32 %s26, 1
        // Predicated region
        $region13: #{_forward_impl.1} parent=11 // pred_check
          %p303 = pneg %p73
        $region14: #{_forward_impl.1} parent=11 // pred_check_branch
          %305 = sbr.rel (%p303) target = $region16
        $region15: #{_forward_impl.1} parent=11 // pred_region
          %s307 = ssub.s32 256, 256
          %308 = vsyncadd [#allocation8], %s307
          %s309 = sshll.u32 [#allocation7], 4
          %s310 = int_to_ptr.vmem [resolvable:$true] %s309
          %315 = dma.hbm_to_vmem [thread:$0]  %s1, 256, %s310, [#allocation8], 128, 128, 8
        $region16: #{_forward_impl.1} parent=11 // pred_fallthru
          _
        // Predicated region
        $region17: #{_forward_impl.1} parent=11 // pred_check
          %p316 = pneg %p94
        $region18: #{_forward_impl.1} parent=11 // pred_check_branch
          %318 = sbr.rel (%p316) target = $region20
        $region19: #{_forward_impl.1} parent=11 // pred_region
          %s320 = ssub.s32 256, 256
          %321 = vsyncadd [#allocation11], %s320
          %s322 = sshll.u32 [#allocation10], 4
          %s323 = int_to_ptr.vmem [resolvable:$true] %s322
          %328 = dma.hbm_to_vmem [thread:$0]  %s2, 256, %s323, [#allocation11], 128, 128, 8
        $region20: #{_forward_impl.1} parent=11 // pred_fallthru
          _
        // Predicated region
        $region21: #{_forward_impl.1} parent=11 // pred_check
          %p329 = pneg %p115
        $region22: #{_forward_impl.1} parent=11 // pred_check_branch
          %331 = sbr.rel (%p329) target = $region24
        $region23: #{_forward_impl.1} parent=11 // pred_region
          %s333 = ssub.s32 86016, 86016
          %334 = vsyncadd [#allocation11], %s333
          %s335 = sshll.u32 [#allocation12], 4
          %s336 = int_to_ptr.vmem [resolvable:$true] %s335
          %341 = dma.hbm_to_vmem [thread:$0]  %s3, 86016, %s336, [#allocation11], 256, 256, 16
        $region24: #{_forward_impl.1} parent=11 // pred_fallthru
          _
        // Predicated region
        $region25: #{_forward_impl.1} parent=11 // pred_check
          %p342 = pneg %p136
        $region26: #{_forward_impl.1} parent=11 // pred_check_branch
          %344 = sbr.rel (%p342) target = $region28
        $region27: #{_forward_impl.1} parent=11 // pred_region
          %s346 = ssub.s32 768, 768
          %347 = vsyncadd [#allocation14], %s346
          %s348 = sshll.u32 [#allocation13], 4
          %s349 = int_to_ptr.vmem [resolvable:$true] %s348
          %354 = dma.hbm_to_vmem [thread:$0]  %s4, 768, %s349, [#allocation14], 256, 256, 16
        $region28: #{_forward_impl.1} parent=11 // pred_fallthru
          _
        // Predicated region
        $region29: #{_forward_impl.1} parent=11 // pred_check
          %p355 = pneg %p157
        $region30: #{_forward_impl.1} parent=11 // pred_check_branch
          %357 = sbr.rel (%p355) target = $region32
        $region31: #{_forward_impl.1} parent=11 // pred_region
          %s359 = ssub.s32 384, 384
          %360 = vsyncadd [#allocation14], %s359
          %s361 = sshll.u32 [#allocation15], 4
          %s362 = int_to_ptr.vmem [resolvable:$true] %s361
          %367 = dma.hbm_to_vmem [thread:$0]  %s5, 384, %s362, [#allocation14], 128, 128, 8
        $region32: #{_forward_impl.1} parent=11 // pred_fallthru
          _
        // Predicated region
        $region33: #{_forward_impl.1} parent=11 // pred_check
          %p368 = pneg %p178
        $region34: #{_forward_impl.1} parent=11 // pred_check_branch
          %370 = sbr.rel (%p368) target = $region36
        $region35: #{_forward_impl.1} parent=11 // pred_region
          %s372 = ssub.s32 6144, 6144
          %373 = vsyncadd [#allocation17], %s372
          %s374 = sshll.u32 [#allocation16], 4
          %s375 = int_to_ptr.vmem [resolvable:$true] %s374
          %380 = dma.hbm_to_vmem [thread:$0]  %s6, 6144, %s375, [#allocation17], 128, 128, 8
        $region36: #{_forward_impl.1} parent=11 // pred_fallthru
          _
        // Predicated region
        $region37: #{_forward_impl.1} parent=11 // pred_check
          %p381 = pneg %p199
        $region38: #{_forward_impl.1} parent=11 // pred_check_branch
          %383 = sbr.rel (%p381) target = $region40
        $region39: #{_forward_impl.1} parent=11 // pred_region
          %s385 = ssub.s32 5120, 5120
          %386 = vsyncadd [#allocation17], %s385
          %s387 = sshll.u32 [#allocation18], 4
          %s388 = int_to_ptr.vmem [resolvable:$true] %s387
          %393 = dma.hbm_to_vmem [thread:$0]  %s7, 5120, %s388, [#allocation17], 128, 128, 8
        $region40: #{_forward_impl.1} parent=11 // pred_fallthru
          _
        // Predicated region
        $region41: #{_forward_impl.1} parent=11 // pred_check
          %p394 = pneg %p220
        $region42: #{_forward_impl.1} parent=11 // pred_check_branch
          %396 = sbr.rel (%p394) target = $region44
        $region43: #{_forward_impl.1} parent=11 // pred_region
          %s398 = ssub.s32 16, 16
          %399 = vsyncadd [#allocation20], %s398
          %s401 = sshll.u32 [#allocation19], 4
          %s402 = int_to_ptr.vmem [resolvable:$true] %s401
          %404 = dma.hbm_to_vmem [thread:$0]  %s8, 16, %s402, [#allocation20]
        $region44: #{_forward_impl.1} parent=11 // pred_fallthru
          _
        // Predicated region
        $region45: #{_forward_impl.1} parent=11 // pred_check
          %p405 = pneg %p241
        $region46: #{_forward_impl.1} parent=11 // pred_check_branch
          %407 = sbr.rel (%p405) target = $region48
        $region47: #{_forward_impl.1} parent=11 // pred_region
          %s409 = ssub.s32 896, 896
          %410 = vsyncadd [#allocation20], %s409
          %s411 = sshll.u32 [#allocation21], 4
          %s412 = int_to_ptr.vmem [resolvable:$true] %s411
          %417 = dma.hbm_to_vmem [thread:$0]  %s9, 896, %s412, [#allocation20], 128, 128, 8
        $region48: #{_forward_impl.1} parent=11 // pred_fallthru
          _
        // Predicated region
        $region49: #{_forward_impl.1} parent=11 // pred_check
          %p418 = pneg %p262
        $region50: #{_forward_impl.1} parent=11 // pred_check_branch
          %420 = sbr.rel (%p418) target = $region52
        $region51: #{_forward_impl.1} parent=11 // pred_region
          %s422 = ssub.s32 16, 16
          %423 = vsyncadd [#allocation23], %s422
          %s425 = sshll.u32 [#allocation22], 4
          %s426 = int_to_ptr.vmem [resolvable:$true] %s425
          %428 = dma.hbm_to_vmem [thread:$0]  %s10, 16, %s426, [#allocation23]
        $region52: #{_forward_impl.1} parent=11 // pred_fallthru
          _
      $region12: #{_forward_impl.1} parent=5 // pred_fallthru
        _
      %p429 = scmp.lt.s32.totalorder %s26, 2
      // Predicated region
      $region53: #{_forward_impl.1} parent=5 // pred_check
        %p430 = pneg %p429
      $region54: #{_forward_impl.1} parent=5 // pred_check_branch
        %432 = sbr.rel (%p430) target = $region56
      $region55: #{_forward_impl.1} parent=5 // pred_region
        // Predicated region
        $region57: #{_forward_impl.1} parent=55 // pred_check
          %p433 = pneg %p46
        $region58: #{_forward_impl.1} parent=55 // pred_check_branch
          %435 = sbr.rel (%p433) target = $region60
        $region59: #{_forward_impl.1} parent=55 // pred_region
          %p436 = scmp.lt.s32.totalorder %s26, 1
          %s437 = scalar_select %p436, %s26, 1
          %s438 = smul.addr %s437, 7
          %s439 = scalar_lea.vmem %s0, %s438
        $region60: #{_forward_impl.1} parent=55 // pred_fallthru
          _
      $region56: #{_forward_impl.1} parent=5 // pred_fallthru
        _
      %p440 = scmp.le.s32.totalorder 1, %s26
      %p441 = scmp.lt.s32.totalorder %s26, 3
      %p442 = pnand %p440, %p441
      %p443 = pneg %p442
      // Predicated region
      $region61: #{_forward_impl.1} parent=5 // pred_check
        _
      $region62: #{_forward_impl.1} parent=5 // pred_check_branch
        %445 = sbr.rel (%p442) target = $region64
      $region63: #{_forward_impl.1} parent=5 // pred_region
        %s446 = ssub.s32 %s26, 1
        // Predicated region
        $region65: #{_forward_impl.1} parent=63 // pred_check
          %p447 = pneg %p73
        $region66: #{_forward_impl.1} parent=63 // pred_check_branch
          %449 = sbr.rel (%p447) target = $region68
        $region67: #{_forward_impl.1} parent=63 // pred_region
          %450 = dma.done [#allocation8], 256
        $region68: #{_forward_impl.1} parent=63 // pred_fallthru
          _
        // Predicated region
        $region69: #{_forward_impl.1} parent=63 // pred_check
          %p451 = pneg %p94
        $region70: #{_forward_impl.1} parent=63 // pred_check_branch
          %453 = sbr.rel (%p451) target = $region72
        $region71: #{_forward_impl.1} parent=63 // pred_region
          %454 = dma.done [#allocation11], 256
        $region72: #{_forward_impl.1} parent=63 // pred_fallthru
          _
        // Predicated region
        $region73: #{_forward_impl.1} parent=63 // pred_check
          %p455 = pneg %p115
        $region74: #{_forward_impl.1} parent=63 // pred_check_branch
          %457 = sbr.rel (%p455) target = $region76
        $region75: #{_forward_impl.1} parent=63 // pred_region
          %458 = dma.done [#allocation11], 86016
        $region76: #{_forward_impl.1} parent=63 // pred_fallthru
          _
        // Predicated region
        $region77: #{_forward_impl.1} parent=63 // pred_check
          %p459 = pneg %p136
        $region78: #{_forward_impl.1} parent=63 // pred_check_branch
          %461 = sbr.rel (%p459) target = $region80
        $region79: #{_forward_impl.1} parent=63 // pred_region
          %462 = dma.done [#allocation14], 768
        $region80: #{_forward_impl.1} parent=63 // pred_fallthru
          _
        // Predicated region
        $region81: #{_forward_impl.1} parent=63 // pred_check
          %p463 = pneg %p157
        $region82: #{_forward_impl.1} parent=63 // pred_check_branch
          %465 = sbr.rel (%p463) target = $region84
        $region83: #{_forward_impl.1} parent=63 // pred_region
          %466 = dma.done [#allocation14], 384
        $region84: #{_forward_impl.1} parent=63 // pred_fallthru
          _
        // Predicated region
        $region85: #{_forward_impl.1} parent=63 // pred_check
          %p467 = pneg %p178
        $region86: #{_forward_impl.1} parent=63 // pred_check_branch
          %469 = sbr.rel (%p467) target = $region88
        $region87: #{_forward_impl.1} parent=63 // pred_region
          %470 = dma.done [#allocation17], 6144
        $region88: #{_forward_impl.1} parent=63 // pred_fallthru
          _
        // Predicated region
        $region89: #{_forward_impl.1} parent=63 // pred_check
          %p471 = pneg %p199
        $region90: #{_forward_impl.1} parent=63 // pred_check_branch
          %473 = sbr.rel (%p471) target = $region92
        $region91: #{_forward_impl.1} parent=63 // pred_region
          %474 = dma.done [#allocation17], 5120
        $region92: #{_forward_impl.1} parent=63 // pred_fallthru
          _
        // Predicated region
        $region93: #{_forward_impl.1} parent=63 // pred_check
          %p475 = pneg %p220
        $region94: #{_forward_impl.1} parent=63 // pred_check_branch
          %477 = sbr.rel (%p475) target = $region96
        $region95: #{_forward_impl.1} parent=63 // pred_region
          %478 = dma.done [#allocation20], 16
        $region96: #{_forward_impl.1} parent=63 // pred_fallthru
          _
        // Predicated region
        $region97: #{_forward_impl.1} parent=63 // pred_check
          %p479 = pneg %p241
        $region98: #{_forward_impl.1} parent=63 // pred_check_branch
          %481 = sbr.rel (%p479) target = $region100
        $region99: #{_forward_impl.1} parent=63 // pred_region
          %482 = dma.done [#allocation20], 896
        $region100: #{_forward_impl.1} parent=63 // pred_fallthru
          _
        // Predicated region
        $region101: #{_forward_impl.1} parent=63 // pred_check
          %p483 = pneg %p262
        $region102: #{_forward_impl.1} parent=63 // pred_check_branch
          %485 = sbr.rel (%p483) target = $region104
        $region103: #{_forward_impl.1} parent=63 // pred_region
          %486 = dma.done [#allocation23], 16
        $region104: #{_forward_impl.1} parent=63 // pred_fallthru
          _
        %p487 = scmp.lt.s32.totalorder %s31, 1
        %s488 = scalar_select %p487, %s31, 1
        %s489 = smul.addr %s488, 7
        %s490 = scalar_lea.vmem %s0, %s489
        %p491 = pneg %p52
        %p492 = pneg %p49
        %p493 = pneg %p73
        %p494 = pneg %p70
        %p495 = pneg %p94
        %p496 = pneg %p91
        %p497 = pneg %p115
        %p498 = pneg %p112
        %p499 = pneg %p136
        %p500 = pneg %p133
        %p501 = pneg %p157
        %p502 = pneg %p154
        %p503 = pneg %p178
        %p504 = pneg %p175
        %p505 = pneg %p199
        %p506 = pneg %p196
        %p507 = pneg %p220
        %p508 = pneg %p217
        %p509 = pneg %p241
        %p510 = pneg %p238
        %p511 = pneg %p262
        %p512 = pneg %p259
        %p513 = pneg %p288
        %p514 = pneg %p285
        %s515 = sand.u32 %s275, 1
        %s516 = scalar_lea.sflag [#allocation9], %s515
        %s517 = sand.u32 %s275, 1
        %s518 = scalar_lea.vmem [#allocation24], %s517
        %p519 = scmp.lt.s32.totalorder %s31, 1
        %s520 = scalar_select %p519, %s31, 1
        %s521 = smul.addr %s520, 7
        %s522 = scalar_lea.vmem %s0, %s521
        %v523 = vld [vmem:[%s522] sm:$0x3f]
        %v524 = vlaneseq
        %vm525 = vcmp.ge.s32.totalorder %v524, 0
        %vm526 = vcmp.lt.s32.totalorder %v524, 668
        %vm527 = vmand %vm525, %vm526
        %528 = vst.msk [vmem:[#allocation2] ss:$8 sm:$0xf] %vm527, %v523
        %529 = vst.msk [vmem:[#allocation2] ss:$8 sm:$0x30] %vm527, %v523
        %v530 = vld [vmem:[%s522] sm:$0x3f]
        %532 = vrot.lane.b32.xlu0 %v530, 127
        %v533 = vpop.permute.xlu0 %532
        %v534 = vrot.slane %v533, 1
        %vm535 = vcmask 1039360
        %v536 = vsel %vm535, %v533, %v534
        %s538 = scalar_lea.vmem [#allocation2], 1
        %539 = vst.msk [vmem:[%s538] ss:$8 sm:$0xf] %vm527, %v536
        %540 = vst.msk [vmem:[%s538] ss:$8 sm:$0x30] %vm527, %v536
        %v541 = vld [vmem:[%s522] sm:$0x3f]
        %543 = vrot.lane.b32.xlu0 %v541, 126
        %v544 = vpop.permute.xlu0 %543
        %v545 = vrot.slane %v544, 1
        %vm546 = vcmask 1031168
        %v547 = vsel %vm546, %v544, %v545
        %s549 = scalar_lea.vmem [#allocation2], 2
        %550 = vst.msk [vmem:[%s549] ss:$8 sm:$0xf] %vm527, %v547
        %551 = vst.msk [vmem:[%s549] ss:$8 sm:$0x30] %vm527, %v547
        %v552 = vld [vmem:[%s522] sm:$0x3f]
        %554 = vrot.lane.b32.xlu0 %v552, 125
        %v555 = vpop.permute.xlu0 %554
        %v556 = vrot.slane %v555, 1
        %vm557 = vcmask 1022976
        %v558 = vsel %vm557, %v555, %v556
        %s560 = scalar_lea.vmem [#allocation2], 3
        %561 = vst.msk [vmem:[%s560] ss:$8 sm:$0xf] %vm527, %v558
        %562 = vst.msk [vmem:[%s560] ss:$8 sm:$0x30] %vm527, %v558
        %v563 = vld [vmem:[%s522] sm:$0x3f]
        %565 = vrot.lane.b32.xlu0 %v563, 124
        %v566 = vpop.permute.xlu0 %565
        %v567 = vrot.slane %v566, 1
        %vm568 = vcmask 1014784
        %v569 = vsel %vm568, %v566, %v567
        %s571 = scalar_lea.vmem [#allocation2], 4
        %572 = vst.msk [vmem:[%s571] ss:$8 sm:$0xf] %vm527, %v569
        %573 = vst.msk [vmem:[%s571] ss:$8 sm:$0x30] %vm527, %v569
        %v574 = vld [vmem:[%s522] sm:$0x3f]
        %576 = vrot.lane.b32.xlu0 %v574, 100
        %v577 = vpop.permute.xlu0 %576
        %v578 = vrot.slane %v577, 1
        %vm579 = vcmask 818176
        %v580 = vsel %vm579, %v577, %v578
        %s582 = scalar_lea.vmem [#allocation2], 5
        %583 = vst.msk [vmem:[%s582] ss:$8 sm:$0xf] %vm527, %v580
        %584 = vst.msk [vmem:[%s582] ss:$8 sm:$0x30] %vm527, %v580
        %v585 = vld [vmem:[%s522] sm:$0x3f]
        %587 = vrot.lane.b32.xlu0 %v585, 99
        %v588 = vpop.permute.xlu0 %587
        %v589 = vrot.slane %v588, 1
        %vm590 = vcmask 809984
        %v591 = vsel %vm590, %v588, %v589
        %s593 = scalar_lea.vmem [#allocation2], 6
        %594 = vst.msk [vmem:[%s593] ss:$8 sm:$0xf] %vm527, %v591
        %595 = vst.msk [vmem:[%s593] ss:$8 sm:$0x30] %vm527, %v591
        %v596 = vld [vmem:[%s522] sm:$0x3f]
        %598 = vrot.lane.b32.xlu0 %v596, 98
        %v599 = vpop.permute.xlu0 %598
        %v600 = vrot.slane %v599, 1
        %vm601 = vcmask 801792
        %v602 = vsel %vm601, %v599, %v600
        %s604 = scalar_lea.vmem [#allocation2], 7
        %605 = vst.msk [vmem:[%s604] ss:$8 sm:$0xf] %vm527, %v602
        %606 = vst.msk [vmem:[%s604] ss:$8 sm:$0x30] %vm527, %v602
        %v607 = vld [vmem:[%s522] sm:$0x3f]
        %609 = vrot.lane.b32.xlu0 %v607, 97
        %v610 = vpop.permute.xlu0 %609
        %v611 = vrot.slane %v610, 1
        %vm612 = vcmask 793600
        %v613 = vsel %vm612, %v610, %v611
        %s615 = scalar_lea.vmem [#allocation2], 48
        %616 = vst.msk [vmem:[%s615] ss:$8 sm:$0xf] %vm527, %v613
        %617 = vst.msk [vmem:[%s615] ss:$8 sm:$0x30] %vm527, %v613
        %v618 = vld [vmem:[%s522] sm:$0x3f]
        %620 = vrot.lane.b32.xlu0 %v618, 96
        %v621 = vpop.permute.xlu0 %620
        %v622 = vrot.slane %v621, 1
        %vm623 = vcmask 785408
        %v624 = vsel %vm623, %v621, %v622
        %s626 = scalar_lea.vmem [#allocation2], 49
        %627 = vst.msk [vmem:[%s626] ss:$8 sm:$0xf] %vm527, %v624
        %628 = vst.msk [vmem:[%s626] ss:$8 sm:$0x30] %vm527, %v624
        %v629 = vld [vmem:[%s522] sm:$0x3f]
        %631 = vrot.lane.b32.xlu0 %v629, 72
        %v632 = vpop.permute.xlu0 %631
        %v633 = vrot.slane %v632, 1
        %vm634 = vcmask 588800
        %v635 = vsel %vm634, %v632, %v633
        %s637 = scalar_lea.vmem [#allocation2], 50
        %638 = vst.msk [vmem:[%s637] ss:$8 sm:$0xf] %vm527, %v635
        %639 = vst.msk [vmem:[%s637] ss:$8 sm:$0x30] %vm527, %v635
        %v640 = vld [vmem:[%s522] sm:$0x3f]
        %642 = vrot.lane.b32.xlu0 %v640, 71
        %v643 = vpop.permute.xlu0 %642
        %v644 = vrot.slane %v643, 1
        %vm645 = vcmask 580608
        %v646 = vsel %vm645, %v643, %v644
        %s648 = scalar_lea.vmem [#allocation2], 51
        %649 = vst.msk [vmem:[%s648] ss:$8 sm:$0xf] %vm527, %v646
        %650 = vst.msk [vmem:[%s648] ss:$8 sm:$0x30] %vm527, %v646
        %v651 = vld [vmem:[%s522] sm:$0x3f]
        %653 = vrot.lane.b32.xlu0 %v651, 70
        %v654 = vpop.permute.xlu0 %653
        %v655 = vrot.slane %v654, 1
        %vm656 = vcmask 572416
        %v657 = vsel %vm656, %v654, %v655
        %s659 = scalar_lea.vmem [#allocation2], 52
        %660 = vst.msk [vmem:[%s659] ss:$8 sm:$0xf] %vm527, %v657
        %661 = vst.msk [vmem:[%s659] ss:$8 sm:$0x30] %vm527, %v657
        %v662 = vld [vmem:[%s522] sm:$0x3f]
        %664 = vrot.lane.b32.xlu0 %v662, 69
        %v665 = vpop.permute.xlu0 %664
        %v666 = vrot.slane %v665, 1
        %vm667 = vcmask 564224
        %v668 = vsel %vm667, %v665, %v666
        %s670 = scalar_lea.vmem [#allocation2], 53
        %671 = vst.msk [vmem:[%s670] ss:$8 sm:$0xf] %vm527, %v668
        %672 = vst.msk [vmem:[%s670] ss:$8 sm:$0x30] %vm527, %v668
        %v673 = vld [vmem:[%s522] sm:$0x3f]
        %675 = vrot.lane.b32.xlu0 %v673, 68
        %v676 = vpop.permute.xlu0 %675
        %v677 = vrot.slane %v676, 1
        %vm678 = vcmask 556032
        %v679 = vsel %vm678, %v676, %v677
        %s681 = scalar_lea.vmem [#allocation2], 54
        %682 = vst.msk [vmem:[%s681] ss:$8 sm:$0xf] %vm527, %v679
        %683 = vst.msk [vmem:[%s681] ss:$8 sm:$0x30] %vm527, %v679
        %v684 = vld [vmem:[%s522] sm:$0x3f]
        %686 = vrot.lane.b32.xlu0 %v684, 44
        %v687 = vpop.permute.xlu0 %686
        %v688 = vrot.slane %v687, 1
        %vm689 = vcmask 359424
        %v690 = vsel %vm689, %v687, %v688
        %s692 = scalar_lea.vmem [#allocation2], 55
        %693 = vst.msk [vmem:[%s692] ss:$8 sm:$0xf] %vm527, %v690
        %694 = vst.msk [vmem:[%s692] ss:$8 sm:$0x30] %vm527, %v690
        %v695 = vld [vmem:[%s522] sm:$0x3f]
        %697 = vrot.lane.b32.xlu0 %v695, 43
        %v698 = vpop.permute.xlu0 %697
        %v699 = vrot.slane %v698, 1
        %vm700 = vcmask 351232
        %v701 = vsel %vm700, %v698, %v699
        %s703 = scalar_lea.vmem [#allocation2], 96
        %704 = vst.msk [vmem:[%s703] ss:$8 sm:$0xf] %vm527, %v701
        %705 = vst.msk [vmem:[%s703] ss:$8 sm:$0x30] %vm527, %v701
        %v706 = vld [vmem:[%s522] sm:$0x3f]
        %708 = vrot.lane.b32.xlu0 %v706, 42
        %v709 = vpop.permute.xlu0 %708
        %v710 = vrot.slane %v709, 1
        %vm711 = vcmask 343040
        %v712 = vsel %vm711, %v709, %v710
        %s714 = scalar_lea.vmem [#allocation2], 97
        %715 = vst.msk [vmem:[%s714] ss:$8 sm:$0xf] %vm527, %v712
        %716 = vst.msk [vmem:[%s714] ss:$8 sm:$0x30] %vm527, %v712
        %v717 = vld [vmem:[%s522] sm:$0x3f]
        %719 = vrot.lane.b32.xlu0 %v717, 41
        %v720 = vpop.permute.xlu0 %719
        %v721 = vrot.slane %v720, 1
        %vm722 = vcmask 334848
        %v723 = vsel %vm722, %v720, %v721
        %s725 = scalar_lea.vmem [#allocation2], 98
        %726 = vst.msk [vmem:[%s725] ss:$8 sm:$0xf] %vm527, %v723
        %727 = vst.msk [vmem:[%s725] ss:$8 sm:$0x30] %vm527, %v723
        %v728 = vld [vmem:[%s522] sm:$0x3f]
        %730 = vrot.lane.b32.xlu0 %v728, 40
        %v731 = vpop.permute.xlu0 %730
        %v732 = vrot.slane %v731, 1
        %vm733 = vcmask 326656
        %v734 = vsel %vm733, %v731, %v732
        %s736 = scalar_lea.vmem [#allocation2], 99
        %737 = vst.msk [vmem:[%s736] ss:$8 sm:$0xf] %vm527, %v734
        %738 = vst.msk [vmem:[%s736] ss:$8 sm:$0x30] %vm527, %v734
        %v739 = vld [vmem:[%s522] sm:$0x7f]
        %741 = vrot.lane.b32.xlu0 %v739, 16
        %v742 = vpop.permute.xlu0 %741
        %v743 = vrot.slane %v742, 1
        %vm744 = vcmask 130048
        %v745 = vsel %vm744, %v742, %v743
        %s747 = scalar_lea.vmem [#allocation2], 100
        %748 = vst.msk [vmem:[%s747] ss:$8 sm:$0xf] %vm527, %v745
        %749 = vst.msk [vmem:[%s747] ss:$8 sm:$0x30] %vm527, %v745
        %v750 = vld [vmem:[%s522] sm:$0x7f]
        %752 = vrot.lane.b32.xlu0 %v750, 15
        %v753 = vpop.permute.xlu0 %752
        %v754 = vrot.slane %v753, 1
        %vm755 = vcmask 121856
        %v756 = vsel %vm755, %v753, %v754
        %s758 = scalar_lea.vmem [#allocation2], 101
        %759 = vst.msk [vmem:[%s758] ss:$8 sm:$0xf] %vm527, %v756
        %760 = vst.msk [vmem:[%s758] ss:$8 sm:$0x30] %vm527, %v756
        %v761 = vld [vmem:[%s522] sm:$0x7f]
        %763 = vrot.lane.b32.xlu0 %v761, 14
        %v764 = vpop.permute.xlu0 %763
        %v765 = vrot.slane %v764, 1
        %vm766 = vcmask 113664
        %v767 = vsel %vm766, %v764, %v765
        %s769 = scalar_lea.vmem [#allocation2], 102
        %770 = vst.msk [vmem:[%s769] ss:$8 sm:$0xf] %vm527, %v767
        %771 = vst.msk [vmem:[%s769] ss:$8 sm:$0x30] %vm527, %v767
        %v772 = vld [vmem:[%s522] sm:$0x7f]
        %774 = vrot.lane.b32.xlu0 %v772, 13
        %v775 = vpop.permute.xlu0 %774
        %v776 = vrot.slane %v775, 1
        %vm777 = vcmask 105472
        %v778 = vsel %vm777, %v775, %v776
        %s780 = scalar_lea.vmem [#allocation2], 103
        %781 = vst.msk [vmem:[%s780] ss:$8 sm:$0xf] %vm527, %v778
        %782 = vst.msk [vmem:[%s780] ss:$8 sm:$0x30] %vm527, %v778
        %v783 = vld [vmem:[%s522] sm:$0x7f]
        %785 = vrot.lane.b32.xlu0 %v783, 12
        %v786 = vpop.permute.xlu0 %785
        %v787 = vrot.slane %v786, 1
        %vm788 = vcmask 97280
        %v789 = vsel %vm788, %v786, %v787
        %s791 = scalar_lea.vmem [#allocation2], 144
        %792 = vst.msk [vmem:[%s791] ss:$8 sm:$0xf] %vm527, %v789
        %793 = vst.msk [vmem:[%s791] ss:$8 sm:$0x30] %vm527, %v789
        %v794 = vld [vmem:[#allocation7] sm:$0xff]
        %v795 = vld [vmem:[#allocation7 + $0x8] sm:$0x3]
        %v796 = vld [vmem:[#allocation2] sm:$0xff]
        %v797 = vld [vmem:[#allocation2 + $0x8] sm:$0xff]
        %v798 = vld [vmem:[#allocation2 + $0x10] sm:$0xff]
        %v799 = vld [vmem:[#allocation2 + $0x18] sm:$0xff]
        %v800 = vld [vmem:[#allocation2 + $0x20] sm:$0xff]
        %v801 = vld [vmem:[#allocation2 + $0x28] sm:$0xff]
        %v802 = vld [vmem:[#allocation2 + $0x30] sm:$0xff]
        %v803 = vld [vmem:[#allocation2 + $0x38] sm:$0xff]
        %v804 = vld [vmem:[#allocation2 + $0x40] sm:$0xff]
        %v805 = vld [vmem:[#allocation2 + $0x48] sm:$0xff]
        %v806 = vld [vmem:[#allocation2 + $0x50] sm:$0xff]
        %v807 = vld [vmem:[#allocation2 + $0x58] sm:$0xff]
        %v808 = vld [vmem:[#allocation2 + $0x60] sm:$0xff]
        %v809 = vld [vmem:[#allocation2 + $0x68] sm:$0xff]
        %v810 = vld [vmem:[#allocation2 + $0x70] sm:$0xff]
        %v811 = vld [vmem:[#allocation2 + $0x78] sm:$0xff]
        %v812 = vld [vmem:[#allocation2 + $0x80] sm:$0xff]
        %v813 = vld [vmem:[#allocation2 + $0x88] sm:$0xff]
        %v814 = vld [vmem:[#allocation2 + $0x90] sm:$0x1]
        %v815 = vld [vmem:[#allocation2 + $0x98] sm:$0x1]
        %v816 = vld [vmem:[#allocation2 + $0xa0] sm:$0x1]
        %v817 = vld [vmem:[#allocation2 + $0xa8] sm:$0x1]
        %v818 = vld [vmem:[#allocation2 + $0xb0] sm:$0x1]
        %v819 = vld [vmem:[#allocation2 + $0xb8] sm:$0x1]
        %vm820 = vcmask 203776
        %v822 = vsel %vm820, %v794, 0
        %v825 = vsel %vm820, %v795, 0
        %vm827 = vcmask 1040384
        %v829 = vsel %vm827, %v814, 0
        %v832 = vsel %vm827, %v815, 0
        %v835 = vsel %vm827, %v816, 0
        %v838 = vsel %vm827, %v817, 0
        %v841 = vsel %vm827, %v818, 0
        %v844 = vsel %vm827, %v819, 0
        %846 = vmatprep.subr.mxu0 %v797
        %847 = vmatpush1.msra.mxu0 %v796
        %848 = vmatprep.subr.mxu0 %v803
        %849 = vmatpush1.msra.mxu0 %v802
        %850 = vmatprep.subr.mxu0 %v809
        %851 = vmatpush1.msra.mxu0 %v808
        %852 = vmatprep.subr.mxu0 %v832
        %853 = vmatpush1.msra.mxu0 %v829
        %854 = vmatprep.subr.mxu0 0.0
        %855 = vmatpush1.msra.mxu0 0.0
        %856 = vmatprep.subr.mxu0 0.0
        %857 = vmatpush1.msra.mxu0 0.0
        %858 = vmatprep.subr.mxu0 0.0
        %859 = vmatpush1.msra.mxu0 0.0
        %860 = vmatprep.subr.mxu0 0.0
        %861 = vmatpush1.msra.mxu0 0.0
        %862 = vmatprep.subr.mxu0 0.0
        %863 = vmatpush1.msra.mxu0 0.0
        %864 = vmatprep.subr.mxu0 0.0
        %865 = vmatpush1.msra.mxu0 0.0
        %866 = vmatprep.subr.mxu0 0.0
        %867 = vmatpush1.msra.mxu0 0.0
        %868 = vmatprep.subr.mxu0 0.0
        %869 = vmatpush1.msra.mxu0 0.0
        %870 = vmatprep.subr.mxu0 0.0
        %871 = vmatpush1.msra.mxu0 0.0
        %872 = vmatprep.subr.mxu0 0.0
        %873 = vmatpush1.msra.mxu0 0.0
        %874 = vmatprep.subr.mxu0 0.0
        %875 = vmatpush1.msra.mxu0 0.0
        %876 = vmatprep.subr.mxu0 0.0
        %877 = vmatpush1.msra.mxu0 0.0
        %878 = vmatprep.subr.mxu0 0.0
        %879 = vmatpush1.msra.mxu0 0.0
        %880 = vmatprep.subr.mxu0 0.0
        %881 = vmatpush1.msra.mxu0 0.0
        %882 = vmatprep.subr.mxu0 0.0
        %883 = vmatpush1.msra.mxu0 0.0
        %884 = vmatprep.subr.mxu0 0.0
        %885 = vmatpush1.msra.mxu0 0.0
        %886 = vmatprep.subr.mxu0 0.0
        %887 = vmatpush1.msra.mxu0 0.0
        %888 = vmatprep.subr.mxu0 0.0
        %889 = vmatpush1.msra.mxu0 0.0
        %890 = vmatprep.subr.mxu0 0.0
        %891 = vmatpush1.msra.mxu0 0.0
        %892 = vmatprep.subr.mxu0 0.0
        %893 = vmatpush1.msra.mxu0 0.0
        %894 = vmatprep.subr.mxu0 0.0
        %895 = vmatpush1.msra.mxu0 0.0
        %896 = vmatprep.subr.mxu0 0.0
        %897 = vmatpush1.msra.mxu0 0.0
        %898 = vmatprep.subr.mxu0 0.0
        %899 = vmatpush1.msra.mxu0 0.0
        %900 = vmatprep.subr.mxu0 0.0
        %901 = vmatpush1.msra.mxu0 0.0
        %902 = vmatprep.subr.mxu0 0.0
        %903 = vmatpush1.msra.mxu0 0.0
        %904 = vmatprep.subr.mxu0 0.0
        %905 = vmatpush1.msra.mxu0 0.0
        %906 = vmatprep.subr.mxu0 0.0
        %907 = vmatpush1.msra.mxu0 0.0
        %908 = vmatprep.subr.mxu0 0.0
        %909 = vmatpush1.msra.mxu0 0.0
        %910 = vmatprep.mubr.f32.mxu0 0.0
        %911 = vmatmul.mubr.f32.gmra.mrb[0].mxu0 %v822
        %v912 = vpop.f32.mrb[0].mxu0
        %v913 = vadd.f32 0.0, %v912
        %v914 = vpop.f32.mrb[0].mxu0
        %v915 = vadd.f32 0.0, %v914
        %916 = vmatprep.mubr.f32.mxu0 0.0
        %917 = vmatmul.mubr.f32.gmra.mrb[0].mxu0 %v825
        %v918 = vpop.f32.mrb[0].mxu0
        %v919 = vadd.f32 0.0, %v918
        %v920 = vpop.f32.mrb[0].mxu0
        %v921 = vadd.f32 0.0, %v920
        %922 = vdwg.mxu0
        %923 = vmatprep.subr.mxu0 %v799
        %924 = vmatpush1.msra.mxu0 %v798
        %925 = vmatprep.subr.mxu0 %v805
        %926 = vmatpush1.msra.mxu0 %v804
        %927 = vmatprep.subr.mxu0 %v811
        %928 = vmatpush1.msra.mxu0 %v810
        %929 = vmatprep.subr.mxu0 %v838
        %930 = vmatpush1.msra.mxu0 %v835
        %931 = vmatprep.subr.mxu0 0.0
        %932 = vmatpush1.msra.mxu0 0.0
        %933 = vmatprep.subr.mxu0 0.0
        %934 = vmatpush1.msra.mxu0 0.0
        %935 = vmatprep.subr.mxu0 0.0
        %936 = vmatpush1.msra.mxu0 0.0
        %937 = vmatprep.subr.mxu0 0.0
        %938 = vmatpush1.msra.mxu0 0.0
        %939 = vmatprep.subr.mxu0 0.0
        %940 = vmatpush1.msra.mxu0 0.0
        %941 = vmatprep.subr.mxu0 0.0
        %942 = vmatpush1.msra.mxu0 0.0
        %943 = vmatprep.subr.mxu0 0.0
        %944 = vmatpush1.msra.mxu0 0.0
        %945 = vmatprep.subr.mxu0 0.0
        %946 = vmatpush1.msra.mxu0 0.0
        %947 = vmatprep.subr.mxu0 0.0
        %948 = vmatpush1.msra.mxu0 0.0
        %949 = vmatprep.subr.mxu0 0.0
        %950 = vmatpush1.msra.mxu0 0.0
        %951 = vmatprep.subr.mxu0 0.0
        %952 = vmatpush1.msra.mxu0 0.0
        %953 = vmatprep.subr.mxu0 0.0
        %954 = vmatpush1.msra.mxu0 0.0
        %955 = vmatprep.subr.mxu0 0.0
        %956 = vmatpush1.msra.mxu0 0.0
        %957 = vmatprep.subr.mxu0 0.0
        %958 = vmatpush1.msra.mxu0 0.0
        %959 = vmatprep.subr.mxu0 0.0
        %960 = vmatpush1.msra.mxu0 0.0
        %961 = vmatprep.subr.mxu0 0.0
        %962 = vmatpush1.msra.mxu0 0.0
        %963 = vmatprep.subr.mxu0 0.0
        %964 = vmatpush1.msra.mxu0 0.0
        %965 = vmatprep.subr.mxu0 0.0
        %966 = vmatpush1.msra.mxu0 0.0
        %967 = vmatprep.subr.mxu0 0.0
        %968 = vmatpush1.msra.mxu0 0.0
        %969 = vmatprep.subr.mxu0 0.0
        %970 = vmatpush1.msra.mxu0 0.0
        %971 = vmatprep.subr.mxu0 0.0
        %972 = vmatpush1.msra.mxu0 0.0
        %973 = vmatprep.subr.mxu0 0.0
        %974 = vmatpush1.msra.mxu0 0.0
        %975 = vmatprep.subr.mxu0 0.0
        %976 = vmatpush1.msra.mxu0 0.0
        %977 = vmatprep.subr.mxu0 0.0
        %978 = vmatpush1.msra.mxu0 0.0
        %979 = vmatprep.subr.mxu0 0.0
        %980 = vmatpush1.msra.mxu0 0.0
        %981 = vmatprep.subr.mxu0 0.0
        %982 = vmatpush1.msra.mxu0 0.0
        %983 = vmatprep.subr.mxu0 0.0
        %984 = vmatpush1.msra.mxu0 0.0
        %985 = vmatprep.subr.mxu0 0.0
        %986 = vmatpush1.msra.mxu0 0.0
        %987 = vmatprep.mubr.f32.mxu0 0.0
        %988 = vmatmul.mubr.f32.gmra.mrb[0].mxu0 %v822
        %v989 = vpop.f32.mrb[0].mxu0
        %v990 = vadd.f32 0.0, %v989
        %v991 = vpop.f32.mrb[0].mxu0
        %v992 = vadd.f32 0.0, %v991
        %993 = vmatprep.mubr.f32.mxu0 0.0
        %994 = vmatmul.mubr.f32.gmra.mrb[0].mxu0 %v825
        %v995 = vpop.f32.mrb[0].mxu0
        %v996 = vadd.f32 0.0, %v995
        %v997 = vpop.f32.mrb[0].mxu0
        %v998 = vadd.f32 0.0, %v997
        %999 = vdwg.mxu0
        %1000 = vmatprep.subr.mxu0 %v801
        %1001 = vmatpush1.msra.mxu0 %v800
        %1002 = vmatprep.subr.mxu0 %v807
        %1003 = vmatpush1.msra.mxu0 %v806
        %1004 = vmatprep.subr.mxu0 %v813
        %1005 = vmatpush1.msra.mxu0 %v812
        %1006 = vmatprep.subr.mxu0 %v844
        %1007 = vmatpush1.msra.mxu0 %v841
        %1008 = vmatprep.subr.mxu0 0.0
        %1009 = vmatpush1.msra.mxu0 0.0
        %1010 = vmatprep.subr.mxu0 0.0
        %1011 = vmatpush1.msra.mxu0 0.0
        %1012 = vmatprep.subr.mxu0 0.0
        %1013 = vmatpush1.msra.mxu0 0.0
        %1014 = vmatprep.subr.mxu0 0.0
        %1015 = vmatpush1.msra.mxu0 0.0
        %1016 = vmatprep.subr.mxu0 0.0
        %1017 = vmatpush1.msra.mxu0 0.0
        %1018 = vmatprep.subr.mxu0 0.0
        %1019 = vmatpush1.msra.mxu0 0.0
        %1020 = vmatprep.subr.mxu0 0.0
        %1021 = vmatpush1.msra.mxu0 0.0
        %1022 = vmatprep.subr.mxu0 0.0
        %1023 = vmatpush1.msra.mxu0 0.0
        %1024 = vmatprep.subr.mxu0 0.0
        %1025 = vmatpush1.msra.mxu0 0.0
        %1026 = vmatprep.subr.mxu0 0.0
        %1027 = vmatpush1.msra.mxu0 0.0
        %1028 = vmatprep.subr.mxu0 0.0
        %1029 = vmatpush1.msra.mxu0 0.0
        %1030 = vmatprep.subr.mxu0 0.0
        %1031 = vmatpush1.msra.mxu0 0.0
        %1032 = vmatprep.subr.mxu0 0.0
        %1033 = vmatpush1.msra.mxu0 0.0
        %1034 = vmatprep.subr.mxu0 0.0
        %1035 = vmatpush1.msra.mxu0 0.0
        %1036 = vmatprep.subr.mxu0 0.0
        %1037 = vmatpush1.msra.mxu0 0.0
        %1038 = vmatprep.subr.mxu0 0.0
        %1039 = vmatpush1.msra.mxu0 0.0
        %1040 = vmatprep.subr.mxu0 0.0
        %1041 = vmatpush1.msra.mxu0 0.0
        %1042 = vmatprep.subr.mxu0 0.0
        %1043 = vmatpush1.msra.mxu0 0.0
        %1044 = vmatprep.subr.mxu0 0.0
        %1045 = vmatpush1.msra.mxu0 0.0
        %1046 = vmatprep.subr.mxu0 0.0
        %1047 = vmatpush1.msra.mxu0 0.0
        %1048 = vmatprep.subr.mxu0 0.0
        %1049 = vmatpush1.msra.mxu0 0.0
        %1050 = vmatprep.subr.mxu0 0.0
        %1051 = vmatpush1.msra.mxu0 0.0
        %1052 = vmatprep.subr.mxu0 0.0
        %1053 = vmatpush1.msra.mxu0 0.0
        %1054 = vmatprep.subr.mxu0 0.0
        %1055 = vmatpush1.msra.mxu0 0.0
        %1056 = vmatprep.subr.mxu0 0.0
        %1057 = vmatpush1.msra.mxu0 0.0
        %1058 = vmatprep.subr.mxu0 0.0
        %1059 = vmatpush1.msra.mxu0 0.0
        %1060 = vmatprep.subr.mxu0 0.0
        %1061 = vmatpush1.msra.mxu0 0.0
        %1062 = vmatprep.subr.mxu0 0.0
        %1063 = vmatpush1.msra.mxu0 0.0
        %1064 = vmatprep.mubr.f32.mxu0 0.0
        %1065 = vmatmul.mubr.f32.gmra.mrb[0].mxu0 %v822
        %v1066 = vpop.f32.mrb[0].mxu0
        %v1067 = vadd.f32 0.0, %v1066
        %v1068 = vpop.f32.mrb[0].mxu0
        %v1069 = vadd.f32 0.0, %v1068
        %1070 = vmatprep.mubr.f32.mxu0 0.0
        %1071 = vmatmul.mubr.f32.gmra.mrb[0].mxu0 %v825
        %v1072 = vpop.f32.mrb[0].mxu0
        %v1073 = vadd.f32 0.0, %v1072
        %v1074 = vpop.f32.mrb[0].mxu0
        %v1075 = vadd.f32 0.0, %v1074
        %1076 = vdwg.mxu0
        %v1077 = vld [vmem:[#allocation12] sm:$0xff]
        %v1078 = vld [vmem:[#allocation12 + $0x8] sm:$0xff]
        %v1079 = vld [vmem:[#allocation12 + $0x10] sm:$0xff]
        %v1080 = vld [vmem:[#allocation12 + $0x18] sm:$0xff]
        %v1081 = vld [vmem:[#allocation12 + $0x20] sm:$0xff]
        %v1082 = vld [vmem:[#allocation12 + $0x28] sm:$0xff]
        %v1083 = vld [vmem:[#allocation12 + $0x30] sm:$0xff]
        %v1084 = vld [vmem:[#allocation12 + $0x38] sm:$0xff]
        %v1085 = vld [vmem:[#allocation12 + $0x40] sm:$0xff]
        %v1086 = vld [vmem:[#allocation12 + $0x48] sm:$0xff]
        %v1087 = vld [vmem:[#allocation12 + $0x50] sm:$0xff]
        %v1088 = vld [vmem:[#allocation12 + $0x58] sm:$0xff]
        %v1089 = vld [vmem:[#allocation12 + $0x60] sm:$0xff]
        %v1090 = vld [vmem:[#allocation12 + $0x68] sm:$0xff]
        %v1091 = vld [vmem:[#allocation12 + $0x70] sm:$0xff]
        %v1092 = vld [vmem:[#allocation12 + $0x78] sm:$0xff]
        %v1093 = vld [vmem:[#allocation12 + $0x80] sm:$0xff]
        %v1094 = vld [vmem:[#allocation12 + $0x88] sm:$0xff]
        %v1095 = vld [vmem:[#allocation12 + $0x90] sm:$0xff]
        %v1096 = vld [vmem:[#allocation12 + $0x98] sm:$0xff]
        %v1097 = vld [vmem:[#allocation12 + $0xa0] sm:$0xff]
        %v1098 = vld [vmem:[#allocation12 + $0xa8] sm:$0xff]
        %v1099 = vld [vmem:[#allocation12 + $0xb0] sm:$0xff]
        %v1100 = vld [vmem:[#allocation12 + $0xb8] sm:$0xff]
        %v1101 = vld [vmem:[#allocation12 + $0xc0] sm:$0xff]
        %v1102 = vld [vmem:[#allocation12 + $0xc8] sm:$0xff]
        %v1103 = vld [vmem:[#allocation12 + $0xd0] sm:$0xff]
        %v1104 = vld [vmem:[#allocation12 + $0xd8] sm:$0xff]
        %v1105 = vld [vmem:[#allocation12 + $0xe0] sm:$0xff]
        %v1106 = vld [vmem:[#allocation12 + $0xe8] sm:$0xff]
        %v1107 = vld [vmem:[#allocation12 + $0xf0] sm:$0xff]
        %v1108 = vld [vmem:[#allocation12 + $0xf8] sm:$0xff]
        %v1109 = vld [vmem:[#allocation12 + $0x100] sm:$0xff]
        %v1110 = vld [vmem:[#allocation12 + $0x108] sm:$0xff]
        %v1111 = vld [vmem:[#allocation12 + $0x110] sm:$0xff]
        %v1112 = vld [vmem:[#allocation12 + $0x118] sm:$0xff]
        %v1113 = vld [vmem:[#allocation12 + $0x120] sm:$0xff]
        %v1114 = vld [vmem:[#allocation12 + $0x128] sm:$0xff]
        %v1115 = vld [vmem:[#allocation12 + $0x130] sm:$0xff]
        %v1116 = vld [vmem:[#allocation12 + $0x138] sm:$0xff]
        %v1117 = vld [vmem:[#allocation12 + $0x140] sm:$0xff]
        %v1118 = vld [vmem:[#allocation12 + $0x148] sm:$0xff]
        %v1119 = vld [vmem:[#allocation12 + $0x150] sm:$0xff]
        %v1120 = vld [vmem:[#allocation12 + $0x158] sm:$0xff]
        %v1121 = vld [vmem:[#allocation12 + $0x160] sm:$0xff]
        %v1122 = vld [vmem:[#allocation12 + $0x168] sm:$0xff]
        %v1123 = vld [vmem:[#allocation12 + $0x170] sm:$0xff]
        %v1124 = vld [vmem:[#allocation12 + $0x178] sm:$0xff]
        %v1125 = vld [vmem:[#allocation12 + $0x180] sm:$0xff]
        %v1126 = vld [vmem:[#allocation12 + $0x188] sm:$0xff]
        %v1127 = vld [vmem:[#allocation12 + $0x190] sm:$0xff]
        %v1128 = vld [vmem:[#allocation12 + $0x198] sm:$0xff]
        %v1129 = vld [vmem:[#allocation12 + $0x1a0] sm:$0xff]
        %v1130 = vld [vmem:[#allocation12 + $0x1a8] sm:$0xff]
        %v1131 = vld [vmem:[#allocation12 + $0x1b0] sm:$0xff]
        %v1132 = vld [vmem:[#allocation12 + $0x1b8] sm:$0xff]
        %v1133 = vld [vmem:[#allocation12 + $0x1c0] sm:$0xff]
        %v1134 = vld [vmem:[#allocation12 + $0x1c8] sm:$0xff]
        %v1135 = vld [vmem:[#allocation12 + $0x1d0] sm:$0xff]
        %v1136 = vld [vmem:[#allocation12 + $0x1d8] sm:$0xff]
        %v1137 = vld [vmem:[#allocation12 + $0x1e0] sm:$0xff]
        %v1138 = vld [vmem:[#allocation12 + $0x1e8] sm:$0xff]
        %v1139 = vld [vmem:[#allocation12 + $0x1f0] sm:$0xff]
        %v1140 = vld [vmem:[#allocation12 + $0x1f8] sm:$0xff]
        %v1141 = vld [vmem:[#allocation12 + $0x200] sm:$0xff]
        %v1142 = vld [vmem:[#allocation12 + $0x208] sm:$0xff]
        %v1143 = vld [vmem:[#allocation12 + $0x210] sm:$0xff]
        %v1144 = vld [vmem:[#allocation12 + $0x218] sm:$0xff]
        %v1145 = vld [vmem:[#allocation12 + $0x220] sm:$0xff]
        %v1146 = vld [vmem:[#allocation12 + $0x228] sm:$0xff]
        %v1147 = vld [vmem:[#allocation12 + $0x230] sm:$0xff]
        %v1148 = vld [vmem:[#allocation12 + $0x238] sm:$0xff]
        %v1149 = vld [vmem:[#allocation12 + $0x240] sm:$0xff]
        %v1150 = vld [vmem:[#allocation12 + $0x248] sm:$0xff]
        %v1151 = vld [vmem:[#allocation12 + $0x250] sm:$0xff]
        %v1152 = vld [vmem:[#allocation12 + $0x258] sm:$0xff]
        %v1153 = vld [vmem:[#allocation12 + $0x260] sm:$0xff]
        %v1154 = vld [vmem:[#allocation12 + $0x268] sm:$0xff]
        %v1155 = vld [vmem:[#allocation12 + $0x270] sm:$0xff]
        %v1156 = vld [vmem:[#allocation12 + $0x278] sm:$0xff]
        %v1157 = vld [vmem:[#allocation12 + $0x280] sm:$0xff]
        %v1158 = vld [vmem:[#allocation12 + $0x288] sm:$0xff]
        %v1159 = vld [vmem:[#allocation12 + $0x290] sm:$0xff]
        %v1160 = vld [vmem:[#allocation12 + $0x298] sm:$0xff]
        %v1161 = vld [vmem:[#allocation12 + $0x2a0] sm:$0xff]
        %v1162 = vld [vmem:[#allocation12 + $0x2a8] sm:$0xff]
        %v1163 = vld [vmem:[#allocation12 + $0x2b0] sm:$0xff]
        %v1164 = vld [vmem:[#allocation12 + $0x2b8] sm:$0xff]
        %v1165 = vld [vmem:[#allocation12 + $0x2c0] sm:$0xff]
        %v1166 = vld [vmem:[#allocation12 + $0x2c8] sm:$0xff]
        %v1167 = vld [vmem:[#allocation12 + $0x2d0] sm:$0xff]
        %v1168 = vld [vmem:[#allocation12 + $0x2d8] sm:$0xff]
        %v1169 = vld [vmem:[#allocation12 + $0x2e0] sm:$0xff]
        %v1170 = vld [vmem:[#allocation12 + $0x2e8] sm:$0xff]
        %v1171 = vld [vmem:[#allocation12 + $0x2f0] sm:$0xff]
        %v1172 = vld [vmem:[#allocation12 + $0x2f8] sm:$0xff]
        %v1173 = vld [vmem:[#allocation12 + $0x300] sm:$0xff]
        %v1174 = vld [vmem:[#allocation12 + $0x308] sm:$0xff]
        %v1175 = vld [vmem:[#allocation12 + $0x310] sm:$0xff]
        %v1176 = vld [vmem:[#allocation12 + $0x318] sm:$0xff]
        %v1177 = vld [vmem:[#allocation12 + $0x320] sm:$0xff]
        %v1178 = vld [vmem:[#allocation12 + $0x328] sm:$0xff]
        %v1179 = vld [vmem:[#allocation12 + $0x330] sm:$0xff]
        %v1180 = vld [vmem:[#allocation12 + $0x338] sm:$0xff]
        %v1181 = vld [vmem:[#allocation12 + $0x340] sm:$0xff]
        %v1182 = vld [vmem:[#allocation12 + $0x348] sm:$0xff]
        %v1183 = vld [vmem:[#allocation12 + $0x350] sm:$0xff]
        %v1184 = vld [vmem:[#allocation12 + $0x358] sm:$0xff]
        %v1185 = vld [vmem:[#allocation12 + $0x360] sm:$0xff]
        %v1186 = vld [vmem:[#allocation12 + $0x368] sm:$0xff]
        %v1187 = vld [vmem:[#allocation12 + $0x370] sm:$0xff]
        %v1188 = vld [vmem:[#allocation12 + $0x378] sm:$0xff]
        %v1189 = vld [vmem:[#allocation12 + $0x380] sm:$0xff]
        %v1190 = vld [vmem:[#allocation12 + $0x388] sm:$0xff]
        %v1191 = vld [vmem:[#allocation12 + $0x390] sm:$0xff]
        %v1192 = vld [vmem:[#allocation12 + $0x398] sm:$0xff]
        %v1193 = vld [vmem:[#allocation12 + $0x3a0] sm:$0xff]
        %v1194 = vld [vmem:[#allocation12 + $0x3a8] sm:$0xff]
        %v1195 = vld [vmem:[#allocation12 + $0x3b0] sm:$0xff]
        %v1196 = vld [vmem:[#allocation12 + $0x3b8] sm:$0xff]
        %v1197 = vld [vmem:[#allocation12 + $0x3c0] sm:$0xff]
        %v1198 = vld [vmem:[#allocation12 + $0x3c8] sm:$0xff]
        %v1199 = vld [vmem:[#allocation12 + $0x3d0] sm:$0xff]
        %v1200 = vld [vmem:[#allocation12 + $0x3d8] sm:$0xff]
        %v1201 = vld [vmem:[#allocation12 + $0x3e0] sm:$0xff]
        %v1202 = vld [vmem:[#allocation12 + $0x3e8] sm:$0xff]
        %v1203 = vld [vmem:[#allocation12 + $0x3f0] sm:$0xff]
        %v1204 = vld [vmem:[#allocation12 + $0x3f8] sm:$0xff]
        %v1205 = vld [vmem:[#allocation12 + $0x400] sm:$0xff]
        %v1206 = vld [vmem:[#allocation12 + $0x408] sm:$0xff]
        %v1207 = vld [vmem:[#allocation12 + $0x410] sm:$0xff]
        %v1208 = vld [vmem:[#allocation12 + $0x418] sm:$0xff]
        %v1209 = vld [vmem:[#allocation12 + $0x420] sm:$0xff]
        %v1210 = vld [vmem:[#allocation12 + $0x428] sm:$0xff]
        %v1211 = vld [vmem:[#allocation12 + $0x430] sm:$0xff]
        %v1212 = vld [vmem:[#allocation12 + $0x438] sm:$0xff]
        %v1213 = vld [vmem:[#allocation12 + $0x440] sm:$0xff]
        %v1214 = vld [vmem:[#allocation12 + $0x448] sm:$0xff]
        %v1215 = vld [vmem:[#allocation12 + $0x450] sm:$0xff]
        %v1216 = vld [vmem:[#allocation12 + $0x458] sm:$0xff]
        %v1217 = vld [vmem:[#allocation12 + $0x460] sm:$0xff]
        %v1218 = vld [vmem:[#allocation12 + $0x468] sm:$0xff]
        %v1219 = vld [vmem:[#allocation12 + $0x470] sm:$0xff]
        %v1220 = vld [vmem:[#allocation12 + $0x478] sm:$0xff]
        %v1221 = vld [vmem:[#allocation12 + $0x480] sm:$0xff]
        %v1222 = vld [vmem:[#allocation12 + $0x488] sm:$0xff]
        %v1223 = vld [vmem:[#allocation12 + $0x490] sm:$0xff]
        %v1224 = vld [vmem:[#allocation12 + $0x498] sm:$0xff]
        %v1225 = vld [vmem:[#allocation12 + $0x4a0] sm:$0xff]
        %v1226 = vld [vmem:[#allocation12 + $0x4a8] sm:$0xff]
        %v1227 = vld [vmem:[#allocation12 + $0x4b0] sm:$0xff]
        %v1228 = vld [vmem:[#allocation12 + $0x4b8] sm:$0xff]
        %v1229 = vld [vmem:[#allocation12 + $0x4c0] sm:$0xff]
        %v1230 = vld [vmem:[#allocation12 + $0x4c8] sm:$0xff]
        %v1231 = vld [vmem:[#allocation12 + $0x4d0] sm:$0xff]
        %v1232 = vld [vmem:[#allocation12 + $0x4d8] sm:$0xff]
        %v1233 = vld [vmem:[#allocation12 + $0x4e0] sm:$0xff]
        %v1234 = vld [vmem:[#allocation12 + $0x4e8] sm:$0xff]
        %v1235 = vld [vmem:[#allocation12 + $0x4f0] sm:$0xff]
        %v1236 = vld [vmem:[#allocation12 + $0x4f8] sm:$0xff]
        %v1237 = vld [vmem:[#allocation12 + $0x500] sm:$0xff]
        %v1238 = vld [vmem:[#allocation12 + $0x508] sm:$0xff]
        %v1239 = vld [vmem:[#allocation12 + $0x510] sm:$0xff]
        %v1240 = vld [vmem:[#allocation12 + $0x518] sm:$0xff]
        %v1241 = vld [vmem:[#allocation12 + $0x520] sm:$0xff]
        %v1242 = vld [vmem:[#allocation12 + $0x528] sm:$0xff]
        %v1243 = vld [vmem:[#allocation12 + $0x530] sm:$0xf]
        %v1244 = vld [vmem:[#allocation12 + $0x538] sm:$0xf]
        %vm1245 = vcmask 228352
        %v1247 = vsel %vm1245, %v1069, 0
        %v1250 = vsel %vm1245, %v1075, 0
        %vm1252 = vcmask 1043456
        %v1254 = vsel %vm1252, %v1243, 0
        %v1257 = vsel %vm1252, %v1244, 0
        %1259 = vmatprep.subr.mxu0 %v1078
        %1260 = vmatpush1.msra.mxu0 %v1077
        %1261 = vmatprep.subr.mxu0 %v1080
        %1262 = vmatpush1.msra.mxu0 %v1079
        %1263 = vmatprep.subr.mxu0 %v1082
        %1264 = vmatpush1.msra.mxu0 %v1081
        %1265 = vmatprep.subr.mxu0 %v1084
        %1266 = vmatpush1.msra.mxu0 %v1083
        %1267 = vmatprep.subr.mxu0 %v1086
        %1268 = vmatpush1.msra.mxu0 %v1085
        %1269 = vmatprep.subr.mxu0 %v1088
        %1270 = vmatpush1.msra.mxu0 %v1087
        %1271 = vmatprep.subr.mxu0 %v1090
        %1272 = vmatpush1.msra.mxu0 %v1089
        %1273 = vmatprep.subr.mxu0 %v1092
        %1274 = vmatpush1.msra.mxu0 %v1091
        %1275 = vmatprep.subr.mxu0 %v1094
        %1276 = vmatpush1.msra.mxu0 %v1093
        %1277 = vmatprep.subr.mxu0 %v1096
        %1278 = vmatpush1.msra.mxu0 %v1095
        %1279 = vmatprep.subr.mxu0 %v1098
        %1280 = vmatpush1.msra.mxu0 %v1097
        %1281 = vmatprep.subr.mxu0 %v1100
        %1282 = vmatpush1.msra.mxu0 %v1099
        %1283 = vmatprep.subr.mxu0 %v1102
        %1284 = vmatpush1.msra.mxu0 %v1101
        %1285 = vmatprep.subr.mxu0 %v1104
        %1286 = vmatpush1.msra.mxu0 %v1103
        %1287 = vmatprep.subr.mxu0 %v1106
        %1288 = vmatpush1.msra.mxu0 %v1105
        %1289 = vmatprep.subr.mxu0 %v1108
        %1290 = vmatpush1.msra.mxu0 %v1107
        %1291 = vmatprep.subr.mxu0 %v1110
        %1292 = vmatpush1.msra.mxu0 %v1109
        %1293 = vmatprep.subr.mxu0 %v1112
        %1294 = vmatpush1.msra.mxu0 %v1111
        %1295 = vmatprep.subr.mxu0 %v1114
        %1296 = vmatpush1.msra.mxu0 %v1113
        %1297 = vmatprep.subr.mxu0 %v1116
        %1298 = vmatpush1.msra.mxu0 %v1115
        %1299 = vmatprep.subr.mxu0 %v1118
        %1300 = vmatpush1.msra.mxu0 %v1117
        %1301 = vmatprep.subr.mxu0 %v1120
        %1302 = vmatpush1.msra.mxu0 %v1119
        %1303 = vmatprep.subr.mxu0 %v1122
        %1304 = vmatpush1.msra.mxu0 %v1121
        %1305 = vmatprep.subr.mxu0 %v1124
        %1306 = vmatpush1.msra.mxu0 %v1123
        %1307 = vmatprep.subr.mxu0 %v1126
        %1308 = vmatpush1.msra.mxu0 %v1125
        %1309 = vmatprep.subr.mxu0 %v1128
        %1310 = vmatpush1.msra.mxu0 %v1127
        %1311 = vmatprep.subr.mxu0 %v1130
        %1312 = vmatpush1.msra.mxu0 %v1129
        %1313 = vmatprep.subr.mxu0 %v1132
        %1314 = vmatpush1.msra.mxu0 %v1131
        %1315 = vmatprep.subr.mxu0 %v1134
        %1316 = vmatpush1.msra.mxu0 %v1133
        %1317 = vmatprep.subr.mxu0 %v1136
        %1318 = vmatpush1.msra.mxu0 %v1135
        %1319 = vmatprep.subr.mxu0 %v1138
        %1320 = vmatpush1.msra.mxu0 %v1137
        %1321 = vmatprep.subr.mxu0 %v1140
        %1322 = vmatpush1.msra.mxu0 %v1139
        %1323 = vmatprep.mubr.f32.mxu0 %v915
        %1324 = vmatmul.mubr.f32.gmra.mrb[0].mxu0 %v913
        %v1325 = vpop.f32.mrb[0].mxu0
        %v1326 = vadd.f32 0.0, %v1325
        %v1327 = vpop.f32.mrb[0].mxu0
        %v1328 = vadd.f32 0.0, %v1327
        %1329 = vmatprep.mubr.f32.mxu0 %v921
        %1330 = vmatmul.mubr.f32.gmra.mrb[0].mxu0 %v919
        %v1331 = vpop.f32.mrb[0].mxu0
        %v1332 = vadd.f32 0.0, %v1331
        %v1333 = vpop.f32.mrb[0].mxu0
        %v1334 = vadd.f32 0.0, %v1333
        %1335 = vdwg.mxu0
        %1336 = vmatprep.subr.mxu0 %v1142
        %1337 = vmatpush1.msra.mxu0 %v1141
        %1338 = vmatprep.subr.mxu0 %v1144
        %1339 = vmatpush1.msra.mxu0 %v1143
        %1340 = vmatprep.subr.mxu0 %v1146
        %1341 = vmatpush1.msra.mxu0 %v1145
        %1342 = vmatprep.subr.mxu0 %v1148
        %1343 = vmatpush1.msra.mxu0 %v1147
        %1344 = vmatprep.subr.mxu0 %v1150
        %1345 = vmatpush1.msra.mxu0 %v1149
        %1346 = vmatprep.subr.mxu0 %v1152
        %1347 = vmatpush1.msra.mxu0 %v1151
        %1348 = vmatprep.subr.mxu0 %v1154
        %1349 = vmatpush1.msra.mxu0 %v1153
        %1350 = vmatprep.subr.mxu0 %v1156
        %1351 = vmatpush1.msra.mxu0 %v1155
        %1352 = vmatprep.subr.mxu0 %v1158
        %1353 = vmatpush1.msra.mxu0 %v1157
        %1354 = vmatprep.subr.mxu0 %v1160
        %1355 = vmatpush1.msra.mxu0 %v1159
        %1356 = vmatprep.subr.mxu0 %v1162
        %1357 = vmatpush1.msra.mxu0 %v1161
        %1358 = vmatprep.subr.mxu0 %v1164
        %1359 = vmatpush1.msra.mxu0 %v1163
        %1360 = vmatprep.subr.mxu0 %v1166
        %1361 = vmatpush1.msra.mxu0 %v1165
        %1362 = vmatprep.subr.mxu0 %v1168
        %1363 = vmatpush1.msra.mxu0 %v1167
        %1364 = vmatprep.subr.mxu0 %v1170
        %1365 = vmatpush1.msra.mxu0 %v1169
        %1366 = vmatprep.subr.mxu0 %v1172
        %1367 = vmatpush1.msra.mxu0 %v1171
        %1368 = vmatprep.subr.mxu0 %v1174
        %1369 = vmatpush1.msra.mxu0 %v1173
        %1370 = vmatprep.subr.mxu0 %v1176
        %1371 = vmatpush1.msra.mxu0 %v1175
        %1372 = vmatprep.subr.mxu0 %v1178
        %1373 = vmatpush1.msra.mxu0 %v1177
        %1374 = vmatprep.subr.mxu0 %v1180
        %1375 = vmatpush1.msra.mxu0 %v1179
        %1376 = vmatprep.subr.mxu0 %v1182
        %1377 = vmatpush1.msra.mxu0 %v1181
        %1378 = vmatprep.subr.mxu0 %v1184
        %1379 = vmatpush1.msra.mxu0 %v1183
        %1380 = vmatprep.subr.mxu0 %v1186
        %1381 = vmatpush1.msra.mxu0 %v1185
        %1382 = vmatprep.subr.mxu0 %v1188
        %1383 = vmatpush1.msra.mxu0 %v1187
        %1384 = vmatprep.subr.mxu0 %v1190
        %1385 = vmatpush1.msra.mxu0 %v1189
        %1386 = vmatprep.subr.mxu0 %v1192
        %1387 = vmatpush1.msra.mxu0 %v1191
        %1388 = vmatprep.subr.mxu0 %v1194
        %1389 = vmatpush1.msra.mxu0 %v1193
        %1390 = vmatprep.subr.mxu0 %v1196
        %1391 = vmatpush1.msra.mxu0 %v1195
        %1392 = vmatprep.subr.mxu0 %v1198
        %1393 = vmatpush1.msra.mxu0 %v1197
        %1394 = vmatprep.subr.mxu0 %v1200
        %1395 = vmatpush1.msra.mxu0 %v1199
        %1396 = vmatprep.subr.mxu0 %v1202
        %1397 = vmatpush1.msra.mxu0 %v1201
        %1398 = vmatprep.subr.mxu0 %v1204
        %1399 = vmatpush1.msra.mxu0 %v1203
        %1400 = vmatprep.mubr.f32.mxu0 %v992
        %1401 = vmatmul.mubr.f32.gmra.mrb[0].mxu0 %v990
        %v1402 = vpop.f32.mrb[0].mxu0
        %v1403 = vadd.f32 %v1326, %v1402
        %v1404 = vpop.f32.mrb[0].mxu0
        %v1405 = vadd.f32 %v1328, %v1404
        %1406 = vmatprep.mubr.f32.mxu0 %v998
        %1407 = vmatmul.mubr.f32.gmra.mrb[0].mxu0 %v996
        %v1408 = vpop.f32.mrb[0].mxu0
        %v1409 = vadd.f32 %v1332, %v1408
        %v1410 = vpop.f32.mrb[0].mxu0
        %v1411 = vadd.f32 %v1334, %v1410
        %1412 = vdwg.mxu0
        %1413 = vmatprep.subr.mxu0 %v1206
        %1414 = vmatpush1.msra.mxu0 %v1205
        %1415 = vmatprep.subr.mxu0 %v1208
        %1416 = vmatpush1.msra.mxu0 %v1207
        %1417 = vmatprep.subr.mxu0 %v1210
        %1418 = vmatpush1.msra.mxu0 %v1209
        %1419 = vmatprep.subr.mxu0 %v1212
        %1420 = vmatpush1.msra.mxu0 %v1211
        %1421 = vmatprep.subr.mxu0 %v1214
        %1422 = vmatpush1.msra.mxu0 %v1213
        %1423 = vmatprep.subr.mxu0 %v1216
        %1424 = vmatpush1.msra.mxu0 %v1215
        %1425 = vmatprep.subr.mxu0 %v1218
        %1426 = vmatpush1.msra.mxu0 %v1217
        %1427 = vmatprep.subr.mxu0 %v1220
        %1428 = vmatpush1.msra.mxu0 %v1219
        %1429 = vmatprep.subr.mxu0 %v1222
        %1430 = vmatpush1.msra.mxu0 %v1221
        %1431 = vmatprep.subr.mxu0 %v1224
        %1432 = vmatpush1.msra.mxu0 %v1223
        %1433 = vmatprep.subr.mxu0 %v1226
        %1434 = vmatpush1.msra.mxu0 %v1225
        %1435 = vmatprep.subr.mxu0 %v1228
        %1436 = vmatpush1.msra.mxu0 %v1227
        %1437 = vmatprep.subr.mxu0 %v1230
        %1438 = vmatpush1.msra.mxu0 %v1229
        %1439 = vmatprep.subr.mxu0 %v1232
        %1440 = vmatpush1.msra.mxu0 %v1231
        %1441 = vmatprep.subr.mxu0 %v1234
        %1442 = vmatpush1.msra.mxu0 %v1233
        %1443 = vmatprep.subr.mxu0 %v1236
        %1444 = vmatpush1.msra.mxu0 %v1235
        %1445 = vmatprep.subr.mxu0 %v1238
        %1446 = vmatpush1.msra.mxu0 %v1237
        %1447 = vmatprep.subr.mxu0 %v1240
        %1448 = vmatpush1.msra.mxu0 %v1239
        %1449 = vmatprep.subr.mxu0 %v1242
        %1450 = vmatpush1.msra.mxu0 %v1241
        %1451 = vmatprep.subr.mxu0 %v1257
        %1452 = vmatpush1.msra.mxu0 %v1254
        %1453 = vmatprep.subr.mxu0 0.0
        %1454 = vmatpush1.msra.mxu0 0.0
        %1455 = vmatprep.subr.mxu0 0.0
        %1456 = vmatpush1.msra.mxu0 0.0
        %1457 = vmatprep.subr.mxu0 0.0
        %1458 = vmatpush1.msra.mxu0 0.0
        %1459 = vmatprep.subr.mxu0 0.0
        %1460 = vmatpush1.msra.mxu0 0.0
        %1461 = vmatprep.subr.mxu0 0.0
        %1462 = vmatpush1.msra.mxu0 0.0
        %1463 = vmatprep.subr.mxu0 0.0
        %1464 = vmatpush1.msra.mxu0 0.0
        %1465 = vmatprep.subr.mxu0 0.0
        %1466 = vmatpush1.msra.mxu0 0.0
        %1467 = vmatprep.subr.mxu0 0.0
        %1468 = vmatpush1.msra.mxu0 0.0
        %1469 = vmatprep.subr.mxu0 0.0
        %1470 = vmatpush1.msra.mxu0 0.0
        %1471 = vmatprep.subr.mxu0 0.0
        %1472 = vmatpush1.msra.mxu0 0.0
        %1473 = vmatprep.subr.mxu0 0.0
        %1474 = vmatpush1.msra.mxu0 0.0
        %1475 = vmatprep.subr.mxu0 0.0
        %1476 = vmatpush1.msra.mxu0 0.0
        %1477 = vmatprep.mubr.f32.mxu0 %v1247
        %1478 = vmatmul.mubr.f32.gmra.mrb[0].mxu0 %v1067
        %v1479 = vpop.f32.mrb[0].mxu0
        %v1480 = vadd.f32 %v1403, %v1479
        %v1481 = vpop.f32.mrb[0].mxu0
        %v1482 = vadd.f32 %v1405, %v1481
        %1483 = vmatprep.mubr.f32.mxu0 %v1250
        %1484 = vmatmul.mubr.f32.gmra.mrb[0].mxu0 %v1073
        %v1485 = vpop.f32.mrb[0].mxu0
        %v1486 = vadd.f32 %v1409, %v1485
        %v1487 = vpop.f32.mrb[0].mxu0
        %v1488 = vadd.f32 %v1411, %v1487
        %1489 = vdwg.mxu0
        %s1490 = scalar_lea.vmem [#allocation12], 1344
        %v1491 = vld [vmem:[%s1490] sm:$0xff]
        %v1492 = vld [vmem:[%s1490 + $0x8] sm:$0xff]
        %v1493 = vld [vmem:[%s1490 + $0x10] sm:$0xff]
        %v1494 = vld [vmem:[%s1490 + $0x18] sm:$0xff]
        %v1495 = vld [vmem:[%s1490 + $0x20] sm:$0xff]
        %v1496 = vld [vmem:[%s1490 + $0x28] sm:$0xff]
        %v1497 = vld [vmem:[%s1490 + $0x30] sm:$0xff]
        %v1498 = vld [vmem:[%s1490 + $0x38] sm:$0xff]
        %v1499 = vld [vmem:[%s1490 + $0x40] sm:$0xff]
        %v1500 = vld [vmem:[%s1490 + $0x48] sm:$0xff]
        %v1501 = vld [vmem:[%s1490 + $0x50] sm:$0xff]
        %v1502 = vld [vmem:[%s1490 + $0x58] sm:$0xff]
        %v1503 = vld [vmem:[%s1490 + $0x60] sm:$0xff]
        %v1504 = vld [vmem:[%s1490 + $0x68] sm:$0xff]
        %v1505 = vld [vmem:[%s1490 + $0x70] sm:$0xff]
        %v1506 = vld [vmem:[%s1490 + $0x78] sm:$0xff]
        %v1507 = vld [vmem:[%s1490 + $0x80] sm:$0xff]
        %v1508 = vld [vmem:[%s1490 + $0x88] sm:$0xff]
        %v1509 = vld [vmem:[%s1490 + $0x90] sm:$0xff]
        %v1510 = vld [vmem:[%s1490 + $0x98] sm:$0xff]
        %v1511 = vld [vmem:[%s1490 + $0xa0] sm:$0xff]
        %v1512 = vld [vmem:[%s1490 + $0xa8] sm:$0xff]
        %v1513 = vld [vmem:[%s1490 + $0xb0] sm:$0xff]
        %v1514 = vld [vmem:[%s1490 + $0xb8] sm:$0xff]
        %v1515 = vld [vmem:[%s1490 + $0xc0] sm:$0xff]
        %v1516 = vld [vmem:[%s1490 + $0xc8] sm:$0xff]
        %v1517 = vld [vmem:[%s1490 + $0xd0] sm:$0xff]
        %v1518 = vld [vmem:[%s1490 + $0xd8] sm:$0xff]
        %v1519 = vld [vmem:[%s1490 + $0xe0] sm:$0xff]
        %v1520 = vld [vmem:[%s1490 + $0xe8] sm:$0xff]
        %v1521 = vld [vmem:[%s1490 + $0xf0] sm:$0xff]
        %v1522 = vld [vmem:[%s1490 + $0xf8] sm:$0xff]
        %v1523 = vld [vmem:[%s1490 + $0x100] sm:$0xff]
        %v1524 = vld [vmem:[%s1490 + $0x108] sm:$0xff]
        %v1525 = vld [vmem:[%s1490 + $0x110] sm:$0xff]
        %v1526 = vld [vmem:[%s1490 + $0x118] sm:$0xff]
        %v1527 = vld [vmem:[%s1490 + $0x120] sm:$0xff]
        %v1528 = vld [vmem:[%s1490 + $0x128] sm:$0xff]
        %v1529 = vld [vmem:[%s1490 + $0x130] sm:$0xff]
        %v1530 = vld [vmem:[%s1490 + $0x138] sm:$0xff]
        %v1531 = vld [vmem:[%s1490 + $0x140] sm:$0xff]
        %v1532 = vld [vmem:[%s1490 + $0x148] sm:$0xff]
        %v1533 = vld [vmem:[%s1490 + $0x150] sm:$0xff]
        %v1534 = vld [vmem:[%s1490 + $0x158] sm:$0xff]
        %v1535 = vld [vmem:[%s1490 + $0x160] sm:$0xff]
        %v1536 = vld [vmem:[%s1490 + $0x168] sm:$0xff]
        %v1537 = vld [vmem:[%s1490 + $0x170] sm:$0xff]
        %v1538 = vld [vmem:[%s1490 + $0x178] sm:$0xff]
        %v1539 = vld [vmem:[%s1490 + $0x180] sm:$0xff]
        %v1540 = vld [vmem:[%s1490 + $0x188] sm:$0xff]
        %v1541 = vld [vmem:[%s1490 + $0x190] sm:$0xff]
        %v1542 = vld [vmem:[%s1490 + $0x198] sm:$0xff]
        %v1543 = vld [vmem:[%s1490 + $0x1a0] sm:$0xff]
        %v1544 = vld [vmem:[%s1490 + $0x1a8] sm:$0xff]
        %v1545 = vld [vmem:[%s1490 + $0x1b0] sm:$0xff]
        %v1546 = vld [vmem:[%s1490 + $0x1b8] sm:$0xff]
        %v1547 = vld [vmem:[%s1490 + $0x1c0] sm:$0xff]
        %v1548 = vld [vmem:[%s1490 + $0x1c8] sm:$0xff]
        %v1549 = vld [vmem:[%s1490 + $0x1d0] sm:$0xff]
        %v1550 = vld [vmem:[%s1490 + $0x1d8] sm:$0xff]
        %v1551 = vld [vmem:[%s1490 + $0x1e0] sm:$0xff]
        %v1552 = vld [vmem:[%s1490 + $0x1e8] sm:$0xff]
        %v1553 = vld [vmem:[%s1490 + $0x1f0] sm:$0xff]
        %v1554 = vld [vmem:[%s1490 + $0x1f8] sm:$0xff]
        %v1555 = vld [vmem:[%s1490 + $0x200] sm:$0xff]
        %v1556 = vld [vmem:[%s1490 + $0x208] sm:$0xff]
        %v1557 = vld [vmem:[%s1490 + $0x210] sm:$0xff]
        %v1558 = vld [vmem:[%s1490 + $0x218] sm:$0xff]
        %v1559 = vld [vmem:[%s1490 + $0x220] sm:$0xff]
        %v1560 = vld [vmem:[%s1490 + $0x228] sm:$0xff]
        %v1561 = vld [vmem:[%s1490 + $0x230] sm:$0xff]
        %v1562 = vld [vmem:[%s1490 + $0x238] sm:$0xff]
        %v1563 = vld [vmem:[%s1490 + $0x240] sm:$0xff]
        %v1564 = vld [vmem:[%s1490 + $0x248] sm:$0xff]
        %v1565 = vld [vmem:[%s1490 + $0x250] sm:$0xff]
        %v1566 = vld [vmem:[%s1490 + $0x258] sm:$0xff]
        %v1567 = vld [vmem:[%s1490 + $0x260] sm:$0xff]
        %v1568 = vld [vmem:[%s1490 + $0x268] sm:$0xff]
        %v1569 = vld [vmem:[%s1490 + $0x270] sm:$0xff]
        %v1570 = vld [vmem:[%s1490 + $0x278] sm:$0xff]
        %v1571 = vld [vmem:[%s1490 + $0x280] sm:$0xff]
        %v1572 = vld [vmem:[%s1490 + $0x288] sm:$0xff]
        %v1573 = vld [vmem:[%s1490 + $0x290] sm:$0xff]
        %v1574 = vld [vmem:[%s1490 + $0x298] sm:$0xff]
        %v1575 = vld [vmem:[%s1490 + $0x2a0] sm:$0xff]
        %v1576 = vld [vmem:[%s1490 + $0x2a8] sm:$0xff]
        %v1577 = vld [vmem:[%s1490 + $0x2b0] sm:$0xff]
        %v1578 = vld [vmem:[%s1490 + $0x2b8] sm:$0xff]
        %v1579 = vld [vmem:[%s1490 + $0x2c0] sm:$0xff]
        %v1580 = vld [vmem:[%s1490 + $0x2c8] sm:$0xff]
        %v1581 = vld [vmem:[%s1490 + $0x2d0] sm:$0xff]
        %v1582 = vld [vmem:[%s1490 + $0x2d8] sm:$0xff]
        %v1583 = vld [vmem:[%s1490 + $0x2e0] sm:$0xff]
        %v1584 = vld [vmem:[%s1490 + $0x2e8] sm:$0xff]
        %v1585 = vld [vmem:[%s1490 + $0x2f0] sm:$0xff]
        %v1586 = vld [vmem:[%s1490 + $0x2f8] sm:$0xff]
        %v1587 = vld [vmem:[%s1490 + $0x300] sm:$0xff]
        %v1588 = vld [vmem:[%s1490 + $0x308] sm:$0xff]
        %v1589 = vld [vmem:[%s1490 + $0x310] sm:$0xff]
        %v1590 = vld [vmem:[%s1490 + $0x318] sm:$0xff]
        %v1591 = vld [vmem:[%s1490 + $0x320] sm:$0xff]
        %v1592 = vld [vmem:[%s1490 + $0x328] sm:$0xff]
        %v1593 = vld [vmem:[%s1490 + $0x330] sm:$0xff]
        %v1594 = vld [vmem:[%s1490 + $0x338] sm:$0xff]
        %v1595 = vld [vmem:[%s1490 + $0x340] sm:$0xff]
        %v1596 = vld [vmem:[%s1490 + $0x348] sm:$0xff]
        %v1597 = vld [vmem:[%s1490 + $0x350] sm:$0xff]
        %v1598 = vld [vmem:[%s1490 + $0x358] sm:$0xff]
        %v1599 = vld [vmem:[%s1490 + $0x360] sm:$0xff]
        %v1600 = vld [vmem:[%s1490 + $0x368] sm:$0xff]
        %v1601 = vld [vmem:[%s1490 + $0x370] sm:$0xff]
        %v1602 = vld [vmem:[%s1490 + $0x378] sm:$0xff]
        %v1603 = vld [vmem:[%s1490 + $0x380] sm:$0xff]
        %v1604 = vld [vmem:[%s1490 + $0x388] sm:$0xff]
        %v1605 = vld [vmem:[%s1490 + $0x390] sm:$0xff]
        %v1606 = vld [vmem:[%s1490 + $0x398] sm:$0xff]
        %v1607 = vld [vmem:[%s1490 + $0x3a0] sm:$0xff]
        %v1608 = vld [vmem:[%s1490 + $0x3a8] sm:$0xff]
        %v1609 = vld [vmem:[%s1490 + $0x3b0] sm:$0xff]
        %v1610 = vld [vmem:[%s1490 + $0x3b8] sm:$0xff]
        %v1611 = vld [vmem:[%s1490 + $0x3c0] sm:$0xff]
        %v1612 = vld [vmem:[%s1490 + $0x3c8] sm:$0xff]
        %v1613 = vld [vmem:[%s1490 + $0x3d0] sm:$0xff]
        %v1614 = vld [vmem:[%s1490 + $0x3d8] sm:$0xff]
        %v1615 = vld [vmem:[%s1490 + $0x3e0] sm:$0xff]
        %v1616 = vld [vmem:[%s1490 + $0x3e8] sm:$0xff]
        %v1617 = vld [vmem:[%s1490 + $0x3f0] sm:$0xff]
        %v1618 = vld [vmem:[%s1490 + $0x3f8] sm:$0xff]
        %v1619 = vld [vmem:[%s1490 + $0x400] sm:$0xff]
        %v1620 = vld [vmem:[%s1490 + $0x408] sm:$0xff]
        %v1621 = vld [vmem:[%s1490 + $0x410] sm:$0xff]
        %v1622 = vld [vmem:[%s1490 + $0x418] sm:$0xff]
        %v1623 = vld [vmem:[%s1490 + $0x420] sm:$0xff]
        %v1624 = vld [vmem:[%s1490 + $0x428] sm:$0xff]
        %v1625 = vld [vmem:[%s1490 + $0x430] sm:$0xff]
        %v1626 = vld [vmem:[%s1490 + $0x438] sm:$0xff]
        %v1627 = vld [vmem:[%s1490 + $0x440] sm:$0xff]
        %v1628 = vld [vmem:[%s1490 + $0x448] sm:$0xff]
        %v1629 = vld [vmem:[%s1490 + $0x450] sm:$0xff]
        %v1630 = vld [vmem:[%s1490 + $0x458] sm:$0xff]
        %v1631 = vld [vmem:[%s1490 + $0x460] sm:$0xff]
        %v1632 = vld [vmem:[%s1490 + $0x468] sm:$0xff]
        %v1633 = vld [vmem:[%s1490 + $0x470] sm:$0xff]
        %v1634 = vld [vmem:[%s1490 + $0x478] sm:$0xff]
        %v1635 = vld [vmem:[%s1490 + $0x480] sm:$0xff]
        %v1636 = vld [vmem:[%s1490 + $0x488] sm:$0xff]
        %v1637 = vld [vmem:[%s1490 + $0x490] sm:$0xff]
        %v1638 = vld [vmem:[%s1490 + $0x498] sm:$0xff]
        %v1639 = vld [vmem:[%s1490 + $0x4a0] sm:$0xff]
        %v1640 = vld [vmem:[%s1490 + $0x4a8] sm:$0xff]
        %v1641 = vld [vmem:[%s1490 + $0x4b0] sm:$0xff]
        %v1642 = vld [vmem:[%s1490 + $0x4b8] sm:$0xff]
        %v1643 = vld [vmem:[%s1490 + $0x4c0] sm:$0xff]
        %v1644 = vld [vmem:[%s1490 + $0x4c8] sm:$0xff]
        %v1645 = vld [vmem:[%s1490 + $0x4d0] sm:$0xff]
        %v1646 = vld [vmem:[%s1490 + $0x4d8] sm:$0xff]
        %v1647 = vld [vmem:[%s1490 + $0x4e0] sm:$0xff]
        %v1648 = vld [vmem:[%s1490 + $0x4e8] sm:$0xff]
        %v1649 = vld [vmem:[%s1490 + $0x4f0] sm:$0xff]
        %v1650 = vld [vmem:[%s1490 + $0x4f8] sm:$0xff]
        %v1651 = vld [vmem:[%s1490 + $0x500] sm:$0xff]
        %v1652 = vld [vmem:[%s1490 + $0x508] sm:$0xff]
        %v1653 = vld [vmem:[%s1490 + $0x510] sm:$0xff]
        %v1654 = vld [vmem:[%s1490 + $0x518] sm:$0xff]
        %v1655 = vld [vmem:[%s1490 + $0x520] sm:$0xff]
        %v1656 = vld [vmem:[%s1490 + $0x528] sm:$0xff]
        %v1657 = vld [vmem:[%s1490 + $0x530] sm:$0xf]
        %v1658 = vld [vmem:[%s1490 + $0x538] sm:$0xf]
        %v1660 = vsel %vm1252, %v1657, 0
        %v1663 = vsel %vm1252, %v1658, 0
        %1665 = vmatprep.subr.mxu0 %v1492
        %1666 = vmatpush1.msra.mxu0 %v1491
        %1667 = vmatprep.subr.mxu0 %v1494
        %1668 = vmatpush1.msra.mxu0 %v1493
        %1669 = vmatprep.subr.mxu0 %v1496
        %1670 = vmatpush1.msra.mxu0 %v1495
        %1671 = vmatprep.subr.mxu0 %v1498
        %1672 = vmatpush1.msra.mxu0 %v1497
        %1673 = vmatprep.subr.mxu0 %v1500
        %1674 = vmatpush1.msra.mxu0 %v1499
        %1675 = vmatprep.subr.mxu0 %v1502
        %1676 = vmatpush1.msra.mxu0 %v1501
        %1677 = vmatprep.subr.mxu0 %v1504
        %1678 = vmatpush1.msra.mxu0 %v1503
        %1679 = vmatprep.subr.mxu0 %v1506
        %1680 = vmatpush1.msra.mxu0 %v1505
        %1681 = vmatprep.subr.mxu0 %v1508
        %1682 = vmatpush1.msra.mxu0 %v1507
        %1683 = vmatprep.subr.mxu0 %v1510
        %1684 = vmatpush1.msra.mxu0 %v1509
        %1685 = vmatprep.subr.mxu0 %v1512
        %1686 = vmatpush1.msra.mxu0 %v1511
        %1687 = vmatprep.subr.mxu0 %v1514
        %1688 = vmatpush1.msra.mxu0 %v1513
        %1689 = vmatprep.subr.mxu0 %v1516
        %1690 = vmatpush1.msra.mxu0 %v1515
        %1691 = vmatprep.subr.mxu0 %v1518
        %1692 = vmatpush1.msra.mxu0 %v1517
        %1693 = vmatprep.subr.mxu0 %v1520
        %1694 = vmatpush1.msra.mxu0 %v1519
        %1695 = vmatprep.subr.mxu0 %v1522
        %1696 = vmatpush1.msra.mxu0 %v1521
        %1697 = vmatprep.subr.mxu0 %v1524
        %1698 = vmatpush1.msra.mxu0 %v1523
        %1699 = vmatprep.subr.mxu0 %v1526
        %1700 = vmatpush1.msra.mxu0 %v1525
        %1701 = vmatprep.subr.mxu0 %v1528
        %1702 = vmatpush1.msra.mxu0 %v1527
        %1703 = vmatprep.subr.mxu0 %v1530
        %1704 = vmatpush1.msra.mxu0 %v1529
        %1705 = vmatprep.subr.mxu0 %v1532
        %1706 = vmatpush1.msra.mxu0 %v1531
        %1707 = vmatprep.subr.mxu0 %v1534
        %1708 = vmatpush1.msra.mxu0 %v1533
        %1709 = vmatprep.subr.mxu0 %v1536
        %1710 = vmatpush1.msra.mxu0 %v1535
        %1711 = vmatprep.subr.mxu0 %v1538
        %1712 = vmatpush1.msra.mxu0 %v1537
        %1713 = vmatprep.subr.mxu0 %v1540
        %1714 = vmatpush1.msra.mxu0 %v1539
        %1715 = vmatprep.subr.mxu0 %v1542
        %1716 = vmatpush1.msra.mxu0 %v1541
        %1717 = vmatprep.subr.mxu0 %v1544
        %1718 = vmatpush1.msra.mxu0 %v1543
        %1719 = vmatprep.subr.mxu0 %v1546
        %1720 = vmatpush1.msra.mxu0 %v1545
        %1721 = vmatprep.subr.mxu0 %v1548
        %1722 = vmatpush1.msra.mxu0 %v1547
        %1723 = vmatprep.subr.mxu0 %v1550
        %1724 = vmatpush1.msra.mxu0 %v1549
        %1725 = vmatprep.subr.mxu0 %v1552
        %1726 = vmatpush1.msra.mxu0 %v1551
        %1727 = vmatprep.subr.mxu0 %v1554
        %1728 = vmatpush1.msra.mxu0 %v1553
        %1729 = vmatprep.mubr.f32.mxu0 %v915
        %1730 = vmatmul.mubr.f32.gmra.mrb[0].mxu0 %v913
        %v1731 = vpop.f32.mrb[0].mxu0
        %v1732 = vadd.f32 0.0, %v1731
        %v1733 = vpop.f32.mrb[0].mxu0
        %v1734 = vadd.f32 0.0, %v1733
        %1735 = vmatprep.mubr.f32.mxu0 %v921
        %1736 = vmatmul.mubr.f32.gmra.mrb[0].mxu0 %v919
        %v1737 = vpop.f32.mrb[0].mxu0
        %v1738 = vadd.f32 0.0, %v1737
        %v1739 = vpop.f32.mrb[0].mxu0
        %v1740 = vadd.f32 0.0, %v1739
        %1741 = vdwg.mxu0
        %1742 = vmatprep.subr.mxu0 %v1556
        %1743 = vmatpush1.msra.mxu0 %v1555
        %1744 = vmatprep.subr.mxu0 %v1558
        %1745 = vmatpush1.msra.mxu0 %v1557
        %1746 = vmatprep.subr.mxu0 %v1560
        %1747 = vmatpush1.msra.mxu0 %v1559
        %1748 = vmatprep.subr.mxu0 %v1562
        %1749 = vmatpush1.msra.mxu0 %v1561
        %1750 = vmatprep.subr.mxu0 %v1564
        %1751 = vmatpush1.msra.mxu0 %v1563
        %1752 = vmatprep.subr.mxu0 %v1566
        %1753 = vmatpush1.msra.mxu0 %v1565
        %1754 = vmatprep.subr.mxu0 %v1568
        %1755 = vmatpush1.msra.mxu0 %v1567
        %1756 = vmatprep.subr.mxu0 %v1570
        %1757 = vmatpush1.msra.mxu0 %v1569
        %1758 = vmatprep.subr.mxu0 %v1572
        %1759 = vmatpush1.msra.mxu0 %v1571
        %1760 = vmatprep.subr.mxu0 %v1574
        %1761 = vmatpush1.msra.mxu0 %v1573
        %1762 = vmatprep.subr.mxu0 %v1576
        %1763 = vmatpush1.msra.mxu0 %v1575
        %1764 = vmatprep.subr.mxu0 %v1578
        %1765 = vmatpush1.msra.mxu0 %v1577
        %1766 = vmatprep.subr.mxu0 %v1580
        %1767 = vmatpush1.msra.mxu0 %v1579
        %1768 = vmatprep.subr.mxu0 %v1582
        %1769 = vmatpush1.msra.mxu0 %v1581
        %1770 = vmatprep.subr.mxu0 %v1584
        %1771 = vmatpush1.msra.mxu0 %v1583
        %1772 = vmatprep.subr.mxu0 %v1586
        %1773 = vmatpush1.msra.mxu0 %v1585
        %1774 = vmatprep.subr.mxu0 %v1588
        %1775 = vmatpush1.msra.mxu0 %v1587
        %1776 = vmatprep.subr.mxu0 %v1590
        %1777 = vmatpush1.msra.mxu0 %v1589
        %1778 = vmatprep.subr.mxu0 %v1592
        %1779 = vmatpush1.msra.mxu0 %v1591
        %1780 = vmatprep.subr.mxu0 %v1594
        %1781 = vmatpush1.msra.mxu0 %v1593
        %1782 = vmatprep.subr.mxu0 %v1596
        %1783 = vmatpush1.msra.mxu0 %v1595
        %1784 = vmatprep.subr.mxu0 %v1598
        %1785 = vmatpush1.msra.mxu0 %v1597
        %1786 = vmatprep.subr.mxu0 %v1600
        %1787 = vmatpush1.msra.mxu0 %v1599
        %1788 = vmatprep.subr.mxu0 %v1602
        %1789 = vmatpush1.msra.mxu0 %v1601
        %1790 = vmatprep.subr.mxu0 %v1604
        %1791 = vmatpush1.msra.mxu0 %v1603
        %1792 = vmatprep.subr.mxu0 %v1606
        %1793 = vmatpush1.msra.mxu0 %v1605
        %1794 = vmatprep.subr.mxu0 %v1608
        %1795 = vmatpush1.msra.mxu0 %v1607
        %1796 = vmatprep.subr.mxu0 %v1610
        %1797 = vmatpush1.msra.mxu0 %v1609
        %1798 = vmatprep.subr.mxu0 %v1612
        %1799 = vmatpush1.msra.mxu0 %v1611
        %1800 = vmatprep.subr.mxu0 %v1614
        %1801 = vmatpush1.msra.mxu0 %v1613
        %1802 = vmatprep.subr.mxu0 %v1616
        %1803 = vmatpush1.msra.mxu0 %v1615
        %1804 = vmatprep.subr.mxu0 %v1618
        %1805 = vmatpush1.msra.mxu0 %v1617
        %1806 = vmatprep.mubr.f32.mxu0 %v992
        %1807 = vmatmul.mubr.f32.gmra.mrb[0].mxu0 %v990
        %v1808 = vpop.f32.mrb[0].mxu0
        %v1809 = vadd.f32 %v1732, %v1808
        %v1810 = vpop.f32.mrb[0].mxu0
        %v1811 = vadd.f32 %v1734, %v1810
        %1812 = vmatprep.mubr.f32.mxu0 %v998
        %1813 = vmatmul.mubr.f32.gmra.mrb[0].mxu0 %v996
        %v1814 = vpop.f32.mrb[0].mxu0
        %v1815 = vadd.f32 %v1738, %v1814
        %v1816 = vpop.f32.mrb[0].mxu0
        %v1817 = vadd.f32 %v1740, %v1816
        %1818 = vdwg.mxu0
        %1819 = vmatprep.subr.mxu0 %v1620
        %1820 = vmatpush1.msra.mxu0 %v1619
        %1821 = vmatprep.subr.mxu0 %v1622
        %1822 = vmatpush1.msra.mxu0 %v1621
        %1823 = vmatprep.subr.mxu0 %v1624
        %1824 = vmatpush1.msra.mxu0 %v1623
        %1825 = vmatprep.subr.mxu0 %v1626
        %1826 = vmatpush1.msra.mxu0 %v1625
        %1827 = vmatprep.subr.mxu0 %v1628
        %1828 = vmatpush1.msra.mxu0 %v1627
        %1829 = vmatprep.subr.mxu0 %v1630
        %1830 = vmatpush1.msra.mxu0 %v1629
        %1831 = vmatprep.subr.mxu0 %v1632
        %1832 = vmatpush1.msra.mxu0 %v1631
        %1833 = vmatprep.subr.mxu0 %v1634
        %1834 = vmatpush1.msra.mxu0 %v1633
        %1835 = vmatprep.subr.mxu0 %v1636
        %1836 = vmatpush1.msra.mxu0 %v1635
        %1837 = vmatprep.subr.mxu0 %v1638
        %1838 = vmatpush1.msra.mxu0 %v1637
        %1839 = vmatprep.subr.mxu0 %v1640
        %1840 = vmatpush1.msra.mxu0 %v1639
        %1841 = vmatprep.subr.mxu0 %v1642
        %1842 = vmatpush1.msra.mxu0 %v1641
        %1843 = vmatprep.subr.mxu0 %v1644
        %1844 = vmatpush1.msra.mxu0 %v1643
        %1845 = vmatprep.subr.mxu0 %v1646
        %1846 = vmatpush1.msra.mxu0 %v1645
        %1847 = vmatprep.subr.mxu0 %v1648
        %1848 = vmatpush1.msra.mxu0 %v1647
        %1849 = vmatprep.subr.mxu0 %v1650
        %1850 = vmatpush1.msra.mxu0 %v1649
        %1851 = vmatprep.subr.mxu0 %v1652
        %1852 = vmatpush1.msra.mxu0 %v1651
        %1853 = vmatprep.subr.mxu0 %v1654
        %1854 = vmatpush1.msra.mxu0 %v1653
        %1855 = vmatprep.subr.mxu0 %v1656
        %1856 = vmatpush1.msra.mxu0 %v1655
        %1857 = vmatprep.subr.mxu0 %v1663
        %1858 = vmatpush1.msra.mxu0 %v1660
        %1859 = vmatprep.subr.mxu0 0.0
        %1860 = vmatpush1.msra.mxu0 0.0
        %1861 = vmatprep.subr.mxu0 0.0
        %1862 = vmatpush1.msra.mxu0 0.0
        %1863 = vmatprep.subr.mxu0 0.0
        %1864 = vmatpush1.msra.mxu0 0.0
        %1865 = vmatprep.subr.mxu0 0.0
        %1866 = vmatpush1.msra.mxu0 0.0
        %1867 = vmatprep.subr.mxu0 0.0
        %1868 = vmatpush1.msra.mxu0 0.0
        %1869 = vmatprep.subr.mxu0 0.0
        %1870 = vmatpush1.msra.mxu0 0.0
        %1871 = vmatprep.subr.mxu0 0.0
        %1872 = vmatpush1.msra.mxu0 0.0
        %1873 = vmatprep.subr.mxu0 0.0
        %1874 = vmatpush1.msra.mxu0 0.0
        %1875 = vmatprep.subr.mxu0 0.0
        %1876 = vmatpush1.msra.mxu0 0.0
        %1877 = vmatprep.subr.mxu0 0.0
        %1878 = vmatpush1.msra.mxu0 0.0
        %1879 = vmatprep.subr.mxu0 0.0
        %1880 = vmatpush1.msra.mxu0 0.0
        %1881 = vmatprep.subr.mxu0 0.0
        %1882 = vmatpush1.msra.mxu0 0.0
        %1883 = vmatprep.mubr.f32.mxu0 %v1247
        %1884 = vmatmul.mubr.f32.gmra.mrb[0].mxu0 %v1067
        %v1885 = vpop.f32.mrb[0].mxu0
        %v1886 = vadd.f32 %v1809, %v1885
        %v1887 = vpop.f32.mrb[0].mxu0
        %v1888 = vadd.f32 %v1811, %v1887
        %1889 = vmatprep.mubr.f32.mxu0 %v1250
        %1890 = vmatmul.mubr.f32.gmra.mrb[0].mxu0 %v1073
        %v1891 = vpop.f32.mrb[0].mxu0
        %v1892 = vadd.f32 %v1815, %v1891
        %v1893 = vpop.f32.mrb[0].mxu0
        %v1894 = vadd.f32 %v1817, %v1893
        %1895 = vdwg.mxu0
        %v1896 = vmax.f32 %v1480, %v1886
        %v1897 = vmax.f32 %v1482, %v1888
        %v1898 = vmax.f32 %v1486, %v1892
        %v1899 = vmax.f32 %v1488, %v1894
        %s1900 = scalar_lea.vmem [#allocation12], 2688
        %v1901 = vld [vmem:[%s1900] sm:$0xff]
        %v1902 = vld [vmem:[%s1900 + $0x8] sm:$0xff]
        %v1903 = vld [vmem:[%s1900 + $0x10] sm:$0xff]
        %v1904 = vld [vmem:[%s1900 + $0x18] sm:$0xff]
        %v1905 = vld [vmem:[%s1900 + $0x20] sm:$0xff]
        %v1906 = vld [vmem:[%s1900 + $0x28] sm:$0xff]
        %v1907 = vld [vmem:[%s1900 + $0x30] sm:$0xff]
        %v1908 = vld [vmem:[%s1900 + $0x38] sm:$0xff]
        %v1909 = vld [vmem:[%s1900 + $0x40] sm:$0xff]
        %v1910 = vld [vmem:[%s1900 + $0x48] sm:$0xff]
        %v1911 = vld [vmem:[%s1900 + $0x50] sm:$0xff]
        %v1912 = vld [vmem:[%s1900 + $0x58] sm:$0xff]
        %v1913 = vld [vmem:[%s1900 + $0x60] sm:$0xff]
        %v1914 = vld [vmem:[%s1900 + $0x68] sm:$0xff]
        %v1915 = vld [vmem:[%s1900 + $0x70] sm:$0xff]
        %v1916 = vld [vmem:[%s1900 + $0x78] sm:$0xff]
        %v1917 = vld [vmem:[%s1900 + $0x80] sm:$0xff]
        %v1918 = vld [vmem:[%s1900 + $0x88] sm:$0xff]
        %v1919 = vld [vmem:[%s1900 + $0x90] sm:$0xff]
        %v1920 = vld [vmem:[%s1900 + $0x98] sm:$0xff]
        %v1921 = vld [vmem:[%s1900 + $0xa0] sm:$0xff]
        %v1922 = vld [vmem:[%s1900 + $0xa8] sm:$0xff]
        %v1923 = vld [vmem:[%s1900 + $0xb0] sm:$0xff]
        %v1924 = vld [vmem:[%s1900 + $0xb8] sm:$0xff]
        %v1925 = vld [vmem:[%s1900 + $0xc0] sm:$0xff]
        %v1926 = vld [vmem:[%s1900 + $0xc8] sm:$0xff]
        %v1927 = vld [vmem:[%s1900 + $0xd0] sm:$0xff]
        %v1928 = vld [vmem:[%s1900 + $0xd8] sm:$0xff]
        %v1929 = vld [vmem:[%s1900 + $0xe0] sm:$0xff]
        %v1930 = vld [vmem:[%s1900 + $0xe8] sm:$0xff]
        %v1931 = vld [vmem:[%s1900 + $0xf0] sm:$0xff]
        %v1932 = vld [vmem:[%s1900 + $0xf8] sm:$0xff]
        %v1933 = vld [vmem:[%s1900 + $0x100] sm:$0xff]
        %v1934 = vld [vmem:[%s1900 + $0x108] sm:$0xff]
        %v1935 = vld [vmem:[%s1900 + $0x110] sm:$0xff]
        %v1936 = vld [vmem:[%s1900 + $0x118] sm:$0xff]
        %v1937 = vld [vmem:[%s1900 + $0x120] sm:$0xff]
        %v1938 = vld [vmem:[%s1900 + $0x128] sm:$0xff]
        %v1939 = vld [vmem:[%s1900 + $0x130] sm:$0xff]
        %v1940 = vld [vmem:[%s1900 + $0x138] sm:$0xff]
        %v1941 = vld [vmem:[%s1900 + $0x140] sm:$0xff]
        %v1942 = vld [vmem:[%s1900 + $0x148] sm:$0xff]
        %v1943 = vld [vmem:[%s1900 + $0x150] sm:$0xff]
        %v1944 = vld [vmem:[%s1900 + $0x158] sm:$0xff]
        %v1945 = vld [vmem:[%s1900 + $0x160] sm:$0xff]
        %v1946 = vld [vmem:[%s1900 + $0x168] sm:$0xff]
        %v1947 = vld [vmem:[%s1900 + $0x170] sm:$0xff]
        %v1948 = vld [vmem:[%s1900 + $0x178] sm:$0xff]
        %v1949 = vld [vmem:[%s1900 + $0x180] sm:$0xff]
        %v1950 = vld [vmem:[%s1900 + $0x188] sm:$0xff]
        %v1951 = vld [vmem:[%s1900 + $0x190] sm:$0xff]
        %v1952 = vld [vmem:[%s1900 + $0x198] sm:$0xff]
        %v1953 = vld [vmem:[%s1900 + $0x1a0] sm:$0xff]
        %v1954 = vld [vmem:[%s1900 + $0x1a8] sm:$0xff]
        %v1955 = vld [vmem:[%s1900 + $0x1b0] sm:$0xff]
        %v1956 = vld [vmem:[%s1900 + $0x1b8] sm:$0xff]
        %v1957 = vld [vmem:[%s1900 + $0x1c0] sm:$0xff]
        %v1958 = vld [vmem:[%s1900 + $0x1c8] sm:$0xff]
        %v1959 = vld [vmem:[%s1900 + $0x1d0] sm:$0xff]
        %v1960 = vld [vmem:[%s1900 + $0x1d8] sm:$0xff]
        %v1961 = vld [vmem:[%s1900 + $0x1e0] sm:$0xff]
        %v1962 = vld [vmem:[%s1900 + $0x1e8] sm:$0xff]
        %v1963 = vld [vmem:[%s1900 + $0x1f0] sm:$0xff]
        %v1964 = vld [vmem:[%s1900 + $0x1f8] sm:$0xff]
        %v1965 = vld [vmem:[%s1900 + $0x200] sm:$0xff]
        %v1966 = vld [vmem:[%s1900 + $0x208] sm:$0xff]
        %v1967 = vld [vmem:[%s1900 + $0x210] sm:$0xff]
        %v1968 = vld [vmem:[%s1900 + $0x218] sm:$0xff]
        %v1969 = vld [vmem:[%s1900 + $0x220] sm:$0xff]
        %v1970 = vld [vmem:[%s1900 + $0x228] sm:$0xff]
        %v1971 = vld [vmem:[%s1900 + $0x230] sm:$0xff]
        %v1972 = vld [vmem:[%s1900 + $0x238] sm:$0xff]
        %v1973 = vld [vmem:[%s1900 + $0x240] sm:$0xff]
        %v1974 = vld [vmem:[%s1900 + $0x248] sm:$0xff]
        %v1975 = vld [vmem:[%s1900 + $0x250] sm:$0xff]
        %v1976 = vld [vmem:[%s1900 + $0x258] sm:$0xff]
        %v1977 = vld [vmem:[%s1900 + $0x260] sm:$0xff]
        %v1978 = vld [vmem:[%s1900 + $0x268] sm:$0xff]
        %v1979 = vld [vmem:[%s1900 + $0x270] sm:$0xff]
        %v1980 = vld [vmem:[%s1900 + $0x278] sm:$0xff]
        %v1981 = vld [vmem:[%s1900 + $0x280] sm:$0xff]
        %v1982 = vld [vmem:[%s1900 + $0x288] sm:$0xff]
        %v1983 = vld [vmem:[%s1900 + $0x290] sm:$0xff]
        %v1984 = vld [vmem:[%s1900 + $0x298] sm:$0xff]
        %v1985 = vld [vmem:[%s1900 + $0x2a0] sm:$0xff]
        %v1986 = vld [vmem:[%s1900 + $0x2a8] sm:$0xff]
        %v1987 = vld [vmem:[%s1900 + $0x2b0] sm:$0xff]
        %v1988 = vld [vmem:[%s1900 + $0x2b8] sm:$0xff]
        %v1989 = vld [vmem:[%s1900 + $0x2c0] sm:$0xff]
        %v1990 = vld [vmem:[%s1900 + $0x2c8] sm:$0xff]
        %v1991 = vld [vmem:[%s1900 + $0x2d0] sm:$0xff]
        %v1992 = vld [vmem:[%s1900 + $0x2d8] sm:$0xff]
        %v1993 = vld [vmem:[%s1900 + $0x2e0] sm:$0xff]
        %v1994 = vld [vmem:[%s1900 + $0x2e8] sm:$0xff]
        %v1995 = vld [vmem:[%s1900 + $0x2f0] sm:$0xff]
        %v1996 = vld [vmem:[%s1900 + $0x2f8] sm:$0xff]
        %v1997 = vld [vmem:[%s1900 + $0x300] sm:$0xff]
        %v1998 = vld [vmem:[%s1900 + $0x308] sm:$0xff]
        %v1999 = vld [vmem:[%s1900 + $0x310] sm:$0xff]
        %v2000 = vld [vmem:[%s1900 + $0x318] sm:$0xff]
        %v2001 = vld [vmem:[%s1900 + $0x320] sm:$0xff]
        %v2002 = vld [vmem:[%s1900 + $0x328] sm:$0xff]
        %v2003 = vld [vmem:[%s1900 + $0x330] sm:$0xff]
        %v2004 = vld [vmem:[%s1900 + $0x338] sm:$0xff]
        %v2005 = vld [vmem:[%s1900 + $0x340] sm:$0xff]
        %v2006 = vld [vmem:[%s1900 + $0x348] sm:$0xff]
        %v2007 = vld [vmem:[%s1900 + $0x350] sm:$0xff]
        %v2008 = vld [vmem:[%s1900 + $0x358] sm:$0xff]
        %v2009 = vld [vmem:[%s1900 + $0x360] sm:$0xff]
        %v2010 = vld [vmem:[%s1900 + $0x368] sm:$0xff]
        %v2011 = vld [vmem:[%s1900 + $0x370] sm:$0xff]
        %v2012 = vld [vmem:[%s1900 + $0x378] sm:$0xff]
        %v2013 = vld [vmem:[%s1900 + $0x380] sm:$0xff]
        %v2014 = vld [vmem:[%s1900 + $0x388] sm:$0xff]
        %v2015 = vld [vmem:[%s1900 + $0x390] sm:$0xff]
        %v2016 = vld [vmem:[%s1900 + $0x398] sm:$0xff]
        %v2017 = vld [vmem:[%s1900 + $0x3a0] sm:$0xff]
        %v2018 = vld [vmem:[%s1900 + $0x3a8] sm:$0xff]
        %v2019 = vld [vmem:[%s1900 + $0x3b0] sm:$0xff]
        %v2020 = vld [vmem:[%s1900 + $0x3b8] sm:$0xff]
        %v2021 = vld [vmem:[%s1900 + $0x3c0] sm:$0xff]
        %v2022 = vld [vmem:[%s1900 + $0x3c8] sm:$0xff]
        %v2023 = vld [vmem:[%s1900 + $0x3d0] sm:$0xff]
        %v2024 = vld [vmem:[%s1900 + $0x3d8] sm:$0xff]
        %v2025 = vld [vmem:[%s1900 + $0x3e0] sm:$0xff]
        %v2026 = vld [vmem:[%s1900 + $0x3e8] sm:$0xff]
        %v2027 = vld [vmem:[%s1900 + $0x3f0] sm:$0xff]
        %v2028 = vld [vmem:[%s1900 + $0x3f8] sm:$0xff]
        %v2029 = vld [vmem:[%s1900 + $0x400] sm:$0xff]
        %v2030 = vld [vmem:[%s1900 + $0x408] sm:$0xff]
        %v2031 = vld [vmem:[%s1900 + $0x410] sm:$0xff]
        %v2032 = vld [vmem:[%s1900 + $0x418] sm:$0xff]
        %v2033 = vld [vmem:[%s1900 + $0x420] sm:$0xff]
        %v2034 = vld [vmem:[%s1900 + $0x428] sm:$0xff]
        %v2035 = vld [vmem:[%s1900 + $0x430] sm:$0xff]
        %v2036 = vld [vmem:[%s1900 + $0x438] sm:$0xff]
        %v2037 = vld [vmem:[%s1900 + $0x440] sm:$0xff]
        %v2038 = vld [vmem:[%s1900 + $0x448] sm:$0xff]
        %v2039 = vld [vmem:[%s1900 + $0x450] sm:$0xff]
        %v2040 = vld [vmem:[%s1900 + $0x458] sm:$0xff]
        %v2041 = vld [vmem:[%s1900 + $0x460] sm:$0xff]
        %v2042 = vld [vmem:[%s1900 + $0x468] sm:$0xff]
        %v2043 = vld [vmem:[%s1900 + $0x470] sm:$0xff]
        %v2044 = vld [vmem:[%s1900 + $0x478] sm:$0xff]
        %v2045 = vld [vmem:[%s1900 + $0x480] sm:$0xff]
        %v2046 = vld [vmem:[%s1900 + $0x488] sm:$0xff]
        %v2047 = vld [vmem:[%s1900 + $0x490] sm:$0xff]
        %v2048 = vld [vmem:[%s1900 + $0x498] sm:$0xff]
        %v2049 = vld [vmem:[%s1900 + $0x4a0] sm:$0xff]
        %v2050 = vld [vmem:[%s1900 + $0x4a8] sm:$0xff]
        %v2051 = vld [vmem:[%s1900 + $0x4b0] sm:$0xff]
        %v2052 = vld [vmem:[%s1900 + $0x4b8] sm:$0xff]
        %v2053 = vld [vmem:[%s1900 + $0x4c0] sm:$0xff]
        %v2054 = vld [vmem:[%s1900 + $0x4c8] sm:$0xff]
        %v2055 = vld [vmem:[%s1900 + $0x4d0] sm:$0xff]
        %v2056 = vld [vmem:[%s1900 + $0x4d8] sm:$0xff]
        %v2057 = vld [vmem:[%s1900 + $0x4e0] sm:$0xff]
        %v2058 = vld [vmem:[%s1900 + $0x4e8] sm:$0xff]
        %v2059 = vld [vmem:[%s1900 + $0x4f0] sm:$0xff]
        %v2060 = vld [vmem:[%s1900 + $0x4f8] sm:$0xff]
        %v2061 = vld [vmem:[%s1900 + $0x500] sm:$0xff]
        %v2062 = vld [vmem:[%s1900 + $0x508] sm:$0xff]
        %v2063 = vld [vmem:[%s1900 + $0x510] sm:$0xff]
        %v2064 = vld [vmem:[%s1900 + $0x518] sm:$0xff]
        %v2065 = vld [vmem:[%s1900 + $0x520] sm:$0xff]
        %v2066 = vld [vmem:[%s1900 + $0x528] sm:$0xff]
        %v2067 = vld [vmem:[%s1900 + $0x530] sm:$0xf]
        %v2068 = vld [vmem:[%s1900 + $0x538] sm:$0xf]
        %v2070 = vsel %vm1252, %v2067, 0
        %v2073 = vsel %vm1252, %v2068, 0
        %2075 = vmatprep.subr.mxu0 %v1902
        %2076 = vmatpush1.msra.mxu0 %v1901
        %2077 = vmatprep.subr.mxu0 %v1904
        %2078 = vmatpush1.msra.mxu0 %v1903
        %2079 = vmatprep.subr.mxu0 %v1906
        %2080 = vmatpush1.msra.mxu0 %v1905
        %2081 = vmatprep.subr.mxu0 %v1908
        %2082 = vmatpush1.msra.mxu0 %v1907
        %2083 = vmatprep.subr.mxu0 %v1910
        %2084 = vmatpush1.msra.mxu0 %v1909
        %2085 = vmatprep.subr.mxu0 %v1912
        %2086 = vmatpush1.msra.mxu0 %v1911
        %2087 = vmatprep.subr.mxu0 %v1914
        %2088 = vmatpush1.msra.mxu0 %v1913
        %2089 = vmatprep.subr.mxu0 %v1916
        %2090 = vmatpush1.msra.mxu0 %v1915
        %2091 = vmatprep.subr.mxu0 %v1918
        %2092 = vmatpush1.msra.mxu0 %v1917
        %2093 = vmatprep.subr.mxu0 %v1920
        %2094 = vmatpush1.msra.mxu0 %v1919
        %2095 = vmatprep.subr.mxu0 %v1922
        %2096 = vmatpush1.msra.mxu0 %v1921
        %2097 = vmatprep.subr.mxu0 %v1924
        %2098 = vmatpush1.msra.mxu0 %v1923
        %2099 = vmatprep.subr.mxu0 %v1926
        %2100 = vmatpush1.msra.mxu0 %v1925
        %2101 = vmatprep.subr.mxu0 %v1928
        %2102 = vmatpush1.msra.mxu0 %v1927
        %2103 = vmatprep.subr.mxu0 %v1930
        %2104 = vmatpush1.msra.mxu0 %v1929
        %2105 = vmatprep.subr.mxu0 %v1932
        %2106 = vmatpush1.msra.mxu0 %v1931
        %2107 = vmatprep.subr.mxu0 %v1934
        %2108 = vmatpush1.msra.mxu0 %v1933
        %2109 = vmatprep.subr.mxu0 %v1936
        %2110 = vmatpush1.msra.mxu0 %v1935
        %2111 = vmatprep.subr.mxu0 %v1938
        %2112 = vmatpush1.msra.mxu0 %v1937
        %2113 = vmatprep.subr.mxu0 %v1940
        %2114 = vmatpush1.msra.mxu0 %v1939
        %2115 = vmatprep.subr.mxu0 %v1942
        %2116 = vmatpush1.msra.mxu0 %v1941
        %2117 = vmatprep.subr.mxu0 %v1944
        %2118 = vmatpush1.msra.mxu0 %v1943
        %2119 = vmatprep.subr.mxu0 %v1946
        %2120 = vmatpush1.msra.mxu0 %v1945
        %2121 = vmatprep.subr.mxu0 %v1948
        %2122 = vmatpush1.msra.mxu0 %v1947
        %2123 = vmatprep.subr.mxu0 %v1950
        %2124 = vmatpush1.msra.mxu0 %v1949
        %2125 = vmatprep.subr.mxu0 %v1952
        %2126 = vmatpush1.msra.mxu0 %v1951
        %2127 = vmatprep.subr.mxu0 %v1954
        %2128 = vmatpush1.msra.mxu0 %v1953
        %2129 = vmatprep.subr.mxu0 %v1956
        %2130 = vmatpush1.msra.mxu0 %v1955
        %2131 = vmatprep.subr.mxu0 %v1958
        %2132 = vmatpush1.msra.mxu0 %v1957
        %2133 = vmatprep.subr.mxu0 %v1960
        %2134 = vmatpush1.msra.mxu0 %v1959
        %2135 = vmatprep.subr.mxu0 %v1962
        %2136 = vmatpush1.msra.mxu0 %v1961
        %2137 = vmatprep.subr.mxu0 %v1964
        %2138 = vmatpush1.msra.mxu0 %v1963
        %2139 = vmatprep.mubr.f32.mxu0 %v915
        %2140 = vmatmul.mubr.f32.gmra.mrb[0].mxu0 %v913
        %v2141 = vpop.f32.mrb[0].mxu0
        %v2142 = vadd.f32 0.0, %v2141
        %v2143 = vpop.f32.mrb[0].mxu0
        %v2144 = vadd.f32 0.0, %v2143
        %2145 = vmatprep.mubr.f32.mxu0 %v921
        %2146 = vmatmul.mubr.f32.gmra.mrb[0].mxu0 %v919
        %v2147 = vpop.f32.mrb[0].mxu0
        %v2148 = vadd.f32 0.0, %v2147
        %v2149 = vpop.f32.mrb[0].mxu0
        %v2150 = vadd.f32 0.0, %v2149
        %2151 = vdwg.mxu0
        %2152 = vmatprep.subr.mxu0 %v1966
        %2153 = vmatpush1.msra.mxu0 %v1965
        %2154 = vmatprep.subr.mxu0 %v1968
        %2155 = vmatpush1.msra.mxu0 %v1967
        %2156 = vmatprep.subr.mxu0 %v1970
        %2157 = vmatpush1.msra.mxu0 %v1969
        %2158 = vmatprep.subr.mxu0 %v1972
        %2159 = vmatpush1.msra.mxu0 %v1971
        %2160 = vmatprep.subr.mxu0 %v1974
        %2161 = vmatpush1.msra.mxu0 %v1973
        %2162 = vmatprep.subr.mxu0 %v1976
        %2163 = vmatpush1.msra.mxu0 %v1975
        %2164 = vmatprep.subr.mxu0 %v1978
        %2165 = vmatpush1.msra.mxu0 %v1977
        %2166 = vmatprep.subr.mxu0 %v1980
        %2167 = vmatpush1.msra.mxu0 %v1979
        %2168 = vmatprep.subr.mxu0 %v1982
        %2169 = vmatpush1.msra.mxu0 %v1981
        %2170 = vmatprep.subr.mxu0 %v1984
        %2171 = vmatpush1.msra.mxu0 %v1983
        %2172 = vmatprep.subr.mxu0 %v1986
        %2173 = vmatpush1.msra.mxu0 %v1985
        %2174 = vmatprep.subr.mxu0 %v1988
        %2175 = vmatpush1.msra.mxu0 %v1987
        %2176 = vmatprep.subr.mxu0 %v1990
        %2177 = vmatpush1.msra.mxu0 %v1989
        %2178 = vmatprep.subr.mxu0 %v1992
        %2179 = vmatpush1.msra.mxu0 %v1991
        %2180 = vmatprep.subr.mxu0 %v1994
        %2181 = vmatpush1.msra.mxu0 %v1993
        %2182 = vmatprep.subr.mxu0 %v1996
        %2183 = vmatpush1.msra.mxu0 %v1995
        %2184 = vmatprep.subr.mxu0 %v1998
        %2185 = vmatpush1.msra.mxu0 %v1997
        %2186 = vmatprep.subr.mxu0 %v2000
        %2187 = vmatpush1.msra.mxu0 %v1999
        %2188 = vmatprep.subr.mxu0 %v2002
        %2189 = vmatpush1.msra.mxu0 %v2001
        %2190 = vmatprep.subr.mxu0 %v2004
        %2191 = vmatpush1.msra.mxu0 %v2003
        %2192 = vmatprep.subr.mxu0 %v2006
        %2193 = vmatpush1.msra.mxu0 %v2005
        %2194 = vmatprep.subr.mxu0 %v2008
        %2195 = vmatpush1.msra.mxu0 %v2007
        %2196 = vmatprep.subr.mxu0 %v2010
        %2197 = vmatpush1.msra.mxu0 %v2009
        %2198 = vmatprep.subr.mxu0 %v2012
        %2199 = vmatpush1.msra.mxu0 %v2011
        %2200 = vmatprep.subr.mxu0 %v2014
        %2201 = vmatpush1.msra.mxu0 %v2013
        %2202 = vmatprep.subr.mxu0 %v2016
        %2203 = vmatpush1.msra.mxu0 %v2015
        %2204 = vmatprep.subr.mxu0 %v2018
        %2205 = vmatpush1.msra.mxu0 %v2017
        %2206 = vmatprep.subr.mxu0 %v2020
        %2207 = vmatpush1.msra.mxu0 %v2019
        %2208 = vmatprep.subr.mxu0 %v2022
        %2209 = vmatpush1.msra.mxu0 %v2021
        %2210 = vmatprep.subr.mxu0 %v2024
        %2211 = vmatpush1.msra.mxu0 %v2023
        %2212 = vmatprep.subr.mxu0 %v2026
        %2213 = vmatpush1.msra.mxu0 %v2025
        %2214 = vmatprep.subr.mxu0 %v2028
        %2215 = vmatpush1.msra.mxu0 %v2027
        %2216 = vmatprep.mubr.f32.mxu0 %v992
        %2217 = vmatmul.mubr.f32.gmra.mrb[0].mxu0 %v990
        %v2218 = vpop.f32.mrb[0].mxu0
        %v2219 = vadd.f32 %v2142, %v2218
        %v2220 = vpop.f32.mrb[0].mxu0
        %v2221 = vadd.f32 %v2144, %v2220
        %2222 = vmatprep.mubr.f32.mxu0 %v998
        %2223 = vmatmul.mubr.f32.gmra.mrb[0].mxu0 %v996
        %v2224 = vpop.f32.mrb[0].mxu0
        %v2225 = vadd.f32 %v2148, %v2224
        %v2226 = vpop.f32.mrb[0].mxu0
        %v2227 = vadd.f32 %v2150, %v2226
        %2228 = vdwg.mxu0
        %2229 = vmatprep.subr.mxu0 %v2030
        %2230 = vmatpush1.msra.mxu0 %v2029
        %2231 = vmatprep.subr.mxu0 %v2032
        %2232 = vmatpush1.msra.mxu0 %v2031
        %2233 = vmatprep.subr.mxu0 %v2034
        %2234 = vmatpush1.msra.mxu0 %v2033
        %2235 = vmatprep.subr.mxu0 %v2036
        %2236 = vmatpush1.msra.mxu0 %v2035
        %2237 = vmatprep.subr.mxu0 %v2038
        %2238 = vmatpush1.msra.mxu0 %v2037
        %2239 = vmatprep.subr.mxu0 %v2040
        %2240 = vmatpush1.msra.mxu0 %v2039
        %2241 = vmatprep.subr.mxu0 %v2042
        %2242 = vmatpush1.msra.mxu0 %v2041
        %2243 = vmatprep.subr.mxu0 %v2044
        %2244 = vmatpush1.msra.mxu0 %v2043
        %2245 = vmatprep.subr.mxu0 %v2046
        %2246 = vmatpush1.msra.mxu0 %v2045
        %2247 = vmatprep.subr.mxu0 %v2048
        %2248 = vmatpush1.msra.mxu0 %v2047
        %2249 = vmatprep.subr.mxu0 %v2050
        %2250 = vmatpush1.msra.mxu0 %v2049
        %2251 = vmatprep.subr.mxu0 %v2052
        %2252 = vmatpush1.msra.mxu0 %v2051
        %2253 = vmatprep.subr.mxu0 %v2054
        %2254 = vmatpush1.msra.mxu0 %v2053
        %2255 = vmatprep.subr.mxu0 %v2056
        %2256 = vmatpush1.msra.mxu0 %v2055
        %2257 = vmatprep.subr.mxu0 %v2058
        %2258 = vmatpush1.msra.mxu0 %v2057
        %2259 = vmatprep.subr.mxu0 %v2060
        %2260 = vmatpush1.msra.mxu0 %v2059
        %2261 = vmatprep.subr.mxu0 %v2062
        %2262 = vmatpush1.msra.mxu0 %v2061
        %2263 = vmatprep.subr.mxu0 %v2064
        %2264 = vmatpush1.msra.mxu0 %v2063
        %2265 = vmatprep.subr.mxu0 %v2066
        %2266 = vmatpush1.msra.mxu0 %v2065
        %2267 = vmatprep.subr.mxu0 %v2073
        %2268 = vmatpush1.msra.mxu0 %v2070
        %2269 = vmatprep.subr.mxu0 0.0
        %2270 = vmatpush1.msra.mxu0 0.0
        %2271 = vmatprep.subr.mxu0 0.0
        %2272 = vmatpush1.msra.mxu0 0.0
        %2273 = vmatprep.subr.mxu0 0.0
        %2274 = vmatpush1.msra.mxu0 0.0
        %2275 = vmatprep.subr.mxu0 0.0
        %2276 = vmatpush1.msra.mxu0 0.0
        %2277 = vmatprep.subr.mxu0 0.0
        %2278 = vmatpush1.msra.mxu0 0.0
        %2279 = vmatprep.subr.mxu0 0.0
        %2280 = vmatpush1.msra.mxu0 0.0
        %2281 = vmatprep.subr.mxu0 0.0
        %2282 = vmatpush1.msra.mxu0 0.0
        %2283 = vmatprep.subr.mxu0 0.0
        %2284 = vmatpush1.msra.mxu0 0.0
        %2285 = vmatprep.subr.mxu0 0.0
        %2286 = vmatpush1.msra.mxu0 0.0
        %2287 = vmatprep.subr.mxu0 0.0
        %2288 = vmatpush1.msra.mxu0 0.0
        %2289 = vmatprep.subr.mxu0 0.0
        %2290 = vmatpush1.msra.mxu0 0.0
        %2291 = vmatprep.subr.mxu0 0.0
        %2292 = vmatpush1.msra.mxu0 0.0
        %2293 = vmatprep.mubr.f32.mxu0 %v1247
        %2294 = vmatmul.mubr.f32.gmra.mrb[0].mxu0 %v1067
        %v2295 = vpop.f32.mrb[0].mxu0
        %v2296 = vadd.f32 %v2219, %v2295
        %v2297 = vpop.f32.mrb[0].mxu0
        %v2298 = vadd.f32 %v2221, %v2297
        %2299 = vmatprep.mubr.f32.mxu0 %v1250
        %2300 = vmatmul.mubr.f32.gmra.mrb[0].mxu0 %v1073
        %v2301 = vpop.f32.mrb[0].mxu0
        %v2302 = vadd.f32 %v2225, %v2301
        %v2303 = vpop.f32.mrb[0].mxu0
        %v2304 = vadd.f32 %v2227, %v2303
        %2305 = vdwg.mxu0
        %v2306 = vmax.f32 %v1896, %v2296
        %v2307 = vmax.f32 %v1897, %v2298
        %v2308 = vmax.f32 %v1898, %v2302
        %v2309 = vmax.f32 %v1899, %v2304
        %s2310 = scalar_lea.vmem [#allocation12], 4032
        %v2311 = vld [vmem:[%s2310] sm:$0xff]
        %v2312 = vld [vmem:[%s2310 + $0x8] sm:$0xff]
        %v2313 = vld [vmem:[%s2310 + $0x10] sm:$0xff]
        %v2314 = vld [vmem:[%s2310 + $0x18] sm:$0xff]
        %v2315 = vld [vmem:[%s2310 + $0x20] sm:$0xff]
        %v2316 = vld [vmem:[%s2310 + $0x28] sm:$0xff]
        %v2317 = vld [vmem:[%s2310 + $0x30] sm:$0xff]
        %v2318 = vld [vmem:[%s2310 + $0x38] sm:$0xff]
        %v2319 = vld [vmem:[%s2310 + $0x40] sm:$0xff]
        %v2320 = vld [vmem:[%s2310 + $0x48] sm:$0xff]
        %v2321 = vld [vmem:[%s2310 + $0x50] sm:$0xff]
        %v2322 = vld [vmem:[%s2310 + $0x58] sm:$0xff]
        %v2323 = vld [vmem:[%s2310 + $0x60] sm:$0xff]
        %v2324 = vld [vmem:[%s2310 + $0x68] sm:$0xff]
        %v2325 = vld [vmem:[%s2310 + $0x70] sm:$0xff]
        %v2326 = vld [vmem:[%s2310 + $0x78] sm:$0xff]
        %v2327 = vld [vmem:[%s2310 + $0x80] sm:$0xff]
        %v2328 = vld [vmem:[%s2310 + $0x88] sm:$0xff]
        %v2329 = vld [vmem:[%s2310 + $0x90] sm:$0xff]
        %v2330 = vld [vmem:[%s2310 + $0x98] sm:$0xff]
        %v2331 = vld [vmem:[%s2310 + $0xa0] sm:$0xff]
        %v2332 = vld [vmem:[%s2310 + $0xa8] sm:$0xff]
        %v2333 = vld [vmem:[%s2310 + $0xb0] sm:$0xff]
        %v2334 = vld [vmem:[%s2310 + $0xb8] sm:$0xff]
        %v2335 = vld [vmem:[%s2310 + $0xc0] sm:$0xff]
        %v2336 = vld [vmem:[%s2310 + $0xc8] sm:$0xff]
        %v2337 = vld [vmem:[%s2310 + $0xd0] sm:$0xff]
        %v2338 = vld [vmem:[%s2310 + $0xd8] sm:$0xff]
        %v2339 = vld [vmem:[%s2310 + $0xe0] sm:$0xff]
        %v2340 = vld [vmem:[%s2310 + $0xe8] sm:$0xff]
        %v2341 = vld [vmem:[%s2310 + $0xf0] sm:$0xff]
        %v2342 = vld [vmem:[%s2310 + $0xf8] sm:$0xff]
        %v2343 = vld [vmem:[%s2310 + $0x100] sm:$0xff]
        %v2344 = vld [vmem:[%s2310 + $0x108] sm:$0xff]
        %v2345 = vld [vmem:[%s2310 + $0x110] sm:$0xff]
        %v2346 = vld [vmem:[%s2310 + $0x118] sm:$0xff]
        %v2347 = vld [vmem:[%s2310 + $0x120] sm:$0xff]
        %v2348 = vld [vmem:[%s2310 + $0x128] sm:$0xff]
        %v2349 = vld [vmem:[%s2310 + $0x130] sm:$0xff]
        %v2350 = vld [vmem:[%s2310 + $0x138] sm:$0xff]
        %v2351 = vld [vmem:[%s2310 + $0x140] sm:$0xff]
        %v2352 = vld [vmem:[%s2310 + $0x148] sm:$0xff]
        %v2353 = vld [vmem:[%s2310 + $0x150] sm:$0xff]
        %v2354 = vld [vmem:[%s2310 + $0x158] sm:$0xff]
        %v2355 = vld [vmem:[%s2310 + $0x160] sm:$0xff]
        %v2356 = vld [vmem:[%s2310 + $0x168] sm:$0xff]
        %v2357 = vld [vmem:[%s2310 + $0x170] sm:$0xff]
        %v2358 = vld [vmem:[%s2310 + $0x178] sm:$0xff]
        %v2359 = vld [vmem:[%s2310 + $0x180] sm:$0xff]
        %v2360 = vld [vmem:[%s2310 + $0x188] sm:$0xff]
        %v2361 = vld [vmem:[%s2310 + $0x190] sm:$0xff]
        %v2362 = vld [vmem:[%s2310 + $0x198] sm:$0xff]
        %v2363 = vld [vmem:[%s2310 + $0x1a0] sm:$0xff]
        %v2364 = vld [vmem:[%s2310 + $0x1a8] sm:$0xff]
        %v2365 = vld [vmem:[%s2310 + $0x1b0] sm:$0xff]
        %v2366 = vld [vmem:[%s2310 + $0x1b8] sm:$0xff]
        %v2367 = vld [vmem:[%s2310 + $0x1c0] sm:$0xff]
        %v2368 = vld [vmem:[%s2310 + $0x1c8] sm:$0xff]
        %v2369 = vld [vmem:[%s2310 + $0x1d0] sm:$0xff]
        %v2370 = vld [vmem:[%s2310 + $0x1d8] sm:$0xff]
        %v2371 = vld [vmem:[%s2310 + $0x1e0] sm:$0xff]
        %v2372 = vld [vmem:[%s2310 + $0x1e8] sm:$0xff]
        %v2373 = vld [vmem:[%s2310 + $0x1f0] sm:$0xff]
        %v2374 = vld [vmem:[%s2310 + $0x1f8] sm:$0xff]
        %v2375 = vld [vmem:[%s2310 + $0x200] sm:$0xff]
        %v2376 = vld [vmem:[%s2310 + $0x208] sm:$0xff]
        %v2377 = vld [vmem:[%s2310 + $0x210] sm:$0xff]
        %v2378 = vld [vmem:[%s2310 + $0x218] sm:$0xff]
        %v2379 = vld [vmem:[%s2310 + $0x220] sm:$0xff]
        %v2380 = vld [vmem:[%s2310 + $0x228] sm:$0xff]
        %v2381 = vld [vmem:[%s2310 + $0x230] sm:$0xff]
        %v2382 = vld [vmem:[%s2310 + $0x238] sm:$0xff]
        %v2383 = vld [vmem:[%s2310 + $0x240] sm:$0xff]
        %v2384 = vld [vmem:[%s2310 + $0x248] sm:$0xff]
        %v2385 = vld [vmem:[%s2310 + $0x250] sm:$0xff]
        %v2386 = vld [vmem:[%s2310 + $0x258] sm:$0xff]
        %v2387 = vld [vmem:[%s2310 + $0x260] sm:$0xff]
        %v2388 = vld [vmem:[%s2310 + $0x268] sm:$0xff]
        %v2389 = vld [vmem:[%s2310 + $0x270] sm:$0xff]
        %v2390 = vld [vmem:[%s2310 + $0x278] sm:$0xff]
        %v2391 = vld [vmem:[%s2310 + $0x280] sm:$0xff]
        %v2392 = vld [vmem:[%s2310 + $0x288] sm:$0xff]
        %v2393 = vld [vmem:[%s2310 + $0x290] sm:$0xff]
        %v2394 = vld [vmem:[%s2310 + $0x298] sm:$0xff]
        %v2395 = vld [vmem:[%s2310 + $0x2a0] sm:$0xff]
        %v2396 = vld [vmem:[%s2310 + $0x2a8] sm:$0xff]
        %v2397 = vld [vmem:[%s2310 + $0x2b0] sm:$0xff]
        %v2398 = vld [vmem:[%s2310 + $0x2b8] sm:$0xff]
        %v2399 = vld [vmem:[%s2310 + $0x2c0] sm:$0xff]
        %v2400 = vld [vmem:[%s2310 + $0x2c8] sm:$0xff]
        %v2401 = vld [vmem:[%s2310 + $0x2d0] sm:$0xff]
        %v2402 = vld [vmem:[%s2310 + $0x2d8] sm:$0xff]
        %v2403 = vld [vmem:[%s2310 + $0x2e0] sm:$0xff]
        %v2404 = vld [vmem:[%s2310 + $0x2e8] sm:$0xff]
        %v2405 = vld [vmem:[%s2310 + $0x2f0] sm:$0xff]
        %v2406 = vld [vmem:[%s2310 + $0x2f8] sm:$0xff]
        %v2407 = vld [vmem:[%s2310 + $0x300] sm:$0xff]
        %v2408 = vld [vmem:[%s2310 + $0x308] sm:$0xff]
        %v2409 = vld [vmem:[%s2310 + $0x310] sm:$0xff]
        %v2410 = vld [vmem:[%s2310 + $0x318] sm:$0xff]
        %v2411 = vld [vmem:[%s2310 + $0x320] sm:$0xff]
        %v2412 = vld [vmem:[%s2310 + $0x328] sm:$0xff]
        %v2413 = vld [vmem:[%s2310 + $0x330] sm:$0xff]
        %v2414 = vld [vmem:[%s2310 + $0x338] sm:$0xff]
        %v2415 = vld [vmem:[%s2310 + $0x340] sm:$0xff]
        %v2416 = vld [vmem:[%s2310 + $0x348] sm:$0xff]
        %v2417 = vld [vmem:[%s2310 + $0x350] sm:$0xff]
        %v2418 = vld [vmem:[%s2310 + $0x358] sm:$0xff]
        %v2419 = vld [vmem:[%s2310 + $0x360] sm:$0xff]
        %v2420 = vld [vmem:[%s2310 + $0x368] sm:$0xff]
        %v2421 = vld [vmem:[%s2310 + $0x370] sm:$0xff]
        %v2422 = vld [vmem:[%s2310 + $0x378] sm:$0xff]
        %v2423 = vld [vmem:[%s2310 + $0x380] sm:$0xff]
        %v2424 = vld [vmem:[%s2310 + $0x388] sm:$0xff]
        %v2425 = vld [vmem:[%s2310 + $0x390] sm:$0xff]
        %v2426 = vld [vmem:[%s2310 + $0x398] sm:$0xff]
        %v2427 = vld [vmem:[%s2310 + $0x3a0] sm:$0xff]
        %v2428 = vld [vmem:[%s2310 + $0x3a8] sm:$0xff]
        %v2429 = vld [vmem:[%s2310 + $0x3b0] sm:$0xff]
        %v2430 = vld [vmem:[%s2310 + $0x3b8] sm:$0xff]
        %v2431 = vld [vmem:[%s2310 + $0x3c0] sm:$0xff]
        %v2432 = vld [vmem:[%s2310 + $0x3c8] sm:$0xff]
        %v2433 = vld [vmem:[%s2310 + $0x3d0] sm:$0xff]
        %v2434 = vld [vmem:[%s2310 + $0x3d8] sm:$0xff]
        %v2435 = vld [vmem:[%s2310 + $0x3e0] sm:$0xff]
        %v2436 = vld [vmem:[%s2310 + $0x3e8] sm:$0xff]
        %v2437 = vld [vmem:[%s2310 + $0x3f0] sm:$0xff]
        %v2438 = vld [vmem:[%s2310 + $0x3f8] sm:$0xff]
        %v2439 = vld [vmem:[%s2310 + $0x400] sm:$0xff]
        %v2440 = vld [vmem:[%s2310 + $0x408] sm:$0xff]
        %v2441 = vld [vmem:[%s2310 + $0x410] sm:$0xff]
        %v2442 = vld [vmem:[%s2310 + $0x418] sm:$0xff]
        %v2443 = vld [vmem:[%s2310 + $0x420] sm:$0xff]
        %v2444 = vld [vmem:[%s2310 + $0x428] sm:$0xff]
        %v2445 = vld [vmem:[%s2310 + $0x430] sm:$0xff]
        %v2446 = vld [vmem:[%s2310 + $0x438] sm:$0xff]
        %v2447 = vld [vmem:[%s2310 + $0x440] sm:$0xff]
        %v2448 = vld [vmem:[%s2310 + $0x448] sm:$0xff]
        %v2449 = vld [vmem:[%s2310 + $0x450] sm:$0xff]
        %v2450 = vld [vmem:[%s2310 + $0x458] sm:$0xff]
        %v2451 = vld [vmem:[%s2310 + $0x460] sm:$0xff]
        %v2452 = vld [vmem:[%s2310 + $0x468] sm:$0xff]
        %v2453 = vld [vmem:[%s2310 + $0x470] sm:$0xff]
        %v2454 = vld [vmem:[%s2310 + $0x478] sm:$0xff]
        %v2455 = vld [vmem:[%s2310 + $0x480] sm:$0xff]
        %v2456 = vld [vmem:[%s2310 + $0x488] sm:$0xff]
        %v2457 = vld [vmem:[%s2310 + $0x490] sm:$0xff]
        %v2458 = vld [vmem:[%s2310 + $0x498] sm:$0xff]
        %v2459 = vld [vmem:[%s2310 + $0x4a0] sm:$0xff]
        %v2460 = vld [vmem:[%s2310 + $0x4a8] sm:$0xff]
        %v2461 = vld [vmem:[%s2310 + $0x4b0] sm:$0xff]
        %v2462 = vld [vmem:[%s2310 + $0x4b8] sm:$0xff]
        %v2463 = vld [vmem:[%s2310 + $0x4c0] sm:$0xff]
        %v2464 = vld [vmem:[%s2310 + $0x4c8] sm:$0xff]
        %v2465 = vld [vmem:[%s2310 + $0x4d0] sm:$0xff]
        %v2466 = vld [vmem:[%s2310 + $0x4d8] sm:$0xff]
        %v2467 = vld [vmem:[%s2310 + $0x4e0] sm:$0xff]
        %v2468 = vld [vmem:[%s2310 + $0x4e8] sm:$0xff]
        %v2469 = vld [vmem:[%s2310 + $0x4f0] sm:$0xff]
        %v2470 = vld [vmem:[%s2310 + $0x4f8] sm:$0xff]
        %v2471 = vld [vmem:[%s2310 + $0x500] sm:$0xff]
        %v2472 = vld [vmem:[%s2310 + $0x508] sm:$0xff]
        %v2473 = vld [vmem:[%s2310 + $0x510] sm:$0xff]
        %v2474 = vld [vmem:[%s2310 + $0x518] sm:$0xff]
        %v2475 = vld [vmem:[%s2310 + $0x520] sm:$0xff]
        %v2476 = vld [vmem:[%s2310 + $0x528] sm:$0xff]
        %v2477 = vld [vmem:[%s2310 + $0x530] sm:$0xf]
        %v2478 = vld [vmem:[%s2310 + $0x538] sm:$0xf]
        %v2480 = vsel %vm1252, %v2477, 0
        %v2483 = vsel %vm1252, %v2478, 0
        %2485 = vmatprep.subr.mxu0 %v2312
        %2486 = vmatpush1.msra.mxu0 %v2311
        %2487 = vmatprep.subr.mxu0 %v2314
        %2488 = vmatpush1.msra.mxu0 %v2313
        %2489 = vmatprep.subr.mxu0 %v2316
        %2490 = vmatpush1.msra.mxu0 %v2315
        %2491 = vmatprep.subr.mxu0 %v2318
        %2492 = vmatpush1.msra.mxu0 %v2317
        %2493 = vmatprep.subr.mxu0 %v2320
        %2494 = vmatpush1.msra.mxu0 %v2319
        %2495 = vmatprep.subr.mxu0 %v2322
        %2496 = vmatpush1.msra.mxu0 %v2321
        %2497 = vmatprep.subr.mxu0 %v2324
        %2498 = vmatpush1.msra.mxu0 %v2323
        %2499 = vmatprep.subr.mxu0 %v2326
        %2500 = vmatpush1.msra.mxu0 %v2325
        %2501 = vmatprep.subr.mxu0 %v2328
        %2502 = vmatpush1.msra.mxu0 %v2327
        %2503 = vmatprep.subr.mxu0 %v2330
        %2504 = vmatpush1.msra.mxu0 %v2329
        %2505 = vmatprep.subr.mxu0 %v2332
        %2506 = vmatpush1.msra.mxu0 %v2331
        %2507 = vmatprep.subr.mxu0 %v2334
        %2508 = vmatpush1.msra.mxu0 %v2333
        %2509 = vmatprep.subr.mxu0 %v2336
        %2510 = vmatpush1.msra.mxu0 %v2335
        %2511 = vmatprep.subr.mxu0 %v2338
        %2512 = vmatpush1.msra.mxu0 %v2337
        %2513 = vmatprep.subr.mxu0 %v2340
        %2514 = vmatpush1.msra.mxu0 %v2339
        %2515 = vmatprep.subr.mxu0 %v2342
        %2516 = vmatpush1.msra.mxu0 %v2341
        %2517 = vmatprep.subr.mxu0 %v2344
        %2518 = vmatpush1.msra.mxu0 %v2343
        %2519 = vmatprep.subr.mxu0 %v2346
        %2520 = vmatpush1.msra.mxu0 %v2345
        %2521 = vmatprep.subr.mxu0 %v2348
        %2522 = vmatpush1.msra.mxu0 %v2347
        %2523 = vmatprep.subr.mxu0 %v2350
        %2524 = vmatpush1.msra.mxu0 %v2349
        %2525 = vmatprep.subr.mxu0 %v2352
        %2526 = vmatpush1.msra.mxu0 %v2351
        %2527 = vmatprep.subr.mxu0 %v2354
        %2528 = vmatpush1.msra.mxu0 %v2353
        %2529 = vmatprep.subr.mxu0 %v2356
        %2530 = vmatpush1.msra.mxu0 %v2355
        %2531 = vmatprep.subr.mxu0 %v2358
        %2532 = vmatpush1.msra.mxu0 %v2357
        %2533 = vmatprep.subr.mxu0 %v2360
        %2534 = vmatpush1.msra.mxu0 %v2359
        %2535 = vmatprep.subr.mxu0 %v2362
        %2536 = vmatpush1.msra.mxu0 %v2361
        %2537 = vmatprep.subr.mxu0 %v2364
        %2538 = vmatpush1.msra.mxu0 %v2363
        %2539 = vmatprep.subr.mxu0 %v2366
        %2540 = vmatpush1.msra.mxu0 %v2365
        %2541 = vmatprep.subr.mxu0 %v2368
        %2542 = vmatpush1.msra.mxu0 %v2367
        %2543 = vmatprep.subr.mxu0 %v2370
        %2544 = vmatpush1.msra.mxu0 %v2369
        %2545 = vmatprep.subr.mxu0 %v2372
        %2546 = vmatpush1.msra.mxu0 %v2371
        %2547 = vmatprep.subr.mxu0 %v2374
        %2548 = vmatpush1.msra.mxu0 %v2373
        %2549 = vmatprep.mubr.f32.mxu0 %v915
        %2550 = vmatmul.mubr.f32.gmra.mrb[0].mxu0 %v913
        %v2551 = vpop.f32.mrb[0].mxu0
        %v2552 = vadd.f32 0.0, %v2551
        %v2553 = vpop.f32.mrb[0].mxu0
        %v2554 = vadd.f32 0.0, %v2553
        %2555 = vmatprep.mubr.f32.mxu0 %v921
        %2556 = vmatmul.mubr.f32.gmra.mrb[0].mxu0 %v919
        %v2557 = vpop.f32.mrb[0].mxu0
        %v2558 = vadd.f32 0.0, %v2557
        %v2559 = vpop.f32.mrb[0].mxu0
        %v2560 = vadd.f32 0.0, %v2559
        %2561 = vdwg.mxu0
        %2562 = vmatprep.subr.mxu0 %v2376
        %2563 = vmatpush1.msra.mxu0 %v2375
        %2564 = vmatprep.subr.mxu0 %v2378
        %2565 = vmatpush1.msra.mxu0 %v2377
        %2566 = vmatprep.subr.mxu0 %v2380
        %2567 = vmatpush1.msra.mxu0 %v2379
        %2568 = vmatprep.subr.mxu0 %v2382
        %2569 = vmatpush1.msra.mxu0 %v2381
        %2570 = vmatprep.subr.mxu0 %v2384
        %2571 = vmatpush1.msra.mxu0 %v2383
        %2572 = vmatprep.subr.mxu0 %v2386
        %2573 = vmatpush1.msra.mxu0 %v2385
        %2574 = vmatprep.subr.mxu0 %v2388
        %2575 = vmatpush1.msra.mxu0 %v2387
        %2576 = vmatprep.subr.mxu0 %v2390
        %2577 = vmatpush1.msra.mxu0 %v2389
        %2578 = vmatprep.subr.mxu0 %v2392
        %2579 = vmatpush1.msra.mxu0 %v2391
        %2580 = vmatprep.subr.mxu0 %v2394
        %2581 = vmatpush1.msra.mxu0 %v2393
        %2582 = vmatprep.subr.mxu0 %v2396
        %2583 = vmatpush1.msra.mxu0 %v2395
        %2584 = vmatprep.subr.mxu0 %v2398
        %2585 = vmatpush1.msra.mxu0 %v2397
        %2586 = vmatprep.subr.mxu0 %v2400
        %2587 = vmatpush1.msra.mxu0 %v2399
        %2588 = vmatprep.subr.mxu0 %v2402
        %2589 = vmatpush1.msra.mxu0 %v2401
        %2590 = vmatprep.subr.mxu0 %v2404
        %2591 = vmatpush1.msra.mxu0 %v2403
        %2592 = vmatprep.subr.mxu0 %v2406
        %2593 = vmatpush1.msra.mxu0 %v2405
        %2594 = vmatprep.subr.mxu0 %v2408
        %2595 = vmatpush1.msra.mxu0 %v2407
        %2596 = vmatprep.subr.mxu0 %v2410
        %2597 = vmatpush1.msra.mxu0 %v2409
        %2598 = vmatprep.subr.mxu0 %v2412
        %2599 = vmatpush1.msra.mxu0 %v2411
        %2600 = vmatprep.subr.mxu0 %v2414
        %2601 = vmatpush1.msra.mxu0 %v2413
        %2602 = vmatprep.subr.mxu0 %v2416
        %2603 = vmatpush1.msra.mxu0 %v2415
        %2604 = vmatprep.subr.mxu0 %v2418
        %2605 = vmatpush1.msra.mxu0 %v2417
        %2606 = vmatprep.subr.mxu0 %v2420
        %2607 = vmatpush1.msra.mxu0 %v2419
        %2608 = vmatprep.subr.mxu0 %v2422
        %2609 = vmatpush1.msra.mxu0 %v2421
        %2610 = vmatprep.subr.mxu0 %v2424
        %2611 = vmatpush1.msra.mxu0 %v2423
        %2612 = vmatprep.subr.mxu0 %v2426
        %2613 = vmatpush1.msra.mxu0 %v2425
        %2614 = vmatprep.subr.mxu0 %v2428
        %2615 = vmatpush1.msra.mxu0 %v2427
        %2616 = vmatprep.subr.mxu0 %v2430
        %2617 = vmatpush1.msra.mxu0 %v2429
        %2618 = vmatprep.subr.mxu0 %v2432
        %2619 = vmatpush1.msra.mxu0 %v2431
        %2620 = vmatprep.subr.mxu0 %v2434
        %2621 = vmatpush1.msra.mxu0 %v2433
        %2622 = vmatprep.subr.mxu0 %v2436
        %2623 = vmatpush1.msra.mxu0 %v2435
        %2624 = vmatprep.subr.mxu0 %v2438
        %2625 = vmatpush1.msra.mxu0 %v2437
        %2626 = vmatprep.mubr.f32.mxu0 %v992
        %2627 = vmatmul.mubr.f32.gmra.mrb[0].mxu0 %v990
        %v2628 = vpop.f32.mrb[0].mxu0
        %v2629 = vadd.f32 %v2552, %v2628
        %v2630 = vpop.f32.mrb[0].mxu0
        %v2631 = vadd.f32 %v2554, %v2630
        %2632 = vmatprep.mubr.f32.mxu0 %v998
        %2633 = vmatmul.mubr.f32.gmra.mrb[0].mxu0 %v996
        %v2634 = vpop.f32.mrb[0].mxu0
        %v2635 = vadd.f32 %v2558, %v2634
        %v2636 = vpop.f32.mrb[0].mxu0
        %v2637 = vadd.f32 %v2560, %v2636
        %2638 = vdwg.mxu0
        %2639 = vmatprep.subr.mxu0 %v2440
        %2640 = vmatpush1.msra.mxu0 %v2439
        %2641 = vmatprep.subr.mxu0 %v2442
        %2642 = vmatpush1.msra.mxu0 %v2441
        %2643 = vmatprep.subr.mxu0 %v2444
        %2644 = vmatpush1.msra.mxu0 %v2443
        %2645 = vmatprep.subr.mxu0 %v2446
        %2646 = vmatpush1.msra.mxu0 %v2445
        %2647 = vmatprep.subr.mxu0 %v2448
        %2648 = vmatpush1.msra.mxu0 %v2447
        %2649 = vmatprep.subr.mxu0 %v2450
        %2650 = vmatpush1.msra.mxu0 %v2449
        %2651 = vmatprep.subr.mxu0 %v2452
        %2652 = vmatpush1.msra.mxu0 %v2451
        %2653 = vmatprep.subr.mxu0 %v2454
        %2654 = vmatpush1.msra.mxu0 %v2453
        %2655 = vmatprep.subr.mxu0 %v2456
        %2656 = vmatpush1.msra.mxu0 %v2455
        %2657 = vmatprep.subr.mxu0 %v2458
        %2658 = vmatpush1.msra.mxu0 %v2457
        %2659 = vmatprep.subr.mxu0 %v2460
        %2660 = vmatpush1.msra.mxu0 %v2459
        %2661 = vmatprep.subr.mxu0 %v2462
        %2662 = vmatpush1.msra.mxu0 %v2461
        %2663 = vmatprep.subr.mxu0 %v2464
        %2664 = vmatpush1.msra.mxu0 %v2463
        %2665 = vmatprep.subr.mxu0 %v2466
        %2666 = vmatpush1.msra.mxu0 %v2465
        %2667 = vmatprep.subr.mxu0 %v2468
        %2668 = vmatpush1.msra.mxu0 %v2467
        %2669 = vmatprep.subr.mxu0 %v2470
        %2670 = vmatpush1.msra.mxu0 %v2469
        %2671 = vmatprep.subr.mxu0 %v2472
        %2672 = vmatpush1.msra.mxu0 %v2471
        %2673 = vmatprep.subr.mxu0 %v2474
        %2674 = vmatpush1.msra.mxu0 %v2473
        %2675 = vmatprep.subr.mxu0 %v2476
        %2676 = vmatpush1.msra.mxu0 %v2475
        %2677 = vmatprep.subr.mxu0 %v2483
        %2678 = vmatpush1.msra.mxu0 %v2480
        %2679 = vmatprep.subr.mxu0 0.0
        %2680 = vmatpush1.msra.mxu0 0.0
        %2681 = vmatprep.subr.mxu0 0.0
        %2682 = vmatpush1.msra.mxu0 0.0
        %2683 = vmatprep.subr.mxu0 0.0
        %2684 = vmatpush1.msra.mxu0 0.0
        %2685 = vmatprep.subr.mxu0 0.0
        %2686 = vmatpush1.msra.mxu0 0.0
        %2687 = vmatprep.subr.mxu0 0.0
        %2688 = vmatpush1.msra.mxu0 0.0
        %2689 = vmatprep.subr.mxu0 0.0
        %2690 = vmatpush1.msra.mxu0 0.0
        %2691 = vmatprep.subr.mxu0 0.0
        %2692 = vmatpush1.msra.mxu0 0.0
        %2693 = vmatprep.subr.mxu0 0.0
        %2694 = vmatpush1.msra.mxu0 0.0
        %2695 = vmatprep.subr.mxu0 0.0
        %2696 = vmatpush1.msra.mxu0 0.0
        %2697 = vmatprep.subr.mxu0 0.0
        %2698 = vmatpush1.msra.mxu0 0.0
        %2699 = vmatprep.subr.mxu0 0.0
        %2700 = vmatpush1.msra.mxu0 0.0
        %2701 = vmatprep.subr.mxu0 0.0
        %2702 = vmatpush1.msra.mxu0 0.0
        %2703 = vmatprep.mubr.f32.mxu0 %v1247
        %2704 = vmatmul.mubr.f32.gmra.mrb[0].mxu0 %v1067
        %v2705 = vpop.f32.mrb[0].mxu0
        %v2706 = vadd.f32 %v2629, %v2705
        %v2707 = vpop.f32.mrb[0].mxu0
        %v2708 = vadd.f32 %v2631, %v2707
        %2709 = vmatprep.mubr.f32.mxu0 %v1250
        %2710 = vmatmul.mubr.f32.gmra.mrb[0].mxu0 %v1073
        %v2711 = vpop.f32.mrb[0].mxu0
        %v2712 = vadd.f32 %v2635, %v2711
        %v2713 = vpop.f32.mrb[0].mxu0
        %v2714 = vadd.f32 %v2637, %v2713
        %2715 = vdwg.mxu0
        %v2716 = vmax.f32 %v2306, %v2706
        %v2717 = vmax.f32 %v2307, %v2708
        %v2718 = vmax.f32 %v2308, %v2712
        %v2719 = vmax.f32 %v2309, %v2714
        %v2720 = vld [vmem:[#allocation10] sm:$0xff]
        %v2721 = vld [vmem:[#allocation10 + $0x8] sm:$0x3]
        %2723 = vset.pattern.permute.xlu0 0
        %2724 = vperm.xlu0 %2723, %v2720
        %v2725 = vpop.permute.xlu0 %2724
        %2728 = vset.pattern.permute.xlu0 0
        %2729 = vperm.xlu0 %2728, %v2721
        %v2730 = vpop.permute.xlu0 %2729
        %v2732 = vadd.f32 %v2716, %v2725
        %v2733 = vadd.f32 %v2717, %v2725
        %v2734 = vadd.f32 %v2718, %v2730
        %v2735 = vadd.f32 %v2719, %v2730
        %v2736 = vmax.f32 %v2732, 0.0
        %v2737 = vmax.f32 %v2733, 0.0
        %v2738 = vmax.f32 %v2734, 0.0
        %v2739 = vmax.f32 %v2735, 0.0
        %2740 = vst [vmem:[#allocation3] sm:$0xff] %v2736
        %2741 = vst.msk [vmem:[#allocation3 + $0x8] sm:$0xff] %vm744, %v2737
        %2742 = vst [vmem:[#allocation3 + $0x10] sm:$0x3] %v2738
        %vm2743 = vcmask 123904
        %2744 = vst.msk [vmem:[#allocation3 + $0x18] sm:$0x3] %vm2743, %v2739
        %v2745 = vld [vmem:[#allocation3] sm:$0xff]
        %v2746 = vld [vmem:[#allocation3 + $0x10] sm:$0x3]
        %vm2747 = vcmask 752640
        %2748 = vst.msk [vmem:[#allocation4] sm:$0xff] %vm2747, %v2745
        %vm2749 = vcmask 746496
        %2750 = vst.msk [vmem:[#allocation4 + $0x8] sm:$0x3] %vm2749, %v2746
        %v2751 = vld [vmem:[#allocation3] sm:$0xff]
        %v2752 = vld [vmem:[#allocation3 + $0x10] sm:$0x3]
        %2755 = vrot.lane.b32.xlu0 %v2751, 127
        %v2756 = vpop.permute.xlu0 %2755
        %2757 = vrot.lane.b32.xlu0 %v2752, 127
        %v2758 = vpop.permute.xlu0 %2757
        %2761 = vst.msk [vmem:[#allocation4 + $0xa] sm:$0xff] %vm2747, %v2756
        %2762 = vst.msk [vmem:[#allocation4 + $0x12] sm:$0x3] %vm2749, %v2758
        %v2763 = vld [vmem:[#allocation3] sm:$0xff]
        %v2764 = vld [vmem:[#allocation3 + $0x10] sm:$0x3]
        %2767 = vrot.lane.b32.xlu0 %v2763, 126
        %v2768 = vpop.permute.xlu0 %2767
        %2769 = vrot.lane.b32.xlu0 %v2764, 126
        %v2770 = vpop.permute.xlu0 %2769
        %2773 = vst.msk [vmem:[#allocation4 + $0x14] sm:$0xff] %vm2747, %v2768
        %2774 = vst.msk [vmem:[#allocation4 + $0x1c] sm:$0x3] %vm2749, %v2770
        %v2775 = vld [vmem:[#allocation3] sm:$0xff]
        %v2776 = vld [vmem:[#allocation3 + $0x10] sm:$0x3]
        %2779 = vrot.lane.b32.xlu0 %v2775, 125
        %v2780 = vpop.permute.xlu0 %2779
        %2781 = vrot.lane.b32.xlu0 %v2776, 125
        %v2782 = vpop.permute.xlu0 %2781
        %2785 = vst.msk [vmem:[#allocation4 + $0x1e] sm:$0xff] %vm2747, %v2780
        %2786 = vst.msk [vmem:[#allocation4 + $0x26] sm:$0x3] %vm2749, %v2782
        %v2787 = vld [vmem:[#allocation3] sm:$0xff]
        %v2788 = vld [vmem:[#allocation3 + $0x10] sm:$0x3]
        %2791 = vrot.lane.b32.xlu0 %v2787, 124
        %v2792 = vpop.permute.xlu0 %2791
        %2793 = vrot.lane.b32.xlu0 %v2788, 124
        %v2794 = vpop.permute.xlu0 %2793
        %2797 = vst.msk [vmem:[#allocation4 + $0x28] sm:$0xff] %vm2747, %v2792
        %2798 = vst.msk [vmem:[#allocation4 + $0x30] sm:$0x3] %vm2749, %v2794
        %v2799 = vld [vmem:[#allocation3] sm:$0xff]
        %v2800 = vld [vmem:[#allocation3 + $0x10] sm:$0x3]
        %2803 = vrot.lane.b32.xlu0 %v2799, 116
        %v2804 = vpop.permute.xlu0 %2803
        %2805 = vrot.lane.b32.xlu0 %v2800, 116
        %v2806 = vpop.permute.xlu0 %2805
        %2809 = vst.msk [vmem:[#allocation4 + $0x32] sm:$0xff] %vm2747, %v2804
        %2810 = vst.msk [vmem:[#allocation4 + $0x3a] sm:$0x3] %vm2749, %v2806
        %v2811 = vld [vmem:[#allocation3] sm:$0xff]
        %v2812 = vld [vmem:[#allocation3 + $0x10] sm:$0x3]
        %2815 = vrot.lane.b32.xlu0 %v2811, 115
        %v2816 = vpop.permute.xlu0 %2815
        %2817 = vrot.lane.b32.xlu0 %v2812, 115
        %v2818 = vpop.permute.xlu0 %2817
        %2821 = vst.msk [vmem:[#allocation4 + $0x3c] sm:$0xff] %vm2747, %v2816
        %2822 = vst.msk [vmem:[#allocation4 + $0x44] sm:$0x3] %vm2749, %v2818
        %v2823 = vld [vmem:[#allocation3] sm:$0xff]
        %v2824 = vld [vmem:[#allocation3 + $0x10] sm:$0x3]
        %2827 = vrot.lane.b32.xlu0 %v2823, 114
        %v2828 = vpop.permute.xlu0 %2827
        %2829 = vrot.lane.b32.xlu0 %v2824, 114
        %v2830 = vpop.permute.xlu0 %2829
        %2833 = vst.msk [vmem:[#allocation4 + $0x46] sm:$0xff] %vm2747, %v2828
        %2834 = vst.msk [vmem:[#allocation4 + $0x4e] sm:$0x3] %vm2749, %v2830
        %v2835 = vld [vmem:[#allocation3] sm:$0xff]
        %v2836 = vld [vmem:[#allocation3 + $0x10] sm:$0x3]
        %2839 = vrot.lane.b32.xlu0 %v2835, 113
        %v2840 = vpop.permute.xlu0 %2839
        %2841 = vrot.lane.b32.xlu0 %v2836, 113
        %v2842 = vpop.permute.xlu0 %2841
        %2845 = vst.msk [vmem:[#allocation4 + $0x50] sm:$0xff] %vm2747, %v2840
        %2846 = vst.msk [vmem:[#allocation4 + $0x58] sm:$0x3] %vm2749, %v2842
        %v2847 = vld [vmem:[#allocation3] sm:$0xff]
        %v2848 = vld [vmem:[#allocation3 + $0x10] sm:$0x3]
        %2851 = vrot.lane.b32.xlu0 %v2847, 112
        %v2852 = vpop.permute.xlu0 %2851
        %2853 = vrot.lane.b32.xlu0 %v2848, 112
        %v2854 = vpop.permute.xlu0 %2853
        %2857 = vst.msk [vmem:[#allocation4 + $0x5a] sm:$0xff] %vm2747, %v2852
        %2858 = vst.msk [vmem:[#allocation4 + $0x62] sm:$0x3] %vm2749, %v2854
        %v2859 = vld [vmem:[#allocation3] sm:$0xff]
        %v2860 = vld [vmem:[#allocation3 + $0x10] sm:$0x3]
        %2863 = vrot.lane.b32.xlu0 %v2859, 104
        %v2864 = vpop.permute.xlu0 %2863
        %2865 = vrot.lane.b32.xlu0 %v2860, 104
        %v2866 = vpop.permute.xlu0 %2865
        %2869 = vst.msk [vmem:[#allocation4 + $0x64] sm:$0xff] %vm2747, %v2864
        %2870 = vst.msk [vmem:[#allocation4 + $0x6c] sm:$0x3] %vm2749, %v2866
        %v2871 = vld [vmem:[#allocation3] sm:$0xff]
        %v2872 = vld [vmem:[#allocation3 + $0x10] sm:$0x3]
        %2875 = vrot.lane.b32.xlu0 %v2871, 103
        %v2876 = vpop.permute.xlu0 %2875
        %2877 = vrot.lane.b32.xlu0 %v2872, 103
        %v2878 = vpop.permute.xlu0 %2877
        %2881 = vst.msk [vmem:[#allocation4 + $0x6e] sm:$0xff] %vm2747, %v2876
        %2882 = vst.msk [vmem:[#allocation4 + $0x76] sm:$0x3] %vm2749, %v2878
        %v2883 = vld [vmem:[#allocation3] sm:$0xff]
        %v2884 = vld [vmem:[#allocation3 + $0x10] sm:$0x3]
        %2887 = vrot.lane.b32.xlu0 %v2883, 102
        %v2888 = vpop.permute.xlu0 %2887
        %2889 = vrot.lane.b32.xlu0 %v2884, 102
        %v2890 = vpop.permute.xlu0 %2889
        %2893 = vst.msk [vmem:[#allocation4 + $0x78] sm:$0xff] %vm2747, %v2888
        %2894 = vst.msk [vmem:[#allocation4 + $0x80] sm:$0x3] %vm2749, %v2890
        %v2895 = vld [vmem:[#allocation3] sm:$0xff]
        %v2896 = vld [vmem:[#allocation3 + $0x10] sm:$0x3]
        %2899 = vrot.lane.b32.xlu0 %v2895, 101
        %v2900 = vpop.permute.xlu0 %2899
        %2901 = vrot.lane.b32.xlu0 %v2896, 101
        %v2902 = vpop.permute.xlu0 %2901
        %2905 = vst.msk [vmem:[#allocation4 + $0x82] sm:$0xff] %vm2747, %v2900
        %2906 = vst.msk [vmem:[#allocation4 + $0x8a] sm:$0x3] %vm2749, %v2902
        %v2907 = vld [vmem:[#allocation3] sm:$0xff]
        %v2908 = vld [vmem:[#allocation3 + $0x10] sm:$0x3]
        %2911 = vrot.lane.b32.xlu0 %v2907, 100
        %v2912 = vpop.permute.xlu0 %2911
        %2913 = vrot.lane.b32.xlu0 %v2908, 100
        %v2914 = vpop.permute.xlu0 %2913
        %2917 = vst.msk [vmem:[#allocation4 + $0x8c] sm:$0xff] %vm2747, %v2912
        %2918 = vst.msk [vmem:[#allocation4 + $0x94] sm:$0x3] %vm2749, %v2914
        %v2919 = vld [vmem:[#allocation3] sm:$0xff]
        %v2920 = vld [vmem:[#allocation3 + $0x10] sm:$0x3]
        %2923 = vrot.lane.b32.xlu0 %v2919, 92
        %v2924 = vpop.permute.xlu0 %2923
        %2925 = vrot.lane.b32.xlu0 %v2920, 92
        %v2926 = vpop.permute.xlu0 %2925
        %2929 = vst.msk [vmem:[#allocation4 + $0x96] sm:$0xff] %vm2747, %v2924
        %2930 = vst.msk [vmem:[#allocation4 + $0x9e] sm:$0x3] %vm2749, %v2926
        %v2931 = vld [vmem:[#allocation3] sm:$0xff]
        %v2932 = vld [vmem:[#allocation3 + $0x8] sm:$0xff]
        %v2933 = vld [vmem:[#allocation3 + $0x10] sm:$0x3]
        %v2934 = vld [vmem:[#allocation3 + $0x18] sm:$0x3]
        %2939 = vrot.lane.b32.xlu0 %v2931, 91
        %v2940 = vpop.permute.xlu0 %2939
        %2941 = vrot.lane.b32.xlu0 %v2932, 91
        %v2942 = vpop.permute.xlu0 %2941
        %2943 = vrot.lane.b32.xlu0 %v2933, 91
        %v2944 = vpop.permute.xlu0 %2943
        %2945 = vrot.lane.b32.xlu0 %v2934, 91
        %v2946 = vpop.permute.xlu0 %2945
        %vm2947 = vcmask 744448
        %v2948 = vsel %vm2947, %v2940, %v2942
        %v2949 = vsel %vm2947, %v2944, %v2946
        %2952 = vst.msk [vmem:[#allocation4 + $0xa0] sm:$0xff] %vm2747, %v2948
        %2953 = vst.msk [vmem:[#allocation4 + $0xa8] sm:$0x3] %vm2749, %v2949
        %v2954 = vld [vmem:[#allocation3] sm:$0xff]
        %v2955 = vld [vmem:[#allocation3 + $0x8] sm:$0xff]
        %v2956 = vld [vmem:[#allocation3 + $0x10] sm:$0x3]
        %v2957 = vld [vmem:[#allocation3 + $0x18] sm:$0x3]
        %2962 = vrot.lane.b32.xlu0 %v2954, 90
        %v2963 = vpop.permute.xlu0 %2962
        %2964 = vrot.lane.b32.xlu0 %v2955, 90
        %v2965 = vpop.permute.xlu0 %2964
        %2966 = vrot.lane.b32.xlu0 %v2956, 90
        %v2967 = vpop.permute.xlu0 %2966
        %2968 = vrot.lane.b32.xlu0 %v2957, 90
        %v2969 = vpop.permute.xlu0 %2968
        %vm2970 = vcmask 736256
        %v2971 = vsel %vm2970, %v2963, %v2965
        %v2972 = vsel %vm2970, %v2967, %v2969
        %2975 = vst.msk [vmem:[#allocation4 + $0xaa] sm:$0xff] %vm2747, %v2971
        %2976 = vst.msk [vmem:[#allocation4 + $0xb2] sm:$0x3] %vm2749, %v2972
        %v2977 = vld [vmem:[#allocation3] sm:$0xff]
        %v2978 = vld [vmem:[#allocation3 + $0x8] sm:$0xff]
        %v2979 = vld [vmem:[#allocation3 + $0x10] sm:$0x3]
        %v2980 = vld [vmem:[#allocation3 + $0x18] sm:$0x3]
        %2985 = vrot.lane.b32.xlu0 %v2977, 89
        %v2986 = vpop.permute.xlu0 %2985
        %2987 = vrot.lane.b32.xlu0 %v2978, 89
        %v2988 = vpop.permute.xlu0 %2987
        %2989 = vrot.lane.b32.xlu0 %v2979, 89
        %v2990 = vpop.permute.xlu0 %2989
        %2991 = vrot.lane.b32.xlu0 %v2980, 89
        %v2992 = vpop.permute.xlu0 %2991
        %vm2993 = vcmask 728064
        %v2994 = vsel %vm2993, %v2986, %v2988
        %v2995 = vsel %vm2993, %v2990, %v2992
        %2998 = vst.msk [vmem:[#allocation4 + $0xb4] sm:$0xff] %vm2747, %v2994
        %2999 = vst.msk [vmem:[#allocation4 + $0xbc] sm:$0x3] %vm2749, %v2995
        %v3000 = vld [vmem:[#allocation3] sm:$0xff]
        %v3001 = vld [vmem:[#allocation3 + $0x8] sm:$0xff]
        %v3002 = vld [vmem:[#allocation3 + $0x10] sm:$0x3]
        %v3003 = vld [vmem:[#allocation3 + $0x18] sm:$0x3]
        %3008 = vrot.lane.b32.xlu0 %v3000, 88
        %v3009 = vpop.permute.xlu0 %3008
        %3010 = vrot.lane.b32.xlu0 %v3001, 88
        %v3011 = vpop.permute.xlu0 %3010
        %3012 = vrot.lane.b32.xlu0 %v3002, 88
        %v3013 = vpop.permute.xlu0 %3012
        %3014 = vrot.lane.b32.xlu0 %v3003, 88
        %v3015 = vpop.permute.xlu0 %3014
        %vm3016 = vcmask 719872
        %v3017 = vsel %vm3016, %v3009, %v3011
        %v3018 = vsel %vm3016, %v3013, %v3015
        %3021 = vst.msk [vmem:[#allocation4 + $0xbe] sm:$0xff] %vm2747, %v3017
        %3022 = vst.msk [vmem:[#allocation4 + $0xc6] sm:$0x3] %vm2749, %v3018
        %v3023 = vld [vmem:[#allocation3] sm:$0xff]
        %v3024 = vld [vmem:[#allocation3 + $0x8] sm:$0xff]
        %v3025 = vld [vmem:[#allocation3 + $0x10] sm:$0x3]
        %v3026 = vld [vmem:[#allocation3 + $0x18] sm:$0x3]
        %3031 = vrot.lane.b32.xlu0 %v3023, 80
        %v3032 = vpop.permute.xlu0 %3031
        %3033 = vrot.lane.b32.xlu0 %v3024, 80
        %v3034 = vpop.permute.xlu0 %3033
        %3035 = vrot.lane.b32.xlu0 %v3025, 80
        %v3036 = vpop.permute.xlu0 %3035
        %3037 = vrot.lane.b32.xlu0 %v3026, 80
        %v3038 = vpop.permute.xlu0 %3037
        %vm3039 = vcmask 654336
        %v3040 = vsel %vm3039, %v3032, %v3034
        %v3041 = vsel %vm3039, %v3036, %v3038
        %3044 = vst.msk [vmem:[#allocation4 + $0xc8] sm:$0xff] %vm2747, %v3040
        %3045 = vst.msk [vmem:[#allocation4 + $0xd0] sm:$0x3] %vm2749, %v3041
        %v3046 = vld [vmem:[#allocation3] sm:$0xff]
        %v3047 = vld [vmem:[#allocation3 + $0x8] sm:$0xff]
        %v3048 = vld [vmem:[#allocation3 + $0x10] sm:$0x3]
        %v3049 = vld [vmem:[#allocation3 + $0x18] sm:$0x3]
        %3054 = vrot.lane.b32.xlu0 %v3046, 79
        %v3055 = vpop.permute.xlu0 %3054
        %3056 = vrot.lane.b32.xlu0 %v3047, 79
        %v3057 = vpop.permute.xlu0 %3056
        %3058 = vrot.lane.b32.xlu0 %v3048, 79
        %v3059 = vpop.permute.xlu0 %3058
        %3060 = vrot.lane.b32.xlu0 %v3049, 79
        %v3061 = vpop.permute.xlu0 %3060
        %vm3062 = vcmask 646144
        %v3063 = vsel %vm3062, %v3055, %v3057
        %v3064 = vsel %vm3062, %v3059, %v3061
        %3067 = vst.msk [vmem:[#allocation4 + $0xd2] sm:$0xff] %vm2747, %v3063
        %3068 = vst.msk [vmem:[#allocation4 + $0xda] sm:$0x3] %vm2749, %v3064
        %v3069 = vld [vmem:[#allocation3] sm:$0xff]
        %v3070 = vld [vmem:[#allocation3 + $0x8] sm:$0xff]
        %v3071 = vld [vmem:[#allocation3 + $0x10] sm:$0x3]
        %v3072 = vld [vmem:[#allocation3 + $0x18] sm:$0x3]
        %3077 = vrot.lane.b32.xlu0 %v3069, 78
        %v3078 = vpop.permute.xlu0 %3077
        %3079 = vrot.lane.b32.xlu0 %v3070, 78
        %v3080 = vpop.permute.xlu0 %3079
        %3081 = vrot.lane.b32.xlu0 %v3071, 78
        %v3082 = vpop.permute.xlu0 %3081
        %3083 = vrot.lane.b32.xlu0 %v3072, 78
        %v3084 = vpop.permute.xlu0 %3083
        %vm3085 = vcmask 637952
        %v3086 = vsel %vm3085, %v3078, %v3080
        %v3087 = vsel %vm3085, %v3082, %v3084
        %3090 = vst.msk [vmem:[#allocation4 + $0xdc] sm:$0xff] %vm2747, %v3086
        %3091 = vst.msk [vmem:[#allocation4 + $0xe4] sm:$0x3] %vm2749, %v3087
        %v3092 = vld [vmem:[#allocation3] sm:$0xff]
        %v3093 = vld [vmem:[#allocation3 + $0x8] sm:$0xff]
        %v3094 = vld [vmem:[#allocation3 + $0x10] sm:$0x3]
        %v3095 = vld [vmem:[#allocation3 + $0x18] sm:$0x3]
        %3100 = vrot.lane.b32.xlu0 %v3092, 77
        %v3101 = vpop.permute.xlu0 %3100
        %3102 = vrot.lane.b32.xlu0 %v3093, 77
        %v3103 = vpop.permute.xlu0 %3102
        %3104 = vrot.lane.b32.xlu0 %v3094, 77
        %v3105 = vpop.permute.xlu0 %3104
        %3106 = vrot.lane.b32.xlu0 %v3095, 77
        %v3107 = vpop.permute.xlu0 %3106
        %vm3108 = vcmask 629760
        %v3109 = vsel %vm3108, %v3101, %v3103
        %v3110 = vsel %vm3108, %v3105, %v3107
        %3113 = vst.msk [vmem:[#allocation4 + $0xe6] sm:$0xff] %vm2747, %v3109
        %3114 = vst.msk [vmem:[#allocation4 + $0xee] sm:$0x3] %vm2749, %v3110
        %v3115 = vld [vmem:[#allocation3] sm:$0xff]
        %v3116 = vld [vmem:[#allocation3 + $0x8] sm:$0xff]
        %v3117 = vld [vmem:[#allocation3 + $0x10] sm:$0x3]
        %v3118 = vld [vmem:[#allocation3 + $0x18] sm:$0x3]
        %3123 = vrot.lane.b32.xlu0 %v3115, 76
        %v3124 = vpop.permute.xlu0 %3123
        %3125 = vrot.lane.b32.xlu0 %v3116, 76
        %v3126 = vpop.permute.xlu0 %3125
        %3127 = vrot.lane.b32.xlu0 %v3117, 76
        %v3128 = vpop.permute.xlu0 %3127
        %3129 = vrot.lane.b32.xlu0 %v3118, 76
        %v3130 = vpop.permute.xlu0 %3129
        %vm3131 = vcmask 621568
        %v3132 = vsel %vm3131, %v3124, %v3126
        %v3133 = vsel %vm3131, %v3128, %v3130
        %3136 = vst.msk [vmem:[#allocation4 + $0xf0] sm:$0xff] %vm2747, %v3132
        %3137 = vst.msk [vmem:[#allocation4 + $0xf8] sm:$0x3] %vm2749, %v3133
        %v3138 = vld [vmem:[#allocation13] sm:$0xff]
        %v3139 = vld [vmem:[#allocation13 + $0x8] sm:$0xff]
        %v3140 = vld [vmem:[#allocation13 + $0x10] sm:$0xff]
        %v3141 = vld [vmem:[#allocation13 + $0x18] sm:$0xff]
        %v3142 = vld [vmem:[#allocation13 + $0x20] sm:$0xf]
        %v3143 = vld [vmem:[#allocation13 + $0x28] sm:$0xf]
        %v3144 = vld [vmem:[#allocation4] sm:$0xff]
        %v3145 = vld [vmem:[#allocation4 + $0x8] sm:$0xff]
        %v3146 = vld [vmem:[#allocation4 + $0x10] sm:$0xff]
        %v3147 = vld [vmem:[#allocation4 + $0x18] sm:$0xff]
        %v3148 = vld [vmem:[#allocation4 + $0x20] sm:$0xff]
        %v3149 = vld [vmem:[#allocation4 + $0x28] sm:$0xff]
        %v3150 = vld [vmem:[#allocation4 + $0x30] sm:$0xff]
        %v3151 = vld [vmem:[#allocation4 + $0x38] sm:$0xff]
        %v3152 = vld [vmem:[#allocation4 + $0x40] sm:$0xff]
        %v3153 = vld [vmem:[#allocation4 + $0x48] sm:$0xff]
        %v3154 = vld [vmem:[#allocation4 + $0x50] sm:$0xff]
        %v3155 = vld [vmem:[#allocation4 + $0x58] sm:$0xff]
        %v3156 = vld [vmem:[#allocation4 + $0x60] sm:$0xff]
        %v3157 = vld [vmem:[#allocation4 + $0x68] sm:$0xff]
        %v3158 = vld [vmem:[#allocation4 + $0x70] sm:$0xff]
        %v3159 = vld [vmem:[#allocation4 + $0x78] sm:$0xff]
        %v3160 = vld [vmem:[#allocation4 + $0x80] sm:$0xff]
        %v3161 = vld [vmem:[#allocation4 + $0x88] sm:$0xff]
        %v3162 = vld [vmem:[#allocation4 + $0x90] sm:$0xff]
        %v3163 = vld [vmem:[#allocation4 + $0x98] sm:$0xff]
        %v3164 = vld [vmem:[#allocation4 + $0xa0] sm:$0xff]
        %v3165 = vld [vmem:[#allocation4 + $0xa8] sm:$0xff]
        %v3166 = vld [vmem:[#allocation4 + $0xb0] sm:$0xff]
        %v3167 = vld [vmem:[#allocation4 + $0xb8] sm:$0xff]
        %v3168 = vld [vmem:[#allocation4 + $0xc0] sm:$0xff]
        %v3169 = vld [vmem:[#allocation4 + $0xc8] sm:$0xff]
        %v3170 = vld [vmem:[#allocation4 + $0xd0] sm:$0xff]
        %v3171 = vld [vmem:[#allocation4 + $0xd8] sm:$0xff]
        %v3172 = vld [vmem:[#allocation4 + $0xe0] sm:$0xff]
        %v3173 = vld [vmem:[#allocation4 + $0xe8] sm:$0xff]
        %v3174 = vld [vmem:[#allocation4 + $0xf0] sm:$0xff]
        %v3175 = vld [vmem:[#allocation4 + $0xf8] sm:$0x3]
        %vm3176 = vcmask 998400
        %v3178 = vsel %vm3176, %v3139, 0
        %v3181 = vsel %vm3176, %v3141, 0
        %v3184 = vsel %vm3176, %v3143, 0
        %vm3186 = vcmask 1041408
        %v3188 = vsel %vm3186, %v3175, 0
        %3190 = vmatprep.subr.mxu0 0.0
        %3191 = vmatpush1.msra.mxu0 %v3144
        %3192 = vmatprep.subr.mxu0 0.0
        %3193 = vmatpush1.msra.mxu0 %v3145
        %3194 = vmatprep.subr.mxu0 0.0
        %3195 = vmatpush1.msra.mxu0 %v3146
        %3196 = vmatprep.subr.mxu0 0.0
        %3197 = vmatpush1.msra.mxu0 %v3147
        %3198 = vmatprep.subr.mxu0 0.0
        %3199 = vmatpush1.msra.mxu0 %v3148
        %3200 = vmatprep.subr.mxu0 0.0
        %3201 = vmatpush1.msra.mxu0 %v3149
        %3202 = vmatprep.subr.mxu0 0.0
        %3203 = vmatpush1.msra.mxu0 %v3150
        %3204 = vmatprep.subr.mxu0 0.0
        %3205 = vmatpush1.msra.mxu0 %v3151
        %3206 = vmatprep.subr.mxu0 0.0
        %3207 = vmatpush1.msra.mxu0 %v3152
        %3208 = vmatprep.subr.mxu0 0.0
        %3209 = vmatpush1.msra.mxu0 %v3153
        %3210 = vmatprep.subr.mxu0 0.0
        %3211 = vmatpush1.msra.mxu0 %v3154
        %3212 = vmatprep.subr.mxu0 0.0
        %3213 = vmatpush1.msra.mxu0 %v3155
        %3214 = vmatprep.subr.mxu0 0.0
        %3215 = vmatpush1.msra.mxu0 %v3156
        %3216 = vmatprep.subr.mxu0 0.0
        %3217 = vmatpush1.msra.mxu0 %v3157
        %3218 = vmatprep.subr.mxu0 0.0
        %3219 = vmatpush1.msra.mxu0 %v3158
        %3220 = vmatprep.subr.mxu0 0.0
        %3221 = vmatpush1.msra.mxu0 %v3159
        %3222 = vmatprep.subr.mxu0 0.0
        %3223 = vmatpush1.msra.mxu0 %v3160
        %3224 = vmatprep.subr.mxu0 0.0
        %3225 = vmatpush1.msra.mxu0 %v3161
        %3226 = vmatprep.subr.mxu0 0.0
        %3227 = vmatpush1.msra.mxu0 %v3162
        %3228 = vmatprep.subr.mxu0 0.0
        %3229 = vmatpush1.msra.mxu0 %v3163
        %3230 = vmatprep.subr.mxu0 0.0
        %3231 = vmatpush1.msra.mxu0 %v3164
        %3232 = vmatprep.subr.mxu0 0.0
        %3233 = vmatpush1.msra.mxu0 %v3165
        %3234 = vmatprep.subr.mxu0 0.0
        %3235 = vmatpush1.msra.mxu0 %v3166
        %3236 = vmatprep.subr.mxu0 0.0
        %3237 = vmatpush1.msra.mxu0 %v3167
        %3238 = vmatprep.subr.mxu0 0.0
        %3239 = vmatpush1.msra.mxu0 %v3168
        %3240 = vmatprep.subr.mxu0 0.0
        %3241 = vmatpush1.msra.mxu0 %v3169
        %3242 = vmatprep.subr.mxu0 0.0
        %3243 = vmatpush1.msra.mxu0 %v3170
        %3244 = vmatprep.subr.mxu0 0.0
        %3245 = vmatpush1.msra.mxu0 %v3171
        %3246 = vmatprep.subr.mxu0 0.0
        %3247 = vmatpush1.msra.mxu0 %v3172
        %3248 = vmatprep.subr.mxu0 0.0
        %3249 = vmatpush1.msra.mxu0 %v3173
        %3250 = vmatprep.subr.mxu0 0.0
        %3251 = vmatpush1.msra.mxu0 %v3174
        %3252 = vmatprep.subr.mxu0 0.0
        %3253 = vmatpush1.msra.mxu0 %v3188
        %3254 = vmatprep.mubr.f32.mxu0 %v3178
        %3255 = vmatmul.mubr.f32.gmra.mrb[0].mxu0 %v3138
        %v3256 = vpop.f32.mrb[0].mxu0
        %v3257 = vadd.f32 0.0, %v3256
        %v3258 = vpop.f32.mrb[0].mxu0
        %3259 = vmatprep.mubr.f32.mxu0 %v3181
        %3260 = vmatmul.mubr.f32.gmra.mrb[0].mxu0 %v3140
        %v3261 = vpop.f32.mrb[0].mxu0
        %v3262 = vadd.f32 0.0, %v3261
        %v3263 = vpop.f32.mrb[0].mxu0
        %3264 = vmatprep.mubr.f32.mxu0 %v3184
        %3265 = vmatmul.mubr.f32.gmra.mrb[0].mxu0 %v3142
        %v3266 = vpop.f32.mrb[0].mxu0
        %v3267 = vadd.f32 0.0, %v3266
        %v3268 = vpop.f32.mrb[0].mxu0
        %3269 = vdwg.mxu0
        %v3270 = vld [vmem:[#allocation16] sm:$0xff]
        %v3271 = vld [vmem:[#allocation16 + $0x8] sm:$0xff]
        %v3272 = vld [vmem:[#allocation16 + $0x10] sm:$0xff]
        %v3273 = vld [vmem:[#allocation16 + $0x18] sm:$0xff]
        %v3274 = vld [vmem:[#allocation16 + $0x20] sm:$0xff]
        %v3275 = vld [vmem:[#allocation16 + $0x28] sm:$0xff]
        %v3276 = vld [vmem:[#allocation16 + $0x30] sm:$0xff]
        %v3277 = vld [vmem:[#allocation16 + $0x38] sm:$0xff]
        %v3278 = vld [vmem:[#allocation16 + $0x40] sm:$0xff]
        %v3279 = vld [vmem:[#allocation16 + $0x48] sm:$0xff]
        %v3280 = vld [vmem:[#allocation16 + $0x50] sm:$0xff]
        %v3281 = vld [vmem:[#allocation16 + $0x58] sm:$0xf]
        %v3283 = vsel %vm2747, %v3257, 0
        %v3286 = vsel %vm2747, %v3262, 0
        %v3289 = vsel %vm2747, %v3267, 0
        %v3292 = vsel %vm1252, %v3281, 0
        %3294 = vmatprep.subr.mxu0 0.0
        %3295 = vmatpush1.msra.mxu0 %v3270
        %3296 = vmatprep.subr.mxu0 0.0
        %3297 = vmatpush1.msra.mxu0 %v3271
        %3298 = vmatprep.subr.mxu0 0.0
        %3299 = vmatpush1.msra.mxu0 %v3272
        %3300 = vmatprep.subr.mxu0 0.0
        %3301 = vmatpush1.msra.mxu0 %v3273
        %3302 = vmatprep.subr.mxu0 0.0
        %3303 = vmatpush1.msra.mxu0 %v3274
        %3304 = vmatprep.subr.mxu0 0.0
        %3305 = vmatpush1.msra.mxu0 %v3275
        %3306 = vmatprep.subr.mxu0 0.0
        %3307 = vmatpush1.msra.mxu0 %v3276
        %3308 = vmatprep.subr.mxu0 0.0
        %3309 = vmatpush1.msra.mxu0 %v3277
        %3310 = vmatprep.subr.mxu0 0.0
        %3311 = vmatpush1.msra.mxu0 %v3278
        %3312 = vmatprep.subr.mxu0 0.0
        %3313 = vmatpush1.msra.mxu0 %v3279
        %3314 = vmatprep.subr.mxu0 0.0
        %3315 = vmatpush1.msra.mxu0 %v3280
        %3316 = vmatprep.subr.mxu0 0.0
        %3317 = vmatpush1.msra.mxu0 %v3292
        %3318 = vmatprep.subr.mxu0 0.0
        %3319 = vmatpush1.msra.mxu0 0.0
        %3320 = vmatprep.subr.mxu0 0.0
        %3321 = vmatpush1.msra.mxu0 0.0
        %3322 = vmatprep.subr.mxu0 0.0
        %3323 = vmatpush1.msra.mxu0 0.0
        %3324 = vmatprep.subr.mxu0 0.0
        %3325 = vmatpush1.msra.mxu0 0.0
        %3326 = vmatprep.subr.mxu0 0.0
        %3327 = vmatpush1.msra.mxu0 0.0
        %3328 = vmatprep.subr.mxu0 0.0
        %3329 = vmatpush1.msra.mxu0 0.0
        %3330 = vmatprep.subr.mxu0 0.0
        %3331 = vmatpush1.msra.mxu0 0.0
        %3332 = vmatprep.subr.mxu0 0.0
        %3333 = vmatpush1.msra.mxu0 0.0
        %3334 = vmatprep.subr.mxu0 0.0
        %3335 = vmatpush1.msra.mxu0 0.0
        %3336 = vmatprep.subr.mxu0 0.0
        %3337 = vmatpush1.msra.mxu0 0.0
        %3338 = vmatprep.subr.mxu0 0.0
        %3339 = vmatpush1.msra.mxu0 0.0
        %3340 = vmatprep.subr.mxu0 0.0
        %3341 = vmatpush1.msra.mxu0 0.0
        %3342 = vmatprep.subr.mxu0 0.0
        %3343 = vmatpush1.msra.mxu0 0.0
        %3344 = vmatprep.subr.mxu0 0.0
        %3345 = vmatpush1.msra.mxu0 0.0
        %3346 = vmatprep.subr.mxu0 0.0
        %3347 = vmatpush1.msra.mxu0 0.0
        %3348 = vmatprep.subr.mxu0 0.0
        %3349 = vmatpush1.msra.mxu0 0.0
        %3350 = vmatprep.subr.mxu0 0.0
        %3351 = vmatpush1.msra.mxu0 0.0
        %3352 = vmatprep.subr.mxu0 0.0
        %3353 = vmatpush1.msra.mxu0 0.0
        %3354 = vmatprep.subr.mxu0 0.0
        %3355 = vmatpush1.msra.mxu0 0.0
        %3356 = vmatprep.subr.mxu0 0.0
        %3357 = vmatpush1.msra.mxu0 0.0
        %3358 = vmatprep.mubr.f32.mxu0 0.0
        %3359 = vmatmul.mubr.f32.gmra.mrb[0].mxu0 %v3283
        %v3360 = vpop.f32.mrb[0].mxu0
        %v3361 = vadd.f32 0.0, %v3360
        %v3362 = vpop.f32.mrb[0].mxu0
        %3363 = vmatprep.mubr.f32.mxu0 0.0
        %3364 = vmatmul.mubr.f32.gmra.mrb[0].mxu0 %v3286
        %v3365 = vpop.f32.mrb[0].mxu0
        %v3366 = vadd.f32 0.0, %v3365
        %v3367 = vpop.f32.mrb[0].mxu0
        %3368 = vmatprep.mubr.f32.mxu0 0.0
        %3369 = vmatmul.mubr.f32.gmra.mrb[0].mxu0 %v3289
        %v3370 = vpop.f32.mrb[0].mxu0
        %v3371 = vadd.f32 0.0, %v3370
        %v3372 = vpop.f32.mrb[0].mxu0
        %3373 = vdwg.mxu0
        %s3374 = scalar_lea.vmem [#allocation16], 96
        %v3375 = vld [vmem:[%s3374] sm:$0xff]
        %v3376 = vld [vmem:[%s3374 + $0x8] sm:$0xff]
        %v3377 = vld [vmem:[%s3374 + $0x10] sm:$0xff]
        %v3378 = vld [vmem:[%s3374 + $0x18] sm:$0xff]
        %v3379 = vld [vmem:[%s3374 + $0x20] sm:$0xff]
        %v3380 = vld [vmem:[%s3374 + $0x28] sm:$0xff]
        %v3381 = vld [vmem:[%s3374 + $0x30] sm:$0xff]
        %v3382 = vld [vmem:[%s3374 + $0x38] sm:$0xff]
        %v3383 = vld [vmem:[%s3374 + $0x40] sm:$0xff]
        %v3384 = vld [vmem:[%s3374 + $0x48] sm:$0xff]
        %v3385 = vld [vmem:[%s3374 + $0x50] sm:$0xff]
        %v3386 = vld [vmem:[%s3374 + $0x58] sm:$0xf]
        %v3388 = vsel %vm1252, %v3386, 0
        %3390 = vmatprep.subr.mxu0 0.0
        %3391 = vmatpush1.msra.mxu0 %v3375
        %3392 = vmatprep.subr.mxu0 0.0
        %3393 = vmatpush1.msra.mxu0 %v3376
        %3394 = vmatprep.subr.mxu0 0.0
        %3395 = vmatpush1.msra.mxu0 %v3377
        %3396 = vmatprep.subr.mxu0 0.0
        %3397 = vmatpush1.msra.mxu0 %v3378
        %3398 = vmatprep.subr.mxu0 0.0
        %3399 = vmatpush1.msra.mxu0 %v3379
        %3400 = vmatprep.subr.mxu0 0.0
        %3401 = vmatpush1.msra.mxu0 %v3380
        %3402 = vmatprep.subr.mxu0 0.0
        %3403 = vmatpush1.msra.mxu0 %v3381
        %3404 = vmatprep.subr.mxu0 0.0
        %3405 = vmatpush1.msra.mxu0 %v3382
        %3406 = vmatprep.subr.mxu0 0.0
        %3407 = vmatpush1.msra.mxu0 %v3383
        %3408 = vmatprep.subr.mxu0 0.0
        %3409 = vmatpush1.msra.mxu0 %v3384
        %3410 = vmatprep.subr.mxu0 0.0
        %3411 = vmatpush1.msra.mxu0 %v3385
        %3412 = vmatprep.subr.mxu0 0.0
        %3413 = vmatpush1.msra.mxu0 %v3388
        %3414 = vmatprep.subr.mxu0 0.0
        %3415 = vmatpush1.msra.mxu0 0.0
        %3416 = vmatprep.subr.mxu0 0.0
        %3417 = vmatpush1.msra.mxu0 0.0
        %3418 = vmatprep.subr.mxu0 0.0
        %3419 = vmatpush1.msra.mxu0 0.0
        %3420 = vmatprep.subr.mxu0 0.0
        %3421 = vmatpush1.msra.mxu0 0.0
        %3422 = vmatprep.subr.mxu0 0.0
        %3423 = vmatpush1.msra.mxu0 0.0
        %3424 = vmatprep.subr.mxu0 0.0
        %3425 = vmatpush1.msra.mxu0 0.0
        %3426 = vmatprep.subr.mxu0 0.0
        %3427 = vmatpush1.msra.mxu0 0.0
        %3428 = vmatprep.subr.mxu0 0.0
        %3429 = vmatpush1.msra.mxu0 0.0
        %3430 = vmatprep.subr.mxu0 0.0
        %3431 = vmatpush1.msra.mxu0 0.0
        %3432 = vmatprep.subr.mxu0 0.0
        %3433 = vmatpush1.msra.mxu0 0.0
        %3434 = vmatprep.subr.mxu0 0.0
        %3435 = vmatpush1.msra.mxu0 0.0
        %3436 = vmatprep.subr.mxu0 0.0
        %3437 = vmatpush1.msra.mxu0 0.0
        %3438 = vmatprep.subr.mxu0 0.0
        %3439 = vmatpush1.msra.mxu0 0.0
        %3440 = vmatprep.subr.mxu0 0.0
        %3441 = vmatpush1.msra.mxu0 0.0
        %3442 = vmatprep.subr.mxu0 0.0
        %3443 = vmatpush1.msra.mxu0 0.0
        %3444 = vmatprep.subr.mxu0 0.0
        %3445 = vmatpush1.msra.mxu0 0.0
        %3446 = vmatprep.subr.mxu0 0.0
        %3447 = vmatpush1.msra.mxu0 0.0
        %3448 = vmatprep.subr.mxu0 0.0
        %3449 = vmatpush1.msra.mxu0 0.0
        %3450 = vmatprep.subr.mxu0 0.0
        %3451 = vmatpush1.msra.mxu0 0.0
        %3452 = vmatprep.subr.mxu0 0.0
        %3453 = vmatpush1.msra.mxu0 0.0
        %3454 = vmatprep.mubr.f32.mxu0 0.0
        %3455 = vmatmul.mubr.f32.gmra.mrb[0].mxu0 %v3283
        %v3456 = vpop.f32.mrb[0].mxu0
        %v3457 = vadd.f32 0.0, %v3456
        %v3458 = vpop.f32.mrb[0].mxu0
        %3459 = vmatprep.mubr.f32.mxu0 0.0
        %3460 = vmatmul.mubr.f32.gmra.mrb[0].mxu0 %v3286
        %v3461 = vpop.f32.mrb[0].mxu0
        %v3462 = vadd.f32 0.0, %v3461
        %v3463 = vpop.f32.mrb[0].mxu0
        %3464 = vmatprep.mubr.f32.mxu0 0.0
        %3465 = vmatmul.mubr.f32.gmra.mrb[0].mxu0 %v3289
        %v3466 = vpop.f32.mrb[0].mxu0
        %v3467 = vadd.f32 0.0, %v3466
        %v3468 = vpop.f32.mrb[0].mxu0
        %3469 = vdwg.mxu0
        %v3470 = vmax.f32 %v3361, %v3457
        %v3471 = vmax.f32 %v3366, %v3462
        %v3472 = vmax.f32 %v3371, %v3467
        %s3473 = scalar_lea.vmem [#allocation16], 192
        %v3474 = vld [vmem:[%s3473] sm:$0xff]
        %v3475 = vld [vmem:[%s3473 + $0x8] sm:$0xff]
        %v3476 = vld [vmem:[%s3473 + $0x10] sm:$0xff]
        %v3477 = vld [vmem:[%s3473 + $0x18] sm:$0xff]
        %v3478 = vld [vmem:[%s3473 + $0x20] sm:$0xff]
        %v3479 = vld [vmem:[%s3473 + $0x28] sm:$0xff]
        %v3480 = vld [vmem:[%s3473 + $0x30] sm:$0xff]
        %v3481 = vld [vmem:[%s3473 + $0x38] sm:$0xff]
        %v3482 = vld [vmem:[%s3473 + $0x40] sm:$0xff]
        %v3483 = vld [vmem:[%s3473 + $0x48] sm:$0xff]
        %v3484 = vld [vmem:[%s3473 + $0x50] sm:$0xff]
        %v3485 = vld [vmem:[%s3473 + $0x58] sm:$0xf]
        %v3487 = vsel %vm1252, %v3485, 0
        %3489 = vmatprep.subr.mxu0 0.0
        %3490 = vmatpush1.msra.mxu0 %v3474
        %3491 = vmatprep.subr.mxu0 0.0
        %3492 = vmatpush1.msra.mxu0 %v3475
        %3493 = vmatprep.subr.mxu0 0.0
        %3494 = vmatpush1.msra.mxu0 %v3476
        %3495 = vmatprep.subr.mxu0 0.0
        %3496 = vmatpush1.msra.mxu0 %v3477
        %3497 = vmatprep.subr.mxu0 0.0
        %3498 = vmatpush1.msra.mxu0 %v3478
        %3499 = vmatprep.subr.mxu0 0.0
        %3500 = vmatpush1.msra.mxu0 %v3479
        %3501 = vmatprep.subr.mxu0 0.0
        %3502 = vmatpush1.msra.mxu0 %v3480
        %3503 = vmatprep.subr.mxu0 0.0
        %3504 = vmatpush1.msra.mxu0 %v3481
        %3505 = vmatprep.subr.mxu0 0.0
        %3506 = vmatpush1.msra.mxu0 %v3482
        %3507 = vmatprep.subr.mxu0 0.0
        %3508 = vmatpush1.msra.mxu0 %v3483
        %3509 = vmatprep.subr.mxu0 0.0
        %3510 = vmatpush1.msra.mxu0 %v3484
        %3511 = vmatprep.subr.mxu0 0.0
        %3512 = vmatpush1.msra.mxu0 %v3487
        %3513 = vmatprep.subr.mxu0 0.0
        %3514 = vmatpush1.msra.mxu0 0.0
        %3515 = vmatprep.subr.mxu0 0.0
        %3516 = vmatpush1.msra.mxu0 0.0
        %3517 = vmatprep.subr.mxu0 0.0
        %3518 = vmatpush1.msra.mxu0 0.0
        %3519 = vmatprep.subr.mxu0 0.0
        %3520 = vmatpush1.msra.mxu0 0.0
        %3521 = vmatprep.subr.mxu0 0.0
        %3522 = vmatpush1.msra.mxu0 0.0
        %3523 = vmatprep.subr.mxu0 0.0
        %3524 = vmatpush1.msra.mxu0 0.0
        %3525 = vmatprep.subr.mxu0 0.0
        %3526 = vmatpush1.msra.mxu0 0.0
        %3527 = vmatprep.subr.mxu0 0.0
        %3528 = vmatpush1.msra.mxu0 0.0
        %3529 = vmatprep.subr.mxu0 0.0
        %3530 = vmatpush1.msra.mxu0 0.0
        %3531 = vmatprep.subr.mxu0 0.0
        %3532 = vmatpush1.msra.mxu0 0.0
        %3533 = vmatprep.subr.mxu0 0.0
        %3534 = vmatpush1.msra.mxu0 0.0
        %3535 = vmatprep.subr.mxu0 0.0
        %3536 = vmatpush1.msra.mxu0 0.0
        %3537 = vmatprep.subr.mxu0 0.0
        %3538 = vmatpush1.msra.mxu0 0.0
        %3539 = vmatprep.subr.mxu0 0.0
        %3540 = vmatpush1.msra.mxu0 0.0
        %3541 = vmatprep.subr.mxu0 0.0
        %3542 = vmatpush1.msra.mxu0 0.0
        %3543 = vmatprep.subr.mxu0 0.0
        %3544 = vmatpush1.msra.mxu0 0.0
        %3545 = vmatprep.subr.mxu0 0.0
        %3546 = vmatpush1.msra.mxu0 0.0
        %3547 = vmatprep.subr.mxu0 0.0
        %3548 = vmatpush1.msra.mxu0 0.0
        %3549 = vmatprep.subr.mxu0 0.0
        %3550 = vmatpush1.msra.mxu0 0.0
        %3551 = vmatprep.subr.mxu0 0.0
        %3552 = vmatpush1.msra.mxu0 0.0
        %3553 = vmatprep.mubr.f32.mxu0 0.0
        %3554 = vmatmul.mubr.f32.gmra.mrb[0].mxu0 %v3283
        %v3555 = vpop.f32.mrb[0].mxu0
        %v3556 = vadd.f32 0.0, %v3555
        %v3557 = vpop.f32.mrb[0].mxu0
        %3558 = vmatprep.mubr.f32.mxu0 0.0
        %3559 = vmatmul.mubr.f32.gmra.mrb[0].mxu0 %v3286
        %v3560 = vpop.f32.mrb[0].mxu0
        %v3561 = vadd.f32 0.0, %v3560
        %v3562 = vpop.f32.mrb[0].mxu0
        %3563 = vmatprep.mubr.f32.mxu0 0.0
        %3564 = vmatmul.mubr.f32.gmra.mrb[0].mxu0 %v3289
        %v3565 = vpop.f32.mrb[0].mxu0
        %v3566 = vadd.f32 0.0, %v3565
        %v3567 = vpop.f32.mrb[0].mxu0
        %3568 = vdwg.mxu0
        %v3569 = vmax.f32 %v3470, %v3556
        %v3570 = vmax.f32 %v3471, %v3561
        %v3571 = vmax.f32 %v3472, %v3566
        %s3572 = scalar_lea.vmem [#allocation16], 288
        %v3573 = vld [vmem:[%s3572] sm:$0xff]
        %v3574 = vld [vmem:[%s3572 + $0x8] sm:$0xff]
        %v3575 = vld [vmem:[%s3572 + $0x10] sm:$0xff]
        %v3576 = vld [vmem:[%s3572 + $0x18] sm:$0xff]
        %v3577 = vld [vmem:[%s3572 + $0x20] sm:$0xff]
        %v3578 = vld [vmem:[%s3572 + $0x28] sm:$0xff]
        %v3579 = vld [vmem:[%s3572 + $0x30] sm:$0xff]
        %v3580 = vld [vmem:[%s3572 + $0x38] sm:$0xff]
        %v3581 = vld [vmem:[%s3572 + $0x40] sm:$0xff]
        %v3582 = vld [vmem:[%s3572 + $0x48] sm:$0xff]
        %v3583 = vld [vmem:[%s3572 + $0x50] sm:$0xff]
        %v3584 = vld [vmem:[%s3572 + $0x58] sm:$0xf]
        %v3586 = vsel %vm1252, %v3584, 0
        %3588 = vmatprep.subr.mxu0 0.0
        %3589 = vmatpush1.msra.mxu0 %v3573
        %3590 = vmatprep.subr.mxu0 0.0
        %3591 = vmatpush1.msra.mxu0 %v3574
        %3592 = vmatprep.subr.mxu0 0.0
        %3593 = vmatpush1.msra.mxu0 %v3575
        %3594 = vmatprep.subr.mxu0 0.0
        %3595 = vmatpush1.msra.mxu0 %v3576
        %3596 = vmatprep.subr.mxu0 0.0
        %3597 = vmatpush1.msra.mxu0 %v3577
        %3598 = vmatprep.subr.mxu0 0.0
        %3599 = vmatpush1.msra.mxu0 %v3578
        %3600 = vmatprep.subr.mxu0 0.0
        %3601 = vmatpush1.msra.mxu0 %v3579
        %3602 = vmatprep.subr.mxu0 0.0
        %3603 = vmatpush1.msra.mxu0 %v3580
        %3604 = vmatprep.subr.mxu0 0.0
        %3605 = vmatpush1.msra.mxu0 %v3581
        %3606 = vmatprep.subr.mxu0 0.0
        %3607 = vmatpush1.msra.mxu0 %v3582
        %3608 = vmatprep.subr.mxu0 0.0
        %3609 = vmatpush1.msra.mxu0 %v3583
        %3610 = vmatprep.subr.mxu0 0.0
        %3611 = vmatpush1.msra.mxu0 %v3586
        %3612 = vmatprep.subr.mxu0 0.0
        %3613 = vmatpush1.msra.mxu0 0.0
        %3614 = vmatprep.subr.mxu0 0.0
        %3615 = vmatpush1.msra.mxu0 0.0
        %3616 = vmatprep.subr.mxu0 0.0
        %3617 = vmatpush1.msra.mxu0 0.0
        %3618 = vmatprep.subr.mxu0 0.0
        %3619 = vmatpush1.msra.mxu0 0.0
        %3620 = vmatprep.subr.mxu0 0.0
        %3621 = vmatpush1.msra.mxu0 0.0
        %3622 = vmatprep.subr.mxu0 0.0
        %3623 = vmatpush1.msra.mxu0 0.0
        %3624 = vmatprep.subr.mxu0 0.0
        %3625 = vmatpush1.msra.mxu0 0.0
        %3626 = vmatprep.subr.mxu0 0.0
        %3627 = vmatpush1.msra.mxu0 0.0
        %3628 = vmatprep.subr.mxu0 0.0
        %3629 = vmatpush1.msra.mxu0 0.0
        %3630 = vmatprep.subr.mxu0 0.0
        %3631 = vmatpush1.msra.mxu0 0.0
        %3632 = vmatprep.subr.mxu0 0.0
        %3633 = vmatpush1.msra.mxu0 0.0
        %3634 = vmatprep.subr.mxu0 0.0
        %3635 = vmatpush1.msra.mxu0 0.0
        %3636 = vmatprep.subr.mxu0 0.0
        %3637 = vmatpush1.msra.mxu0 0.0
        %3638 = vmatprep.subr.mxu0 0.0
        %3639 = vmatpush1.msra.mxu0 0.0
        %3640 = vmatprep.subr.mxu0 0.0
        %3641 = vmatpush1.msra.mxu0 0.0
        %3642 = vmatprep.subr.mxu0 0.0
        %3643 = vmatpush1.msra.mxu0 0.0
        %3644 = vmatprep.subr.mxu0 0.0
        %3645 = vmatpush1.msra.mxu0 0.0
        %3646 = vmatprep.subr.mxu0 0.0
        %3647 = vmatpush1.msra.mxu0 0.0
        %3648 = vmatprep.subr.mxu0 0.0
        %3649 = vmatpush1.msra.mxu0 0.0
        %3650 = vmatprep.subr.mxu0 0.0
        %3651 = vmatpush1.msra.mxu0 0.0
        %3652 = vmatprep.mubr.f32.mxu0 0.0
        %3653 = vmatmul.mubr.f32.gmra.mrb[0].mxu0 %v3283
        %v3654 = vpop.f32.mrb[0].mxu0
        %v3655 = vadd.f32 0.0, %v3654
        %v3656 = vpop.f32.mrb[0].mxu0
        %3657 = vmatprep.mubr.f32.mxu0 0.0
        %3658 = vmatmul.mubr.f32.gmra.mrb[0].mxu0 %v3286
        %v3659 = vpop.f32.mrb[0].mxu0
        %v3660 = vadd.f32 0.0, %v3659
        %v3661 = vpop.f32.mrb[0].mxu0
        %3662 = vmatprep.mubr.f32.mxu0 0.0
        %3663 = vmatmul.mubr.f32.gmra.mrb[0].mxu0 %v3289
        %v3664 = vpop.f32.mrb[0].mxu0
        %v3665 = vadd.f32 0.0, %v3664
        %v3666 = vpop.f32.mrb[0].mxu0
        %3667 = vdwg.mxu0
        %v3668 = vmax.f32 %v3569, %v3655
        %v3669 = vmax.f32 %v3570, %v3660
        %v3670 = vmax.f32 %v3571, %v3665
        %v3671 = vld [vmem:[#allocation15] sm:$0xff]
        %v3672 = vld [vmem:[#allocation15 + $0x8] sm:$0xff]
        %v3673 = vld [vmem:[#allocation15 + $0x10] sm:$0xf]
        %3675 = vset.pattern.permute.xlu0 0
        %3676 = vperm.xlu0 %3675, %v3671
        %v3677 = vpop.permute.xlu0 %3676
        %3680 = vset.pattern.permute.xlu0 0
        %3681 = vperm.xlu0 %3680, %v3672
        %v3682 = vpop.permute.xlu0 %3681
        %3685 = vset.pattern.permute.xlu0 0
        %3686 = vperm.xlu0 %3685, %v3673
        %v3687 = vpop.permute.xlu0 %3686
        %v3689 = vadd.f32 %v3668, %v3677
        %v3690 = vadd.f32 %v3669, %v3682
        %v3691 = vadd.f32 %v3670, %v3687
        %v3692 = vmax.f32 %v3689, 0.0
        %v3693 = vmax.f32 %v3690, 0.0
        %v3694 = vmax.f32 %v3691, 0.0
        %3695 = vst.msk [vmem:[#allocation5] sm:$0xff] %vm744, %v3692
        %3696 = vst.msk [vmem:[#allocation5 + $0x8] sm:$0xff] %vm744, %v3693
        %vm3697 = vcmask 125952
        %3698 = vst.msk [vmem:[#allocation5 + $0x10] sm:$0xf] %vm3697, %v3694
        %v3699 = vld [vmem:[#allocation5] sm:$0x1]
        %vm3700 = vcmp.lt.s32.totalorder %v524, 16
        %vm3701 = vmand %vm525, %vm3700
        %3702 = vst.msk [vmem:[#allocation6] sm:$0x1] %vm3701, %v3699
        %v3703 = vld [vmem:[#allocation5 + $0x1] sm:$0x1]
        %v3706 = vunpack.c.l.s4 1966171168
        %v3707 = vunpack.c.0.s8 %v3706
        %v3708 = vlaneseq
        %v3709 = vshrl.u32 %v3708, 7
        %v3710 = vsub.s32 %v3707, %v3709
        %v3711 = vrot.slane %v3703, %v3710
        %v3713 = vunpack.c.l.s4 1966171168
        %v3714 = vunpack.c.0.s8 %v3713
        %v3715 = vlaneseq
        %v3716 = vshrl.u32 %v3715, 7
        %v3717 = vsub.s32 %v3714, %v3716
        %v3718 = vrot.slane %v3711, %v3717
        %3719 = vrot.lane.b32.xlu0 %v3718, 16
        %v3720 = vpop.permute.xlu0 %3719
        %vm3722 = vcmp.ge.s32.totalorder %v524, 16
        %vm3723 = vcmp.lt.s32.totalorder %v524, 32
        %vm3724 = vmand %vm3722, %vm3723
        %3725 = vst.msk [vmem:[#allocation6] sm:$0x1] %vm3724, %v3720
        %v3726 = vld [vmem:[#allocation5 + $0x2] sm:$0x1]
        %v3729 = vunpack.c.l.s4 1966171168
        %v3730 = vunpack.c.0.s8 %v3729
        %v3731 = vlaneseq
        %v3732 = vshrl.u32 %v3731, 7
        %v3733 = vsub.s32 %v3730, %v3732
        %v3734 = vrot.slane %v3726, %v3733
        %v3736 = vunpack.c.l.s4 1966171168
        %v3737 = vunpack.c.0.s8 %v3736
        %v3738 = vlaneseq
        %v3739 = vshrl.u32 %v3738, 7
        %v3740 = vsub.s32 %v3737, %v3739
        %v3741 = vrot.slane %v3734, %v3740
        %3742 = vrot.lane.b32.xlu0 %v3741, 32
        %v3743 = vpop.permute.xlu0 %3742
        %vm3745 = vcmp.ge.s32.totalorder %v524, 32
        %vm3746 = vcmp.lt.s32.totalorder %v524, 48
        %vm3747 = vmand %vm3745, %vm3746
        %3748 = vst.msk [vmem:[#allocation6] sm:$0x1] %vm3747, %v3743
        %v3749 = vld [vmem:[#allocation5 + $0x3] sm:$0x1]
        %v3752 = vunpack.c.l.s4 1966171168
        %v3753 = vunpack.c.0.s8 %v3752
        %v3754 = vlaneseq
        %v3755 = vshrl.u32 %v3754, 7
        %v3756 = vsub.s32 %v3753, %v3755
        %v3757 = vrot.slane %v3749, %v3756
        %v3759 = vunpack.c.l.s4 1966171168
        %v3760 = vunpack.c.0.s8 %v3759
        %v3761 = vlaneseq
        %v3762 = vshrl.u32 %v3761, 7
        %v3763 = vsub.s32 %v3760, %v3762
        %v3764 = vrot.slane %v3757, %v3763
        %3765 = vrot.lane.b32.xlu0 %v3764, 48
        %v3766 = vpop.permute.xlu0 %3765
        %vm3768 = vcmp.ge.s32.totalorder %v524, 48
        %vm3769 = vcmp.lt.s32.totalorder %v524, 64
        %vm3770 = vmand %vm3768, %vm3769
        %3771 = vst.msk [vmem:[#allocation6] sm:$0x1] %vm3770, %v3766
        %v3772 = vld [vmem:[#allocation5 + $0x4] sm:$0x1]
        %v3775 = vunpack.c.l.s4 1966171168
        %v3776 = vunpack.c.0.s8 %v3775
        %v3777 = vlaneseq
        %v3778 = vshrl.u32 %v3777, 7
        %v3779 = vsub.s32 %v3776, %v3778
        %v3780 = vrot.slane %v3772, %v3779
        %v3782 = vunpack.c.l.s4 1966171168
        %v3783 = vunpack.c.0.s8 %v3782
        %v3784 = vlaneseq
        %v3785 = vshrl.u32 %v3784, 7
        %v3786 = vsub.s32 %v3783, %v3785
        %v3787 = vrot.slane %v3780, %v3786
        %3788 = vrot.lane.b32.xlu0 %v3787, 64
        %v3789 = vpop.permute.xlu0 %3788
        %vm3791 = vcmp.ge.s32.totalorder %v524, 64
        %vm3792 = vcmp.lt.s32.totalorder %v524, 80
        %vm3793 = vmand %vm3791, %vm3792
        %3794 = vst.msk [vmem:[#allocation6] sm:$0x1] %vm3793, %v3789
        %v3795 = vld [vmem:[#allocation5 + $0x5] sm:$0x1]
        %v3798 = vunpack.c.l.s4 1966171168
        %v3799 = vunpack.c.0.s8 %v3798
        %v3800 = vlaneseq
        %v3801 = vshrl.u32 %v3800, 7
        %v3802 = vsub.s32 %v3799, %v3801
        %v3803 = vrot.slane %v3795, %v3802
        %v3805 = vunpack.c.l.s4 1966171168
        %v3806 = vunpack.c.0.s8 %v3805
        %v3807 = vlaneseq
        %v3808 = vshrl.u32 %v3807, 7
        %v3809 = vsub.s32 %v3806, %v3808
        %v3810 = vrot.slane %v3803, %v3809
        %3811 = vrot.lane.b32.xlu0 %v3810, 80
        %v3812 = vpop.permute.xlu0 %3811
        %vm3814 = vcmp.ge.s32.totalorder %v524, 80
        %vm3815 = vcmp.lt.s32.totalorder %v524, 96
        %vm3816 = vmand %vm3814, %vm3815
        %3817 = vst.msk [vmem:[#allocation6] sm:$0x1] %vm3816, %v3812
        %v3818 = vld [vmem:[#allocation5 + $0x6] sm:$0x1]
        %v3821 = vunpack.c.l.s4 1966171168
        %v3822 = vunpack.c.0.s8 %v3821
        %v3823 = vlaneseq
        %v3824 = vshrl.u32 %v3823, 7
        %v3825 = vsub.s32 %v3822, %v3824
        %v3826 = vrot.slane %v3818, %v3825
        %v3828 = vunpack.c.l.s4 1966171168
        %v3829 = vunpack.c.0.s8 %v3828
        %v3830 = vlaneseq
        %v3831 = vshrl.u32 %v3830, 7
        %v3832 = vsub.s32 %v3829, %v3831
        %v3833 = vrot.slane %v3826, %v3832
        %3834 = vrot.lane.b32.xlu0 %v3833, 96
        %v3835 = vpop.permute.xlu0 %3834
        %vm3837 = vcmp.ge.s32.totalorder %v524, 96
        %vm3838 = vcmp.lt.s32.totalorder %v524, 112
        %vm3839 = vmand %vm3837, %vm3838
        %3840 = vst.msk [vmem:[#allocation6] sm:$0x1] %vm3839, %v3835
        %v3841 = vld [vmem:[#allocation5 + $0x7] sm:$0x1]
        %v3844 = vunpack.c.l.s4 1966171168
        %v3845 = vunpack.c.0.s8 %v3844
        %v3846 = vlaneseq
        %v3847 = vshrl.u32 %v3846, 7
        %v3848 = vsub.s32 %v3845, %v3847
        %v3849 = vrot.slane %v3841, %v3848
        %v3851 = vunpack.c.l.s4 1966171168
        %v3852 = vunpack.c.0.s8 %v3851
        %v3853 = vlaneseq
        %v3854 = vshrl.u32 %v3853, 7
        %v3855 = vsub.s32 %v3852, %v3854
        %v3856 = vrot.slane %v3849, %v3855
        %3857 = vrot.lane.b32.xlu0 %v3856, 112
        %v3858 = vpop.permute.xlu0 %3857
        %vm3860 = vcmp.ge.s32.totalorder %v524, 112
        %vm3861 = vcmp.lt.s32.totalorder %v524, 128
        %vm3862 = vmand %vm3860, %vm3861
        %3863 = vst.msk [vmem:[#allocation6] sm:$0x1] %vm3862, %v3858
        %v3864 = vld [vmem:[#allocation5 + $0x8] sm:$0x1]
        %3865 = vst.msk [vmem:[#allocation6 + $0x1] sm:$0x1] %vm3701, %v3864
        %v3866 = vld [vmem:[#allocation5 + $0x9] sm:$0x1]
        %v3869 = vunpack.c.l.s4 1966171168
        %v3870 = vunpack.c.0.s8 %v3869
        %v3871 = vlaneseq
        %v3872 = vshrl.u32 %v3871, 7
        %v3873 = vsub.s32 %v3870, %v3872
        %v3874 = vrot.slane %v3866, %v3873
        %v3876 = vunpack.c.l.s4 1966171168
        %v3877 = vunpack.c.0.s8 %v3876
        %v3878 = vlaneseq
        %v3879 = vshrl.u32 %v3878, 7
        %v3880 = vsub.s32 %v3877, %v3879
        %v3881 = vrot.slane %v3874, %v3880
        %3882 = vrot.lane.b32.xlu0 %v3881, 16
        %v3883 = vpop.permute.xlu0 %3882
        %3885 = vst.msk [vmem:[#allocation6 + $0x1] sm:$0x1] %vm3724, %v3883
        %v3886 = vld [vmem:[#allocation5 + $0xa] sm:$0x1]
        %v3889 = vunpack.c.l.s4 1966171168
        %v3890 = vunpack.c.0.s8 %v3889
        %v3891 = vlaneseq
        %v3892 = vshrl.u32 %v3891, 7
        %v3893 = vsub.s32 %v3890, %v3892
        %v3894 = vrot.slane %v3886, %v3893
        %v3896 = vunpack.c.l.s4 1966171168
        %v3897 = vunpack.c.0.s8 %v3896
        %v3898 = vlaneseq
        %v3899 = vshrl.u32 %v3898, 7
        %v3900 = vsub.s32 %v3897, %v3899
        %v3901 = vrot.slane %v3894, %v3900
        %3902 = vrot.lane.b32.xlu0 %v3901, 32
        %v3903 = vpop.permute.xlu0 %3902
        %3905 = vst.msk [vmem:[#allocation6 + $0x1] sm:$0x1] %vm3747, %v3903
        %v3906 = vld [vmem:[#allocation5 + $0xb] sm:$0x1]
        %v3909 = vunpack.c.l.s4 1966171168
        %v3910 = vunpack.c.0.s8 %v3909
        %v3911 = vlaneseq
        %v3912 = vshrl.u32 %v3911, 7
        %v3913 = vsub.s32 %v3910, %v3912
        %v3914 = vrot.slane %v3906, %v3913
        %v3916 = vunpack.c.l.s4 1966171168
        %v3917 = vunpack.c.0.s8 %v3916
        %v3918 = vlaneseq
        %v3919 = vshrl.u32 %v3918, 7
        %v3920 = vsub.s32 %v3917, %v3919
        %v3921 = vrot.slane %v3914, %v3920
        %3922 = vrot.lane.b32.xlu0 %v3921, 48
        %v3923 = vpop.permute.xlu0 %3922
        %3925 = vst.msk [vmem:[#allocation6 + $0x1] sm:$0x1] %vm3770, %v3923
        %v3926 = vld [vmem:[#allocation5 + $0xc] sm:$0x1]
        %v3929 = vunpack.c.l.s4 1966171168
        %v3930 = vunpack.c.0.s8 %v3929
        %v3931 = vlaneseq
        %v3932 = vshrl.u32 %v3931, 7
        %v3933 = vsub.s32 %v3930, %v3932
        %v3934 = vrot.slane %v3926, %v3933
        %v3936 = vunpack.c.l.s4 1966171168
        %v3937 = vunpack.c.0.s8 %v3936
        %v3938 = vlaneseq
        %v3939 = vshrl.u32 %v3938, 7
        %v3940 = vsub.s32 %v3937, %v3939
        %v3941 = vrot.slane %v3934, %v3940
        %3942 = vrot.lane.b32.xlu0 %v3941, 64
        %v3943 = vpop.permute.xlu0 %3942
        %3945 = vst.msk [vmem:[#allocation6 + $0x1] sm:$0x1] %vm3793, %v3943
        %v3946 = vld [vmem:[#allocation5 + $0xd] sm:$0x1]
        %v3949 = vunpack.c.l.s4 1966171168
        %v3950 = vunpack.c.0.s8 %v3949
        %v3951 = vlaneseq
        %v3952 = vshrl.u32 %v3951, 7
        %v3953 = vsub.s32 %v3950, %v3952
        %v3954 = vrot.slane %v3946, %v3953
        %v3956 = vunpack.c.l.s4 1966171168
        %v3957 = vunpack.c.0.s8 %v3956
        %v3958 = vlaneseq
        %v3959 = vshrl.u32 %v3958, 7
        %v3960 = vsub.s32 %v3957, %v3959
        %v3961 = vrot.slane %v3954, %v3960
        %3962 = vrot.lane.b32.xlu0 %v3961, 80
        %v3963 = vpop.permute.xlu0 %3962
        %3965 = vst.msk [vmem:[#allocation6 + $0x1] sm:$0x1] %vm3816, %v3963
        %v3966 = vld [vmem:[#allocation5 + $0xe] sm:$0x1]
        %v3969 = vunpack.c.l.s4 1966171168
        %v3970 = vunpack.c.0.s8 %v3969
        %v3971 = vlaneseq
        %v3972 = vshrl.u32 %v3971, 7
        %v3973 = vsub.s32 %v3970, %v3972
        %v3974 = vrot.slane %v3966, %v3973
        %v3976 = vunpack.c.l.s4 1966171168
        %v3977 = vunpack.c.0.s8 %v3976
        %v3978 = vlaneseq
        %v3979 = vshrl.u32 %v3978, 7
        %v3980 = vsub.s32 %v3977, %v3979
        %v3981 = vrot.slane %v3974, %v3980
        %3982 = vrot.lane.b32.xlu0 %v3981, 96
        %v3983 = vpop.permute.xlu0 %3982
        %3985 = vst.msk [vmem:[#allocation6 + $0x1] sm:$0x1] %vm3839, %v3983
        %v3986 = vld [vmem:[#allocation5 + $0xf] sm:$0x1]
        %v3989 = vunpack.c.l.s4 1966171168
        %v3990 = vunpack.c.0.s8 %v3989
        %v3991 = vlaneseq
        %v3992 = vshrl.u32 %v3991, 7
        %v3993 = vsub.s32 %v3990, %v3992
        %v3994 = vrot.slane %v3986, %v3993
        %v3996 = vunpack.c.l.s4 1966171168
        %v3997 = vunpack.c.0.s8 %v3996
        %v3998 = vlaneseq
        %v3999 = vshrl.u32 %v3998, 7
        %v4000 = vsub.s32 %v3997, %v3999
        %v4001 = vrot.slane %v3994, %v4000
        %4002 = vrot.lane.b32.xlu0 %v4001, 112
        %v4003 = vpop.permute.xlu0 %4002
        %4005 = vst.msk [vmem:[#allocation6 + $0x1] sm:$0x1] %vm3862, %v4003
        %v4006 = vld [vmem:[#allocation5 + $0x10] sm:$0x1]
        %4007 = vst.msk [vmem:[#allocation6 + $0x2] sm:$0x1] %vm3701, %v4006
        %v4008 = vld [vmem:[#allocation5 + $0x11] sm:$0x1]
        %v4011 = vunpack.c.l.s4 1966171168
        %v4012 = vunpack.c.0.s8 %v4011
        %v4013 = vlaneseq
        %v4014 = vshrl.u32 %v4013, 7
        %v4015 = vsub.s32 %v4012, %v4014
        %v4016 = vrot.slane %v4008, %v4015
        %v4018 = vunpack.c.l.s4 1966171168
        %v4019 = vunpack.c.0.s8 %v4018
        %v4020 = vlaneseq
        %v4021 = vshrl.u32 %v4020, 7
        %v4022 = vsub.s32 %v4019, %v4021
        %v4023 = vrot.slane %v4016, %v4022
        %4024 = vrot.lane.b32.xlu0 %v4023, 16
        %v4025 = vpop.permute.xlu0 %4024
        %4027 = vst.msk [vmem:[#allocation6 + $0x2] sm:$0x1] %vm3724, %v4025
        %v4028 = vld [vmem:[#allocation5 + $0x12] sm:$0x1]
        %v4031 = vunpack.c.l.s4 1966171168
        %v4032 = vunpack.c.0.s8 %v4031
        %v4033 = vlaneseq
        %v4034 = vshrl.u32 %v4033, 7
        %v4035 = vsub.s32 %v4032, %v4034
        %v4036 = vrot.slane %v4028, %v4035
        %v4038 = vunpack.c.l.s4 1966171168
        %v4039 = vunpack.c.0.s8 %v4038
        %v4040 = vlaneseq
        %v4041 = vshrl.u32 %v4040, 7
        %v4042 = vsub.s32 %v4039, %v4041
        %v4043 = vrot.slane %v4036, %v4042
        %4044 = vrot.lane.b32.xlu0 %v4043, 32
        %v4045 = vpop.permute.xlu0 %4044
        %4047 = vst.msk [vmem:[#allocation6 + $0x2] sm:$0x1] %vm3747, %v4045
        %v4048 = vld [vmem:[#allocation5 + $0x13] sm:$0x1]
        %v4051 = vunpack.c.l.s4 1966171168
        %v4052 = vunpack.c.0.s8 %v4051
        %v4053 = vlaneseq
        %v4054 = vshrl.u32 %v4053, 7
        %v4055 = vsub.s32 %v4052, %v4054
        %v4056 = vrot.slane %v4048, %v4055
        %v4058 = vunpack.c.l.s4 1966171168
        %v4059 = vunpack.c.0.s8 %v4058
        %v4060 = vlaneseq
        %v4061 = vshrl.u32 %v4060, 7
        %v4062 = vsub.s32 %v4059, %v4061
        %v4063 = vrot.slane %v4056, %v4062
        %4064 = vrot.lane.b32.xlu0 %v4063, 48
        %v4065 = vpop.permute.xlu0 %4064
        %4067 = vst.msk [vmem:[#allocation6 + $0x2] sm:$0x1] %vm3770, %v4065
        %v4068 = vld [vmem:[#allocation6] sm:$0x7]
        %v4069 = vld [vmem:[#allocation18] sm:$0xff]
        %v4070 = vld [vmem:[#allocation18 + $0x8] sm:$0xff]
        %v4071 = vld [vmem:[#allocation18 + $0x10] sm:$0xff]
        %v4072 = vld [vmem:[#allocation18 + $0x18] sm:$0xff]
        %v4073 = vld [vmem:[#allocation18 + $0x20] sm:$0xff]
        %v4074 = vld [vmem:[#allocation18 + $0x28] sm:$0xff]
        %v4075 = vld [vmem:[#allocation18 + $0x30] sm:$0xff]
        %v4076 = vld [vmem:[#allocation18 + $0x38] sm:$0xff]
        %v4077 = vld [vmem:[#allocation18 + $0x40] sm:$0xff]
        %v4078 = vld [vmem:[#allocation18 + $0x48] sm:$0xff]
        %v4079 = vld [vmem:[#allocation18 + $0x50] sm:$0xff]
        %v4080 = vld [vmem:[#allocation18 + $0x58] sm:$0xff]
        %v4081 = vld [vmem:[#allocation18 + $0x60] sm:$0xff]
        %v4082 = vld [vmem:[#allocation18 + $0x68] sm:$0xff]
        %v4083 = vld [vmem:[#allocation18 + $0x70] sm:$0xff]
        %v4084 = vld [vmem:[#allocation18 + $0x78] sm:$0xff]
        %v4085 = vld [vmem:[#allocation18 + $0x80] sm:$0xff]
        %v4086 = vld [vmem:[#allocation18 + $0x88] sm:$0xff]
        %v4087 = vld [vmem:[#allocation18 + $0x90] sm:$0xff]
        %v4088 = vld [vmem:[#allocation18 + $0x98] sm:$0xff]
        %v4089 = vld [vmem:[#allocation18 + $0xa0] sm:$0xff]
        %v4090 = vld [vmem:[#allocation18 + $0xa8] sm:$0xff]
        %v4091 = vld [vmem:[#allocation18 + $0xb0] sm:$0xff]
        %v4092 = vld [vmem:[#allocation18 + $0xb8] sm:$0xff]
        %v4093 = vld [vmem:[#allocation18 + $0xc0] sm:$0xff]
        %v4094 = vld [vmem:[#allocation18 + $0xc8] sm:$0xff]
        %v4095 = vld [vmem:[#allocation18 + $0xd0] sm:$0xff]
        %v4096 = vld [vmem:[#allocation18 + $0xd8] sm:$0xff]
        %v4097 = vld [vmem:[#allocation18 + $0xe0] sm:$0xff]
        %v4098 = vld [vmem:[#allocation18 + $0xe8] sm:$0xff]
        %v4099 = vld [vmem:[#allocation18 + $0xf0] sm:$0xff]
        %v4100 = vld [vmem:[#allocation18 + $0xf8] sm:$0xff]
        %v4101 = vld [vmem:[#allocation18 + $0x100] sm:$0xff]
        %v4102 = vld [vmem:[#allocation18 + $0x108] sm:$0xff]
        %v4103 = vld [vmem:[#allocation18 + $0x110] sm:$0xff]
        %v4104 = vld [vmem:[#allocation18 + $0x118] sm:$0xff]
        %v4105 = vld [vmem:[#allocation18 + $0x120] sm:$0xff]
        %v4106 = vld [vmem:[#allocation18 + $0x128] sm:$0xff]
        %v4107 = vld [vmem:[#allocation18 + $0x130] sm:$0xff]
        %v4108 = vld [vmem:[#allocation18 + $0x138] sm:$0xff]
        %v4109 = vld [vmem:[#allocation19] sm:$0x1]
        %v4111 = vlaneseq
        %v4112 = vshrl.u32 %v4111, 7
        %v4113 = vsub.s32 0, %v4112
        %v4114 = vrot.slane %v4068, %v4113
        %v4115 = vlaneseq
        %v4116 = vshrl.u32 %v4115, 7
        %v4117 = vsub.s32 1, %v4116
        %v4118 = vrot.slane %v4068, %v4117
        %v4119 = vlaneseq
        %v4120 = vshrl.u32 %v4119, 7
        %v4121 = vsub.s32 2, %v4120
        %v4122 = vrot.slane %v4068, %v4121
        %vm4125 = vcmask 523264
        %v4126 = vsel %vm4125, %v4122, 0
        %4128 = vmatprep.subr.mxu0 0.0
        %4129 = vmatpush1.msra.mxu0 %v4069
        %4130 = vmatprep.subr.mxu0 0.0
        %4131 = vmatpush1.msra.mxu0 %v4070
        %4132 = vmatprep.subr.mxu0 0.0
        %4133 = vmatpush1.msra.mxu0 %v4071
        %4134 = vmatprep.subr.mxu0 0.0
        %4135 = vmatpush1.msra.mxu0 %v4072
        %4136 = vmatprep.subr.mxu0 0.0
        %4137 = vmatpush1.msra.mxu0 %v4073
        %4138 = vmatprep.subr.mxu0 0.0
        %4139 = vmatpush1.msra.mxu0 %v4074
        %4140 = vmatprep.subr.mxu0 0.0
        %4141 = vmatpush1.msra.mxu0 %v4075
        %4142 = vmatprep.subr.mxu0 0.0
        %4143 = vmatpush1.msra.mxu0 %v4076
        %4144 = vmatprep.subr.mxu0 0.0
        %4145 = vmatpush1.msra.mxu0 %v4077
        %4146 = vmatprep.subr.mxu0 0.0
        %4147 = vmatpush1.msra.mxu0 %v4078
        %4148 = vmatprep.subr.mxu0 0.0
        %4149 = vmatpush1.msra.mxu0 %v4079
        %4150 = vmatprep.subr.mxu0 0.0
        %4151 = vmatpush1.msra.mxu0 %v4080
        %4152 = vmatprep.subr.mxu0 0.0
        %4153 = vmatpush1.msra.mxu0 %v4081
        %4154 = vmatprep.subr.mxu0 0.0
        %4155 = vmatpush1.msra.mxu0 %v4082
        %4156 = vmatprep.subr.mxu0 0.0
        %4157 = vmatpush1.msra.mxu0 %v4083
        %4158 = vmatprep.subr.mxu0 0.0
        %4159 = vmatpush1.msra.mxu0 %v4084
        %4160 = vmatprep.subr.mxu0 0.0
        %4161 = vmatpush1.msra.mxu0 %v4085
        %4162 = vmatprep.subr.mxu0 0.0
        %4163 = vmatpush1.msra.mxu0 %v4086
        %4164 = vmatprep.subr.mxu0 0.0
        %4165 = vmatpush1.msra.mxu0 %v4087
        %4166 = vmatprep.subr.mxu0 0.0
        %4167 = vmatpush1.msra.mxu0 %v4088
        %4168 = vmatprep.subr.mxu0 0.0
        %4169 = vmatpush1.msra.mxu0 %v4089
        %4170 = vmatprep.subr.mxu0 0.0
        %4171 = vmatpush1.msra.mxu0 %v4090
        %4172 = vmatprep.subr.mxu0 0.0
        %4173 = vmatpush1.msra.mxu0 %v4091
        %4174 = vmatprep.subr.mxu0 0.0
        %4175 = vmatpush1.msra.mxu0 %v4092
        %4176 = vmatprep.subr.mxu0 0.0
        %4177 = vmatpush1.msra.mxu0 %v4093
        %4178 = vmatprep.subr.mxu0 0.0
        %4179 = vmatpush1.msra.mxu0 %v4094
        %4180 = vmatprep.subr.mxu0 0.0
        %4181 = vmatpush1.msra.mxu0 %v4095
        %4182 = vmatprep.subr.mxu0 0.0
        %4183 = vmatpush1.msra.mxu0 %v4096
        %4184 = vmatprep.subr.mxu0 0.0
        %4185 = vmatpush1.msra.mxu0 %v4097
        %4186 = vmatprep.subr.mxu0 0.0
        %4187 = vmatpush1.msra.mxu0 %v4098
        %4188 = vmatprep.subr.mxu0 0.0
        %4189 = vmatpush1.msra.mxu0 %v4099
        %4190 = vmatprep.subr.mxu0 0.0
        %4191 = vmatpush1.msra.mxu0 %v4100
        %4192 = vmatprep.mubr.f32.mxu0 %v4118
        %4193 = vmatmul.mubr.f32.gmra.mrb[0].mxu0 %v4114
        %v4194 = vpop.f32.mrb[0].mxu0
        %v4195 = vadd.f32 %v4109, %v4194
        %v4196 = vpop.f32.mrb[0].mxu0
        %4197 = vdwg.mxu0
        %4198 = vmatprep.subr.mxu0 0.0
        %4199 = vmatpush1.msra.mxu0 %v4101
        %4200 = vmatprep.subr.mxu0 0.0
        %4201 = vmatpush1.msra.mxu0 %v4102
        %4202 = vmatprep.subr.mxu0 0.0
        %4203 = vmatpush1.msra.mxu0 %v4103
        %4204 = vmatprep.subr.mxu0 0.0
        %4205 = vmatpush1.msra.mxu0 %v4104
        %4206 = vmatprep.subr.mxu0 0.0
        %4207 = vmatpush1.msra.mxu0 %v4105
        %4208 = vmatprep.subr.mxu0 0.0
        %4209 = vmatpush1.msra.mxu0 %v4106
        %4210 = vmatprep.subr.mxu0 0.0
        %4211 = vmatpush1.msra.mxu0 %v4107
        %4212 = vmatprep.subr.mxu0 0.0
        %4213 = vmatpush1.msra.mxu0 %v4108
        %4214 = vmatprep.subr.mxu0 0.0
        %4215 = vmatpush1.msra.mxu0 0.0
        %4216 = vmatprep.subr.mxu0 0.0
        %4217 = vmatpush1.msra.mxu0 0.0
        %4218 = vmatprep.subr.mxu0 0.0
        %4219 = vmatpush1.msra.mxu0 0.0
        %4220 = vmatprep.subr.mxu0 0.0
        %4221 = vmatpush1.msra.mxu0 0.0
        %4222 = vmatprep.subr.mxu0 0.0
        %4223 = vmatpush1.msra.mxu0 0.0
        %4224 = vmatprep.subr.mxu0 0.0
        %4225 = vmatpush1.msra.mxu0 0.0
        %4226 = vmatprep.subr.mxu0 0.0
        %4227 = vmatpush1.msra.mxu0 0.0
        %4228 = vmatprep.subr.mxu0 0.0
        %4229 = vmatpush1.msra.mxu0 0.0
        %4230 = vmatprep.subr.mxu0 0.0
        %4231 = vmatpush1.msra.mxu0 0.0
        %4232 = vmatprep.subr.mxu0 0.0
        %4233 = vmatpush1.msra.mxu0 0.0
        %4234 = vmatprep.subr.mxu0 0.0
        %4235 = vmatpush1.msra.mxu0 0.0
        %4236 = vmatprep.subr.mxu0 0.0
        %4237 = vmatpush1.msra.mxu0 0.0
        %4238 = vmatprep.subr.mxu0 0.0
        %4239 = vmatpush1.msra.mxu0 0.0
        %4240 = vmatprep.subr.mxu0 0.0
        %4241 = vmatpush1.msra.mxu0 0.0
        %4242 = vmatprep.subr.mxu0 0.0
        %4243 = vmatpush1.msra.mxu0 0.0
        %4244 = vmatprep.subr.mxu0 0.0
        %4245 = vmatpush1.msra.mxu0 0.0
        %4246 = vmatprep.subr.mxu0 0.0
        %4247 = vmatpush1.msra.mxu0 0.0
        %4248 = vmatprep.subr.mxu0 0.0
        %4249 = vmatpush1.msra.mxu0 0.0
        %4250 = vmatprep.subr.mxu0 0.0
        %4251 = vmatpush1.msra.mxu0 0.0
        %4252 = vmatprep.subr.mxu0 0.0
        %4253 = vmatpush1.msra.mxu0 0.0
        %4254 = vmatprep.subr.mxu0 0.0
        %4255 = vmatpush1.msra.mxu0 0.0
        %4256 = vmatprep.subr.mxu0 0.0
        %4257 = vmatpush1.msra.mxu0 0.0
        %4258 = vmatprep.subr.mxu0 0.0
        %4259 = vmatpush1.msra.mxu0 0.0
        %4260 = vmatprep.subr.mxu0 0.0
        %4261 = vmatpush1.msra.mxu0 0.0
        %4262 = vmatprep.mubr.f32.mxu0 0.0
        %4263 = vmatmul.mubr.f32.gmra.mrb[0].mxu0 %v4126
        %v4264 = vpop.f32.mrb[0].mxu0
        %v4265 = vadd.f32 %v4195, %v4264
        %v4266 = vpop.f32.mrb[0].mxu0
        %4267 = vdwg.mxu0
        %v4268 = vmax.f32 %v4265, 0.0
        %v4269 = vld [vmem:[#allocation21] sm:$0xff]
        %v4270 = vld [vmem:[#allocation21 + $0x8] sm:$0xff]
        %v4271 = vld [vmem:[#allocation21 + $0x10] sm:$0xff]
        %v4272 = vld [vmem:[#allocation21 + $0x18] sm:$0xff]
        %v4273 = vld [vmem:[#allocation21 + $0x20] sm:$0xff]
        %v4274 = vld [vmem:[#allocation21 + $0x28] sm:$0xff]
        %v4275 = vld [vmem:[#allocation21 + $0x30] sm:$0x3]
        %v4276 = vld [vmem:[#allocation22] sm:$0x1]
        %vm4277 = vcmask 408576
        %v4279 = vsel %vm4277, %v4268, 0
        %v4282 = vsel %vm3186, %v4275, 0
        %4284 = vmatprep.subr.mxu0 0.0
        %4285 = vmatpush1.msra.mxu0 %v4269
        %4286 = vmatprep.subr.mxu0 0.0
        %4287 = vmatpush1.msra.mxu0 %v4270
        %4288 = vmatprep.subr.mxu0 0.0
        %4289 = vmatpush1.msra.mxu0 %v4271
        %4290 = vmatprep.subr.mxu0 0.0
        %4291 = vmatpush1.msra.mxu0 %v4272
        %4292 = vmatprep.subr.mxu0 0.0
        %4293 = vmatpush1.msra.mxu0 %v4273
        %4294 = vmatprep.subr.mxu0 0.0
        %4295 = vmatpush1.msra.mxu0 %v4274
        %4296 = vmatprep.subr.mxu0 0.0
        %4297 = vmatpush1.msra.mxu0 %v4282
        %4298 = vmatprep.subr.mxu0 0.0
        %4299 = vmatpush1.msra.mxu0 0.0
        %4300 = vmatprep.subr.mxu0 0.0
        %4301 = vmatpush1.msra.mxu0 0.0
        %4302 = vmatprep.subr.mxu0 0.0
        %4303 = vmatpush1.msra.mxu0 0.0
        %4304 = vmatprep.subr.mxu0 0.0
        %4305 = vmatpush1.msra.mxu0 0.0
        %4306 = vmatprep.subr.mxu0 0.0
        %4307 = vmatpush1.msra.mxu0 0.0
        %4308 = vmatprep.subr.mxu0 0.0
        %4309 = vmatpush1.msra.mxu0 0.0
        %4310 = vmatprep.subr.mxu0 0.0
        %4311 = vmatpush1.msra.mxu0 0.0
        %4312 = vmatprep.subr.mxu0 0.0
        %4313 = vmatpush1.msra.mxu0 0.0
        %4314 = vmatprep.subr.mxu0 0.0
        %4315 = vmatpush1.msra.mxu0 0.0
        %4316 = vmatprep.subr.mxu0 0.0
        %4317 = vmatpush1.msra.mxu0 0.0
        %4318 = vmatprep.subr.mxu0 0.0
        %4319 = vmatpush1.msra.mxu0 0.0
        %4320 = vmatprep.subr.mxu0 0.0
        %4321 = vmatpush1.msra.mxu0 0.0
        %4322 = vmatprep.subr.mxu0 0.0
        %4323 = vmatpush1.msra.mxu0 0.0
        %4324 = vmatprep.subr.mxu0 0.0
        %4325 = vmatpush1.msra.mxu0 0.0
        %4326 = vmatprep.subr.mxu0 0.0
        %4327 = vmatpush1.msra.mxu0 0.0
        %4328 = vmatprep.subr.mxu0 0.0
        %4329 = vmatpush1.msra.mxu0 0.0
        %4330 = vmatprep.subr.mxu0 0.0
        %4331 = vmatpush1.msra.mxu0 0.0
        %4332 = vmatprep.subr.mxu0 0.0
        %4333 = vmatpush1.msra.mxu0 0.0
        %4334 = vmatprep.subr.mxu0 0.0
        %4335 = vmatpush1.msra.mxu0 0.0
        %4336 = vmatprep.subr.mxu0 0.0
        %4337 = vmatpush1.msra.mxu0 0.0
        %4338 = vmatprep.subr.mxu0 0.0
        %4339 = vmatpush1.msra.mxu0 0.0
        %4340 = vmatprep.subr.mxu0 0.0
        %4341 = vmatpush1.msra.mxu0 0.0
        %4342 = vmatprep.subr.mxu0 0.0
        %4343 = vmatpush1.msra.mxu0 0.0
        %4344 = vmatprep.subr.mxu0 0.0
        %4345 = vmatpush1.msra.mxu0 0.0
        %4346 = vmatprep.subr.mxu0 0.0
        %4347 = vmatpush1.msra.mxu0 0.0
        %4348 = vmatprep.mubr.f32.mxu0 0.0
        %4349 = vmatmul.mubr.f32.gmra.mrb[0].mxu0 %v4279
        %v4350 = vpop.f32.mrb[0].mxu0
        %v4351 = vadd.f32 %v4276, %v4350
        %v4352 = vpop.f32.mrb[0].mxu0
        %4353 = vdwg.mxu0
        %vm4354 = vcmask 73728
        %v4355 = vsel %vm4354, %v4351, -inf
        %4356 = vmax.xlane.f32.xlu0 %v4355
        %v4357 = vpop.xlane.xlu0 %4356
        %v4358 = vsub.f32 %v4351, %v4357
        %v4359 = vmul.f32 %v4358, 1.442695
        %v4360 = vpow.pop %v4359
        %v4361 = vsel %vm4354, %v4360, 0.0
        %4362 = vadd.xlane.f32.xlu0 %v4361
        %v4363 = vpop.xlane.xlu0 %4362
        %v4364 = vlog2.pop %v4363
        %v4365 = vmul.f32 %v4364, 0.6931472
        %v4366 = vadd.f32 %v4365, %v4357
        %v4367 = vsub.f32 %v4351, %v4366
        %4368 = vst.msk [vmem:[%s518] sm:$0x1] %vm4354, %v4367
        %s4369 = sand.u32 %s275, 1
        %s4370 = scalar_lea.sflag [#allocation9], %s4369
        %s4371 = sand.u32 %s275, 1
        %s4372 = scalar_lea.vmem [#allocation24], %s4371
        // Predicated region
        $region105: #{_forward_impl.1} parent=63 // pred_check
          %p4373 = pneg %p285
        $region106: #{_forward_impl.1} parent=63 // pred_check_branch
          %4375 = sbr.rel (%p4373) target = $region108
        $region107: #{_forward_impl.1} parent=63 // pred_region
          %s4377 = ssub.s32 16, 16
          %4378 = vsyncadd %s4370, %s4377
          %s4379 = smul.addr %s31, 16
          %s4380 = scalar_lea.hbm %s11, %s4379
          %s4382 = sshll.u32 %s4372, 4
          %s4383 = int_to_ptr.vmem [resolvable:$true] %s4382
          %4385 = dma.vmem_to_hbm [thread:$0]  %s4383, 16, %s4380, %s4370
        $region108: #{_forward_impl.1} parent=63 // pred_fallthru
          _
      $region64: #{_forward_impl.1} parent=5 // pred_fallthru
        _
      %p4386 = scmp.le.s32.totalorder 2, %s26
      // Predicated region
      $region109: #{_forward_impl.1} parent=5 // pred_check
        %p4387 = pneg %p4386
      $region110: #{_forward_impl.1} parent=5 // pred_check_branch
        %4389 = sbr.rel (%p4387) target = $region112
      $region111: #{_forward_impl.1} parent=5 // pred_region
        %s4390 = ssub.s32 %s26, 2
        // Predicated region
        $region113: #{_forward_impl.1} parent=111 // pred_check
          %p4391 = pneg %p291
        $region114: #{_forward_impl.1} parent=111 // pred_check_branch
          %4393 = sbr.rel (%p4391) target = $region116
        $region115: #{_forward_impl.1} parent=111 // pred_region
          %s4394 = sand.u32 %s276, 1
          %s4395 = scalar_lea.sflag [#allocation9], %s4394
          %s4396 = sand.u32 %s276, 1
          %s4397 = scalar_lea.vmem [#allocation24], %s4396
          %4398 = dma.done %s4395, 16
        $region116: #{_forward_impl.1} parent=111 // pred_fallthru
          _
      $region112: #{_forward_impl.1} parent=5 // pred_fallthru
        _
    $region6: #{_forward_impl.1} parent=1 // loop_footer
      %s30 = sadd.s32 1, %s26
    $region7: #{_forward_impl.1} parent=1 // loop_footer_branch
      %25 = sbr.rel target = $region3
    $region8: #{_forward_impl.1} parent=1 // loop_exit
      _
    %4399 = vsyncpa [#allocation8], 1
    %s4400 = scalar_lea.sflag [#allocation8], 1
    %4401 = vsyncpa %s4400, 1
    %4402 = vsyncpa [#allocation11], 1
    %4403 = vsyncpa [#allocation14], 1
    %4404 = vsyncpa [#allocation17], 1
    %4405 = vsyncpa [#allocation20], 1
    %4406 = vsyncpa [#allocation23], 1
    %4407 = vsyncpa [#allocation9], 1
    %s4408 = scalar_lea.sflag [#allocation9], 1
    %4409 = vsyncpa %s4408, 1

</llo_original>
